<compile_context>
chip_gen: v7x
topology: tpu7x:2x2x1
jax: 0.10.0
libtpu: 0.0.40
codegen_flags: <defaults>
</compile_context>

<pallas_src>
import math

import jax
import jax.numpy as jnp
from jax.experimental import pallas as pl
from jax.experimental.pallas import tpu as pltpu

# ----- reduced (but structurally faithful) dimensions ------------------------
T = 8                   # sequence length
B = 1                   # batch (must be 1, see layout note)
NUM_INPUT = 256         # stands in for 4096
NUM_HIDDEN1 = 64        # stands in for 250 (IndRNN hidden) -> bidir width = 128
MLP_H1 = 16             # stands in for 50
MLP_H2 = 1
GRU_H = NUM_INPUT // 2  # GRU hidden = num_input / 2  -> 128 (lane dense)
NUM_EMB = 16            # stands in for 100
CLASS_NUM = 6
OUT_LANES = 128         # packed output slab width (lane-dense store)


# =============================================================================
# Fused VENet forward kernel
# =============================================================================
def _venet_kernel(x_ref, wxall_ref, ub1_ref, w2_ref, ub2_ref,
                  mw1_ref, mb1_ref, mw2_ref, mb2_ref,
                  gbx_ref, gwh_ref, gbhn_ref,
                  f1w_ref, f1b_ref, f2w_ref, f2b_ref,
                  out_ref):
    f32 = jnp.float32
    Tn = x_ref.shape[0]
    H2 = ub1_ref.shape[1]          # bidirectional IndRNN width (2H)
    H = H2 // 2
    Hg = gwh_ref.shape[0]          # GRU hidden
    OUT = out_ref.shape[1]

    # app_x = relu(app_x)
    x = jnp.maximum(x_ref[...], 0.0)                                   # (T, D)

    # ---- helpers -------------------------------------------------------------
    def rev_rows(a):
        # reverse along the (small, static) time axis via static row slices
        n = a.shape[0]
        return jnp.concatenate([a[n - 1 - i:n - i, :] for i in range(n)], axis=0)

    lane_h = jax.lax.broadcasted_iota(jnp.int32, (Tn, H2), 1)           # lane ids

    def bidir_indrnn(pre, ub_ref):
        # pre: (T, 2H) with fwd half in lanes [0,H) and bwd half in [H,2H).
        # Fuse both directions into one full-vreg elementwise recurrence by
        # time-reversing the backward half of the pre-activations.
        u = ub_ref[0:1, :]                                               # (1, 2H)
        b = ub_ref[1:2, :]                                               # (1, 2H)
        pre_c = jnp.where(lane_h < H, pre, rev_rows(pre))                # (T, 2H)
        h = jnp.zeros((1, H2), f32)
        rows = []
        for t in range(Tn):                                              # unrolled
            h = jnp.maximum(pre_c[t:t + 1, :] + u * h + b, 0.0)          # (1, 2H)
            rows.append(h)
        h_all = jnp.concatenate(rows, axis=0)                            # (T, 2H)
        # un-reverse the backward half: row t's bwd lanes hold state T-1-t
        return jnp.where(lane_h < H, h_all, rev_rows(h_all))

    # ---- one fused matmul for everything that consumes x ---------------------
    # columns: [ IndRNN-1 fwd|bwd (2H) | GRU r|z|n input gates (3Hg) ]
    wx_all = wxall_ref[...].astype(f32)                                  # bf16 -> f32 once
    xall = jnp.dot(x, wx_all, preferred_element_type=f32)                # (T, 2H+3Hg)
    pre1 = xall[:, 0:H2]                                                 # (T, 2H)
    xg = xall[:, H2:] + gbx_ref[...]                                     # (T, 3Hg)

    # ---- 2-layer bidirectional IndRNN -----------------------------------------
    h1 = bidir_indrnn(pre1, ub1_ref)                                     # (T, 2H)
    pre2 = jnp.dot(h1, w2_ref[...].astype(f32), preferred_element_type=f32)
    h2 = bidir_indrnn(pre2, ub2_ref)                                     # (T, 2H)

    # ---- pooling MLP : sigmoid(mlp2(relu(mlp1(X_pooled)))) ---------------------
    ph = jnp.maximum(
        jnp.dot(h2, mw1_ref[...], preferred_element_type=f32) + mb1_ref[...], 0.0)
    pooled = jax.nn.sigmoid(
        jnp.dot(ph, mw2_ref[...], preferred_element_type=f32) + mb2_ref[...])   # (T, 1)

    # Pooled_list = where(Pooled_output[:,0] > 0.5, 1, 0)
    plist = jnp.where(pooled > 0.5, 1.0, 0.0)                            # (T, 1)

    # Fallback: if nothing selected, torch processes only timestep 0.
    n_sel = jnp.sum(plist, keepdims=True)                                # (1, 1)
    onehot0 = (jax.lax.broadcasted_iota(jnp.int32, (Tn, 1), 0) == 0).astype(f32)
    mask = jnp.where(n_sel > 0.0, plist, onehot0)                        # (T, 1)
    maskb = jnp.broadcast_to(mask, (Tn, Hg))                             # (T, Hg)

    # ---- masked GRU over selected timesteps -----------------------------------
    # torch: r=σ(Wx+bi_r+Uh+bh_r), z=σ(...), n=tanh(Wx+bi_n + r*(Uh+bh_n)),
    #        h'=(1-z)*n + z*h.  bh_r/bh_z are folded into gbx at init.
    gwh = gwh_ref[...].astype(f32)                                       # (Hg, 3Hg)
    bhn = gbhn_ref[...]                                                  # (1, Hg)
    h = jnp.zeros((1, Hg), f32)
    for t in range(Tn):                                                  # unrolled
        hg = jnp.dot(h, gwh, preferred_element_type=f32)                 # (1, 3Hg)
        rz = jax.nn.sigmoid(xg[t:t + 1, 0:2 * Hg] + hg[:, 0:2 * Hg])     # (1, 2Hg)
        r = rz[:, 0:Hg]
        z = rz[:, Hg:2 * Hg]
        n = jnp.tanh(xg[t:t + 1, 2 * Hg:3 * Hg] + r * (hg[:, 2 * Hg:3 * Hg] + bhn))
        h_new = (1.0 - z) * n + z * h
        h = jnp.where(maskb[t:t + 1, :] > 0.5, h_new, h)                 # hold if deselected

    # ---- embedding head : fc2( l2_normalize( relu(fc1(x_app)) ) ) --------------
    e = jnp.maximum(
        jnp.dot(h, f1w_ref[...], preferred_element_type=f32) + f1b_ref[...], 0.0)
    # torch has no eps here; tiny eps avoids NaN for an all-zero relu row.
    inv = jax.lax.rsqrt(jnp.sum(e * e, axis=-1, keepdims=True) + 1e-12)
    # fc2 weights/bias are padded to OUT_LANES at init -> logits row is lane-dense
    logits_full = (jnp.dot(e * inv, f2w_ref[...], preferred_element_type=f32)
                   + f2b_ref[...])                                       # (1, OUT)

    # ---- packed lane-dense output slab ----------------------------------------
    # row 0           : class logits (lanes [0, C))
    # rows 1 .. T     : lane 0 = Pooled_output, lane 1 = Pooled_list
    lane_o = jax.lax.broadcasted_iota(jnp.int32, (Tn, OUT), 1)
    pp = jnp.where(lane_o == 0, jnp.broadcast_to(pooled, (Tn, OUT)),
                   jnp.where(lane_o == 1, jnp.broadcast_to(plist, (Tn, OUT)), 0.0))
    out_ref[pl.ds(0, 1), :] = logits_full
    out_ref[pl.ds(1, Tn), :] = pp


def venet_forward(app_x, app_lengths, params):
    del app_lengths  # unused in the original forward as well
    T_, B_, D_ = app_x.shape
    # TODO(synk): only B == 1 is supported, matching the torch module's
    # pack_padded_sequence usage (it is effectively batch-1 only).
    x2d = app_x.reshape(T_ * B_, D_)
    C = CLASS_NUM
    assert 2 + C <= OUT_LANES

    vmem = pl.BlockSpec(memory_space=pltpu.MemorySpace.VMEM)

    slab = pl.pallas_call(
        _venet_kernel,
        out_shape=jax.ShapeDtypeStruct((1 + T_ * B_, OUT_LANES), jnp.float32),
        in_specs=[vmem] * 16,
        out_specs=vmem,
    )(x2d,
      params["wx_all"], params["ind1_ub"], params["ind2_w"], params["ind2_ub"],
      params["mlp1_w"], params["mlp1_b"], params["mlp2_w"], params["mlp2_b"],
      params["gru_bx"], params["gru_wh"], params["gru_bhn"],
      params["fc1_w"], params["fc1_b"], params["fc2_w"], params["fc2_b"])

    outputs = slab[0:1, 0:C]            # (B, class_num) logits
    pooled_output = slab[1:, 0:1]       # (T, 1) Pooled_output
    pooled_list = slab[1:, 1]           # (T,)   Pooled_list (0/1 mask)

    # TODO(synk): torch returns the dynamic-shaped nonzero() index tensor as
    # X_pooled; JAX cannot return data-dependent shapes, so we return the
    # fixed-size 0/1 selection vector instead.
    return outputs, pooled_output, pooled_list


# =============================================================================
# Deterministic parameter initialization (packed / fused layouts)
# =============================================================================
def _xavier_normal(key, shape, gain):
    fan_in, fan_out = shape
    std = gain * math.sqrt(2.0 / (fan_in + fan_out))
    return jax.random.normal(key, shape, jnp.float32) * std


def init_params(key):
    keys = iter(jax.random.split(key, 64))

    def nrm(shape, scale=0.1):
        return jax.random.normal(next(keys), shape, jnp.float32) * scale

    H = NUM_HIDDEN1
    Hg = GRU_H
    D = NUM_INPUT

    def indrnn_layer(d_in):
        # fwd | bwd input weights concatenated along the output dim;
        # row 0 = recurrent diag u (fwd|bwd), row 1 = bias b (fwd|bwd).
        w = jnp.concatenate([nrm((d_in, H)), nrm((d_in, H))], axis=1)        # (d_in, 2H)
        u = jnp.concatenate([nrm((1, H)), nrm((1, H))], axis=1)              # (1, 2H)
        b = jnp.concatenate([nrm((1, H), 0.01), nrm((1, H), 0.01)], axis=1)  # (1, 2H)
        return w, jnp.concatenate([u, b], axis=0)                            # (2, 2H)

    ind1_w, ind1_ub = indrnn_layer(D)
    ind2_w, ind2_ub = indrnn_layer(2 * H)

    # GRU gates packed [r | z | n]
    wr, wz, wn = nrm((D, Hg)), nrm((D, Hg)), nrm((D, Hg))
    ur, uz, un = nrm((Hg, Hg)), nrm((Hg, Hg)), nrm((Hg, Hg))
    b_ir, b_iz, b_in = nrm((1, Hg), 0.01), nrm((1, Hg), 0.01), nrm((1, Hg), 0.01)
    b_hr, b_hz, b_hn = nrm((1, Hg), 0.01), nrm((1, Hg), 0.01), nrm((1, Hg), 0.01)

    # One fused weight for everything that consumes x (IndRNN layer-1 + GRU
    # input gates).  Large weights stored bf16 to halve HBM->VMEM DMA bytes.
    wx_all = jnp.concatenate([ind1_w, wr, wz, wn], axis=1)                    # (D, 2H+3Hg)

    # fc2 padded to OUT_LANES so the logits row is lane-dense in the kernel.
    fc2_w = _xavier_normal(next(keys), (NUM_EMB, CLASS_NUM), math.sqrt(2.0))
    fc2_b = nrm((1, CLASS_NUM), 0.01)
    fc2_w_pad = jnp.concatenate(
        [fc2_w, jnp.zeros((NUM_EMB, OUT_LANES - CLASS_NUM), jnp.float32)], axis=1)
    fc2_b_pad = jnp.concatenate(
        [fc2_b, jnp.zeros((1, OUT_LANES - CLASS_NUM), jnp.float32)], axis=1)

    p = {
        "wx_all": wx_all.astype(jnp.bfloat16),
        "ind1_ub": ind1_ub,
        "ind2_w": ind2_w.astype(jnp.bfloat16),
        "ind2_ub": ind2_ub,
        "mlp1_w": nrm((2 * H, MLP_H1)), "mlp1_b": nrm((1, MLP_H1), 0.01),
        "mlp2_w": nrm((MLP_H1, MLP_H2)), "mlp2_b": nrm((1, MLP_H2), 0.01),
        # b_hr / b_hz folded into the input-gate bias (r/z thirds); b_hn MUST
        # stay separate: torch computes n = tanh(Wx + b_in + r*(Uh + b_hn)).
        "gru_bx": jnp.concatenate([b_ir + b_hr, b_iz + b_hz, b_in], axis=1),  # (1, 3Hg)
        "gru_wh": jnp.concatenate([ur, uz, un], axis=1).astype(jnp.bfloat16),  # (Hg, 3Hg)
        "gru_bhn": b_hn,                                                       # (1, Hg)
        "fc1_w": _xavier_normal(next(keys), (Hg, NUM_EMB), math.sqrt(2.0)),
        "fc1_b": nrm((1, NUM_EMB), 0.01),
        "fc2_w": fc2_w_pad,
        "fc2_b": fc2_b_pad,
    }
    return p


if __name__ == "__main__":
    key = jax.random.PRNGKey(0)
    pkey, xkey = jax.random.split(key)
    params = init_params(pkey)

    app_x = jax.random.normal(xkey, (T, B, NUM_INPUT), jnp.float32)
    app_lengths = jnp.full((B,), T, jnp.int32)

    fwd = jax.jit(venet_forward)
    outputs, pooled_output, pooled_list = fwd(app_x, app_lengths, params)
    jax.block_until_ready((outputs, pooled_output, pooled_list))

    assert outputs.shape == (B, CLASS_NUM)
    assert pooled_output.shape == (T, MLP_H2)
    assert pooled_list.shape == (T,)
    assert bool(jnp.all(jnp.isfinite(outputs)))
    assert bool(jnp.all(jnp.isfinite(pooled_output)))
    print("KERNEL_OK")
</pallas_src>

<mosaic_0001>
module attributes {stable_mosaic.version = 11 : i64} {
  func.func @_venet_kernel(%arg0: memref<8x256xf32, #tpu.memory_space<vmem>>, %arg1: memref<256x512xbf16, #tpu.memory_space<vmem>>, %arg2: memref<2x128xf32, #tpu.memory_space<vmem>>, %arg3: memref<128x128xbf16, #tpu.memory_space<vmem>>, %arg4: memref<2x128xf32, #tpu.memory_space<vmem>>, %arg5: memref<128x16xf32, #tpu.memory_space<vmem>>, %arg6: memref<1x16xf32, #tpu.memory_space<vmem>>, %arg7: memref<16x1xf32, #tpu.memory_space<vmem>>, %arg8: memref<1x1xf32, #tpu.memory_space<vmem>>, %arg9: memref<1x384xf32, #tpu.memory_space<vmem>>, %arg10: memref<128x384xbf16, #tpu.memory_space<vmem>>, %arg11: memref<1x128xf32, #tpu.memory_space<vmem>>, %arg12: memref<128x16xf32, #tpu.memory_space<vmem>>, %arg13: memref<1x16xf32, #tpu.memory_space<vmem>>, %arg14: memref<16x128xf32, #tpu.memory_space<vmem>>, %arg15: memref<1x128xf32, #tpu.memory_space<vmem>>, %arg16: memref<9x128xf32, #tpu.memory_space<vmem>>) attributes {dimension_semantics = [], scalar_prefetch = 0 : i64, scratch_operands = 0 : i64, tpu.core_type = #tpu.core_type<tc>} {
    %c0 = arith.constant 0 : index
    %c0_0 = arith.constant 0 : index
    %0 = vector.load %arg0[%c0, %c0_0] : memref<8x256xf32, #tpu.memory_space<vmem>>, vector<8x256xf32>
    %cst = arith.constant 0.000000e+00 : f32
    %1 = vector.broadcast %cst : f32 to vector<8x256xf32>
    %2 = arith.maximumf %0, %1 : vector<8x256xf32>
    %3 = tpu.iota {dimensions = array<i32: 1>} : vector<8x128xi32>
    %c0_1 = arith.constant 0 : index
    %c0_2 = arith.constant 0 : index
    %4 = vector.load %arg1[%c0_1, %c0_2] : memref<256x512xbf16, #tpu.memory_space<vmem>>, vector<256x512xbf16>
    %5 = arith.extf %4 : vector<256x512xbf16> to vector<256x512xf32>
    %cst_3 = arith.constant dense<0.000000e+00> : vector<8x512xf32>
    %6 = tpu.matmul %2, %5, %cst_3 {dimension_numbers = #tpu.dot_dimension_numbers<[1], [0], [0], [1], [0, 0, 1, 1], [], []>} : vector<8x256xf32>, vector<256x512xf32>, vector<8x512xf32> -> vector<8x512xf32>
    %7 = vector.extract_strided_slice %6 {offsets = [0, 0], sizes = [8, 128], strides = [1, 1]} : vector<8x512xf32> to vector<8x128xf32>
    %8 = vector.extract_strided_slice %6 {offsets = [0, 128], sizes = [8, 384], strides = [1, 1]} : vector<8x512xf32> to vector<8x384xf32>
    %c0_4 = arith.constant 0 : index
    %c0_5 = arith.constant 0 : index
    %9 = vector.load %arg9[%c0_4, %c0_5] : memref<1x384xf32, #tpu.memory_space<vmem>>, vector<1x384xf32>
    %10 = vector.broadcast %9 : vector<1x384xf32> to vector<8x384xf32>
    %11 = arith.addf %8, %10 : vector<8x384xf32>
    %c0_6 = arith.constant 0 : index
    %c0_7 = arith.constant 0 : index
    %12 = vector.load %arg2[%c0_6, %c0_7] : memref<2x128xf32, #tpu.memory_space<vmem>>, vector<1x128xf32>
    %c1 = arith.constant 1 : index
    %c0_8 = arith.constant 0 : index
    %13 = vector.load %arg2[%c1, %c0_8] : memref<2x128xf32, #tpu.memory_space<vmem>>, vector<1x128xf32>
    %c64_i32 = arith.constant 64 : i32
    %14 = vector.broadcast %c64_i32 : i32 to vector<8x128xi32>
    %15 = arith.cmpi slt, %3, %14 : vector<8x128xi32>
    %16 = vector.extract_strided_slice %7 {offsets = [7, 0], sizes = [1, 128], strides = [1, 1]} : vector<8x128xf32> to vector<1x128xf32>
    %17 = vector.extract_strided_slice %7 {offsets = [6, 0], sizes = [1, 128], strides = [1, 1]} : vector<8x128xf32> to vector<1x128xf32>
    %18 = vector.extract_strided_slice %7 {offsets = [5, 0], sizes = [1, 128], strides = [1, 1]} : vector<8x128xf32> to vector<1x128xf32>
    %19 = vector.extract_strided_slice %7 {offsets = [4, 0], sizes = [1, 128], strides = [1, 1]} : vector<8x128xf32> to vector<1x128xf32>
    %20 = vector.extract_strided_slice %7 {offsets = [3, 0], sizes = [1, 128], strides = [1, 1]} : vector<8x128xf32> to vector<1x128xf32>
    %21 = vector.extract_strided_slice %7 {offsets = [2, 0], sizes = [1, 128], strides = [1, 1]} : vector<8x128xf32> to vector<1x128xf32>
    %22 = vector.extract_strided_slice %7 {offsets = [1, 0], sizes = [1, 128], strides = [1, 1]} : vector<8x128xf32> to vector<1x128xf32>
    %23 = vector.extract_strided_slice %7 {offsets = [0, 0], sizes = [1, 128], strides = [1, 1]} : vector<8x128xf32> to vector<1x128xf32>
    %24 = tpu.concatenate %16, %17, %18, %19, %20, %21, %22, %23 in 0 : vector<1x128xf32>, vector<1x128xf32>, vector<1x128xf32>, vector<1x128xf32>, vector<1x128xf32>, vector<1x128xf32>, vector<1x128xf32>, vector<1x128xf32> -> vector<8x128xf32>
    %25 = arith.select %15, %7, %24 : vector<8x128xi1>, vector<8x128xf32>
    %cst_9 = arith.constant 0.000000e+00 : f32
    %26 = vector.broadcast %cst_9 : f32 to vector<1x128xf32>
    %27 = vector.extract_strided_slice %25 {offsets = [0, 0], sizes = [1, 128], strides = [1, 1]} : vector<8x128xf32> to vector<1x128xf32>
    %28 = arith.mulf %12, %26 : vector<1x128xf32>
    %29 = arith.addf %27, %28 : vector<1x128xf32>
    %30 = arith.addf %29, %13 : vector<1x128xf32>
    %cst_10 = arith.constant 0.000000e+00 : f32
    %31 = vector.broadcast %cst_10 : f32 to vector<1x128xf32>
    %32 = arith.maximumf %30, %31 : vector<1x128xf32>
    %33 = vector.extract_strided_slice %25 {offsets = [1, 0], sizes = [1, 128], strides = [1, 1]} : vector<8x128xf32> to vector<1x128xf32>
    %34 = arith.mulf %12, %32 : vector<1x128xf32>
    %35 = arith.addf %33, %34 : vector<1x128xf32>
    %36 = arith.addf %35, %13 : vector<1x128xf32>
    %cst_11 = arith.constant 0.000000e+00 : f32
    %37 = vector.broadcast %cst_11 : f32 to vector<1x128xf32>
    %38 = arith.maximumf %36, %37 : vector<1x128xf32>
    %39 = vector.extract_strided_slice %25 {offsets = [2, 0], sizes = [1, 128], strides = [1, 1]} : vector<8x128xf32> to vector<1x128xf32>
    %40 = arith.mulf %12, %38 : vector<1x128xf32>
    %41 = arith.addf %39, %40 : vector<1x128xf32>
    %42 = arith.addf %41, %13 : vector<1x128xf32>
    %cst_12 = arith.constant 0.000000e+00 : f32
    %43 = vector.broadcast %cst_12 : f32 to vector<1x128xf32>
    %44 = arith.maximumf %42, %43 : vector<1x128xf32>
    %45 = vector.extract_strided_slice %25 {offsets = [3, 0], sizes = [1, 128], strides = [1, 1]} : vector<8x128xf32> to vector<1x128xf32>
    %46 = arith.mulf %12, %44 : vector<1x128xf32>
    %47 = arith.addf %45, %46 : vector<1x128xf32>
    %48 = arith.addf %47, %13 : vector<1x128xf32>
    %cst_13 = arith.constant 0.000000e+00 : f32
    %49 = vector.broadcast %cst_13 : f32 to vector<1x128xf32>
    %50 = arith.maximumf %48, %49 : vector<1x128xf32>
    %51 = vector.extract_strided_slice %25 {offsets = [4, 0], sizes = [1, 128], strides = [1, 1]} : vector<8x128xf32> to vector<1x128xf32>
    %52 = arith.mulf %12, %50 : vector<1x128xf32>
    %53 = arith.addf %51, %52 : vector<1x128xf32>
    %54 = arith.addf %53, %13 : vector<1x128xf32>
    %cst_14 = arith.constant 0.000000e+00 : f32
    %55 = vector.broadcast %cst_14 : f32 to vector<1x128xf32>
    %56 = arith.maximumf %54, %55 : vector<1x128xf32>
    %57 = vector.extract_strided_slice %25 {offsets = [5, 0], sizes = [1, 128], strides = [1, 1]} : vector<8x128xf32> to vector<1x128xf32>
    %58 = arith.mulf %12, %56 : vector<1x128xf32>
    %59 = arith.addf %57, %58 : vector<1x128xf32>
    %60 = arith.addf %59, %13 : vector<1x128xf32>
    %cst_15 = arith.constant 0.000000e+00 : f32
    %61 = vector.broadcast %cst_15 : f32 to vector<1x128xf32>
    %62 = arith.maximumf %60, %61 : vector<1x128xf32>
    %63 = vector.extract_strided_slice %25 {offsets = [6, 0], sizes = [1, 128], strides = [1, 1]} : vector<8x128xf32> to vector<1x128xf32>
    %64 = arith.mulf %12, %62 : vector<1x128xf32>
    %65 = arith.addf %63, %64 : vector<1x128xf32>
    %66 = arith.addf %65, %13 : vector<1x128xf32>
    %cst_16 = arith.constant 0.000000e+00 : f32
    %67 = vector.broadcast %cst_16 : f32 to vector<1x128xf32>
    %68 = arith.maximumf %66, %67 : vector<1x128xf32>
    %69 = vector.extract_strided_slice %25 {offsets = [7, 0], sizes = [1, 128], strides = [1, 1]} : vector<8x128xf32> to vector<1x128xf32>
    %70 = arith.mulf %12, %68 : vector<1x128xf32>
    %71 = arith.addf %69, %70 : vector<1x128xf32>
    %72 = arith.addf %71, %13 : vector<1x128xf32>
    %cst_17 = arith.constant 0.000000e+00 : f32
    %73 = vector.broadcast %cst_17 : f32 to vector<1x128xf32>
    %74 = arith.maximumf %72, %73 : vector<1x128xf32>
    %75 = tpu.concatenate %32, %38, %44, %50, %56, %62, %68, %74 in 0 : vector<1x128xf32>, vector<1x128xf32>, vector<1x128xf32>, vector<1x128xf32>, vector<1x128xf32>, vector<1x128xf32>, vector<1x128xf32>, vector<1x128xf32> -> vector<8x128xf32>
    %c64_i32_18 = arith.constant 64 : i32
    %76 = vector.broadcast %c64_i32_18 : i32 to vector<8x128xi32>
    %77 = arith.cmpi slt, %3, %76 : vector<8x128xi32>
    %78 = vector.extract_strided_slice %75 {offsets = [7, 0], sizes = [1, 128], strides = [1, 1]} : vector<8x128xf32> to vector<1x128xf32>
    %79 = vector.extract_strided_slice %75 {offsets = [6, 0], sizes = [1, 128], strides = [1, 1]} : vector<8x128xf32> to vector<1x128xf32>
    %80 = vector.extract_strided_slice %75 {offsets = [5, 0], sizes = [1, 128], strides = [1, 1]} : vector<8x128xf32> to vector<1x128xf32>
    %81 = vector.extract_strided_slice %75 {offsets = [4, 0], sizes = [1, 128], strides = [1, 1]} : vector<8x128xf32> to vector<1x128xf32>
    %82 = vector.extract_strided_slice %75 {offsets = [3, 0], sizes = [1, 128], strides = [1, 1]} : vector<8x128xf32> to vector<1x128xf32>
    %83 = vector.extract_strided_slice %75 {offsets = [2, 0], sizes = [1, 128], strides = [1, 1]} : vector<8x128xf32> to vector<1x128xf32>
    %84 = vector.extract_strided_slice %75 {offsets = [1, 0], sizes = [1, 128], strides = [1, 1]} : vector<8x128xf32> to vector<1x128xf32>
    %85 = vector.extract_strided_slice %75 {offsets = [0, 0], sizes = [1, 128], strides = [1, 1]} : vector<8x128xf32> to vector<1x128xf32>
    %86 = tpu.concatenate %78, %79, %80, %81, %82, %83, %84, %85 in 0 : vector<1x128xf32>, vector<1x128xf32>, vector<1x128xf32>, vector<1x128xf32>, vector<1x128xf32>, vector<1x128xf32>, vector<1x128xf32>, vector<1x128xf32> -> vector<8x128xf32>
    %87 = arith.select %77, %75, %86 : vector<8x128xi1>, vector<8x128xf32>
    %c0_19 = arith.constant 0 : index
    %c0_20 = arith.constant 0 : index
    %88 = vector.load %arg3[%c0_19, %c0_20] : memref<128x128xbf16, #tpu.memory_space<vmem>>, vector<128x128xbf16>
    %89 = arith.extf %88 : vector<128x128xbf16> to vector<128x128xf32>
    %cst_21 = arith.constant dense<0.000000e+00> : vector<8x128xf32>
    %90 = tpu.matmul %87, %89, %cst_21 {dimension_numbers = #tpu.dot_dimension_numbers<[1], [0], [0], [1], [0, 0, 1, 1], [], []>} : vector<8x128xf32>, vector<128x128xf32>, vector<8x128xf32> -> vector<8x128xf32>
    %c0_22 = arith.constant 0 : index
    %c0_23 = arith.constant 0 : index
    %91 = vector.load %arg4[%c0_22, %c0_23] : memref<2x128xf32, #tpu.memory_space<vmem>>, vector<1x128xf32>
    %c1_24 = arith.constant 1 : index
    %c0_25 = arith.constant 0 : index
    %92 = vector.load %arg4[%c1_24, %c0_25] : memref<2x128xf32, #tpu.memory_space<vmem>>, vector<1x128xf32>
    %c64_i32_26 = arith.constant 64 : i32
    %93 = vector.broadcast %c64_i32_26 : i32 to vector<8x128xi32>
    %94 = arith.cmpi slt, %3, %93 : vector<8x128xi32>
    %95 = vector.extract_strided_slice %90 {offsets = [7, 0], sizes = [1, 128], strides = [1, 1]} : vector<8x128xf32> to vector<1x128xf32>
    %96 = vector.extract_strided_slice %90 {offsets = [6, 0], sizes = [1, 128], strides = [1, 1]} : vector<8x128xf32> to vector<1x128xf32>
    %97 = vector.extract_strided_slice %90 {offsets = [5, 0], sizes = [1, 128], strides = [1, 1]} : vector<8x128xf32> to vector<1x128xf32>
    %98 = vector.extract_strided_slice %90 {offsets = [4, 0], sizes = [1, 128], strides = [1, 1]} : vector<8x128xf32> to vector<1x128xf32>
    %99 = vector.extract_strided_slice %90 {offsets = [3, 0], sizes = [1, 128], strides = [1, 1]} : vector<8x128xf32> to vector<1x128xf32>
    %100 = vector.extract_strided_slice %90 {offsets = [2, 0], sizes = [1, 128], strides = [1, 1]} : vector<8x128xf32> to vector<1x128xf32>
    %101 = vector.extract_strided_slice %90 {offsets = [1, 0], sizes = [1, 128], strides = [1, 1]} : vector<8x128xf32> to vector<1x128xf32>
    %102 = vector.extract_strided_slice %90 {offsets = [0, 0], sizes = [1, 128], strides = [1, 1]} : vector<8x128xf32> to vector<1x128xf32>
    %103 = tpu.concatenate %95, %96, %97, %98, %99, %100, %101, %102 in 0 : vector<1x128xf32>, vector<1x128xf32>, vector<1x128xf32>, vector<1x128xf32>, vector<1x128xf32>, vector<1x128xf32>, vector<1x128xf32>, vector<1x128xf32> -> vector<8x128xf32>
    %104 = arith.select %94, %90, %103 : vector<8x128xi1>, vector<8x128xf32>
    %cst_27 = arith.constant 0.000000e+00 : f32
    %105 = vector.broadcast %cst_27 : f32 to vector<1x128xf32>
    %106 = vector.extract_strided_slice %104 {offsets = [0, 0], sizes = [1, 128], strides = [1, 1]} : vector<8x128xf32> to vector<1x128xf32>
    %107 = arith.mulf %91, %105 : vector<1x128xf32>
    %108 = arith.addf %106, %107 : vector<1x128xf32>
    %109 = arith.addf %108, %92 : vector<1x128xf32>
    %cst_28 = arith.constant 0.000000e+00 : f32
    %110 = vector.broadcast %cst_28 : f32 to vector<1x128xf32>
    %111 = arith.maximumf %109, %110 : vector<1x128xf32>
    %112 = vector.extract_strided_slice %104 {offsets = [1, 0], sizes = [1, 128], strides = [1, 1]} : vector<8x128xf32> to vector<1x128xf32>
    %113 = arith.mulf %91, %111 : vector<1x128xf32>
    %114 = arith.addf %112, %113 : vector<1x128xf32>
    %115 = arith.addf %114, %92 : vector<1x128xf32>
    %cst_29 = arith.constant 0.000000e+00 : f32
    %116 = vector.broadcast %cst_29 : f32 to vector<1x128xf32>
    %117 = arith.maximumf %115, %116 : vector<1x128xf32>
    %118 = vector.extract_strided_slice %104 {offsets = [2, 0], sizes = [1, 128], strides = [1, 1]} : vector<8x128xf32> to vector<1x128xf32>
    %119 = arith.mulf %91, %117 : vector<1x128xf32>
    %120 = arith.addf %118, %119 : vector<1x128xf32>
    %121 = arith.addf %120, %92 : vector<1x128xf32>
    %cst_30 = arith.constant 0.000000e+00 : f32
    %122 = vector.broadcast %cst_30 : f32 to vector<1x128xf32>
    %123 = arith.maximumf %121, %122 : vector<1x128xf32>
    %124 = vector.extract_strided_slice %104 {offsets = [3, 0], sizes = [1, 128], strides = [1, 1]} : vector<8x128xf32> to vector<1x128xf32>
    %125 = arith.mulf %91, %123 : vector<1x128xf32>
    %126 = arith.addf %124, %125 : vector<1x128xf32>
    %127 = arith.addf %126, %92 : vector<1x128xf32>
    %cst_31 = arith.constant 0.000000e+00 : f32
    %128 = vector.broadcast %cst_31 : f32 to vector<1x128xf32>
    %129 = arith.maximumf %127, %128 : vector<1x128xf32>
    %130 = vector.extract_strided_slice %104 {offsets = [4, 0], sizes = [1, 128], strides = [1, 1]} : vector<8x128xf32> to vector<1x128xf32>
    %131 = arith.mulf %91, %129 : vector<1x128xf32>
    %132 = arith.addf %130, %131 : vector<1x128xf32>
    %133 = arith.addf %132, %92 : vector<1x128xf32>
    %cst_32 = arith.constant 0.000000e+00 : f32
    %134 = vector.broadcast %cst_32 : f32 to vector<1x128xf32>
    %135 = arith.maximumf %133, %134 : vector<1x128xf32>
    %136 = vector.extract_strided_slice %104 {offsets = [5, 0], sizes = [1, 128], strides = [1, 1]} : vector<8x128xf32> to vector<1x128xf32>
    %137 = arith.mulf %91, %135 : vector<1x128xf32>
    %138 = arith.addf %136, %137 : vector<1x128xf32>
    %139 = arith.addf %138, %92 : vector<1x128xf32>
    %cst_33 = arith.constant 0.000000e+00 : f32
    %140 = vector.broadcast %cst_33 : f32 to vector<1x128xf32>
    %141 = arith.maximumf %139, %140 : vector<1x128xf32>
    %142 = vector.extract_strided_slice %104 {offsets = [6, 0], sizes = [1, 128], strides = [1, 1]} : vector<8x128xf32> to vector<1x128xf32>
    %143 = arith.mulf %91, %141 : vector<1x128xf32>
    %144 = arith.addf %142, %143 : vector<1x128xf32>
    %145 = arith.addf %144, %92 : vector<1x128xf32>
    %cst_34 = arith.constant 0.000000e+00 : f32
    %146 = vector.broadcast %cst_34 : f32 to vector<1x128xf32>
    %147 = arith.maximumf %145, %146 : vector<1x128xf32>
    %148 = vector.extract_strided_slice %104 {offsets = [7, 0], sizes = [1, 128], strides = [1, 1]} : vector<8x128xf32> to vector<1x128xf32>
    %149 = arith.mulf %91, %147 : vector<1x128xf32>
    %150 = arith.addf %148, %149 : vector<1x128xf32>
    %151 = arith.addf %150, %92 : vector<1x128xf32>
    %cst_35 = arith.constant 0.000000e+00 : f32
    %152 = vector.broadcast %cst_35 : f32 to vector<1x128xf32>
    %153 = arith.maximumf %151, %152 : vector<1x128xf32>
    %154 = tpu.concatenate %111, %117, %123, %129, %135, %141, %147, %153 in 0 : vector<1x128xf32>, vector<1x128xf32>, vector<1x128xf32>, vector<1x128xf32>, vector<1x128xf32>, vector<1x128xf32>, vector<1x128xf32>, vector<1x128xf32> -> vector<8x128xf32>
    %c64_i32_36 = arith.constant 64 : i32
    %155 = vector.broadcast %c64_i32_36 : i32 to vector<8x128xi32>
    %156 = arith.cmpi slt, %3, %155 : vector<8x128xi32>
    %157 = vector.extract_strided_slice %154 {offsets = [7, 0], sizes = [1, 128], strides = [1, 1]} : vector<8x128xf32> to vector<1x128xf32>
    %158 = vector.extract_strided_slice %154 {offsets = [6, 0], sizes = [1, 128], strides = [1, 1]} : vector<8x128xf32> to vector<1x128xf32>
    %159 = vector.extract_strided_slice %154 {offsets = [5, 0], sizes = [1, 128], strides = [1, 1]} : vector<8x128xf32> to vector<1x128xf32>
    %160 = vector.extract_strided_slice %154 {offsets = [4, 0], sizes = [1, 128], strides = [1, 1]} : vector<8x128xf32> to vector<1x128xf32>
    %161 = vector.extract_strided_slice %154 {offsets = [3, 0], sizes = [1, 128], strides = [1, 1]} : vector<8x128xf32> to vector<1x128xf32>
    %162 = vector.extract_strided_slice %154 {offsets = [2, 0], sizes = [1, 128], strides = [1, 1]} : vector<8x128xf32> to vector<1x128xf32>
    %163 = vector.extract_strided_slice %154 {offsets = [1, 0], sizes = [1, 128], strides = [1, 1]} : vector<8x128xf32> to vector<1x128xf32>
    %164 = vector.extract_strided_slice %154 {offsets = [0, 0], sizes = [1, 128], strides = [1, 1]} : vector<8x128xf32> to vector<1x128xf32>
    %165 = tpu.concatenate %157, %158, %159, %160, %161, %162, %163, %164 in 0 : vector<1x128xf32>, vector<1x128xf32>, vector<1x128xf32>, vector<1x128xf32>, vector<1x128xf32>, vector<1x128xf32>, vector<1x128xf32>, vector<1x128xf32> -> vector<8x128xf32>
    %166 = arith.select %156, %154, %165 : vector<8x128xi1>, vector<8x128xf32>
    %c0_37 = arith.constant 0 : index
    %c0_38 = arith.constant 0 : index
    %167 = vector.load %arg5[%c0_37, %c0_38] : memref<128x16xf32, #tpu.memory_space<vmem>>, vector<128x16xf32>
    %cst_39 = arith.constant dense<0.000000e+00> : vector<8x16xf32>
    %168 = tpu.matmul %166, %167, %cst_39 {dimension_numbers = #tpu.dot_dimension_numbers<[1], [0], [0], [1], [0, 0, 1, 1], [], []>} : vector<8x128xf32>, vector<128x16xf32>, vector<8x16xf32> -> vector<8x16xf32>
    %c0_40 = arith.constant 0 : index
    %c0_41 = arith.constant 0 : index
    %169 = vector.load %arg6[%c0_40, %c0_41] : memref<1x16xf32, #tpu.memory_space<vmem>>, vector<1x16xf32>
    %170 = vector.broadcast %169 : vector<1x16xf32> to vector<8x16xf32>
    %171 = arith.addf %168, %170 : vector<8x16xf32>
    %cst_42 = arith.constant 0.000000e+00 : f32
    %172 = vector.broadcast %cst_42 : f32 to vector<8x16xf32>
    %173 = arith.maximumf %171, %172 : vector<8x16xf32>
    %c0_43 = arith.constant 0 : index
    %c0_44 = arith.constant 0 : index
    %174 = vector.load %arg7[%c0_43, %c0_44] : memref<16x1xf32, #tpu.memory_space<vmem>>, vector<16x1xf32>
    %cst_45 = arith.constant dense<0.000000e+00> : vector<8x1xf32>
    %175 = tpu.matmul %173, %174, %cst_45 {dimension_numbers = #tpu.dot_dimension_numbers<[1], [0], [0], [1], [0, 0, 1, 1], [], []>} : vector<8x16xf32>, vector<16x1xf32>, vector<8x1xf32> -> vector<8x1xf32>
    %c0_46 = arith.constant 0 : index
    %c0_47 = arith.constant 0 : index
    %176 = vector.load %arg8[%c0_46, %c0_47] : memref<1x1xf32, #tpu.memory_space<vmem>>, vector<1x1xf32>
    %177 = vector.broadcast %176 : vector<1x1xf32> to vector<8x1xf32>
    %178 = arith.addf %175, %177 : vector<8x1xf32>
    %179 = arith.negf %178 : vector<8x1xf32>
    %180 = math.exp %179 : vector<8x1xf32>
    %cst_48 = arith.constant 1.000000e+00 : f32
    %181 = vector.broadcast %cst_48 : f32 to vector<8x1xf32>
    %182 = arith.addf %181, %180 : vector<8x1xf32>
    %183 = arith.divf %181, %182 : vector<8x1xf32>
    %cst_49 = arith.constant 5.000000e-01 : f32
    %184 = vector.broadcast %cst_49 : f32 to vector<8x1xf32>
    %185 = arith.cmpf ogt, %183, %184 : vector<8x1xf32>
    %cst_50 = arith.constant 1.000000e+00 : f32
    %cst_51 = arith.constant 0.000000e+00 : f32
    %186 = vector.broadcast %cst_50 : f32 to vector<8x1xf32>
    %187 = vector.broadcast %cst_51 : f32 to vector<8x1xf32>
    %188 = arith.select %185, %186, %187 : vector<8x1xi1>, vector<8x1xf32>
    %189 = vector.shape_cast %188 : vector<8x1xf32> to vector<1x8x1xf32>
    %cst_52 = arith.constant dense<0.000000e+00> : vector<1xf32>
    %190 = vector.multi_reduction <add>, %189, %cst_52 [1, 2] : vector<1x8x1xf32> to vector<1xf32>
    %191 = vector.shape_cast %190 : vector<1xf32> to vector<1x1x1xf32>
    %192 = vector.extract %191[0, 0, 0] : f32 from vector<1x1x1xf32>
    %193 = vector.broadcast %192 : f32 to vector<1x1xf32>
    %194 = tpu.iota {dimensions = array<i32: 0>} : vector<8x1xi32>
    %c0_i32 = arith.constant 0 : i32
    %195 = vector.broadcast %c0_i32 : i32 to vector<8x1xi32>
    %196 = arith.cmpi eq, %194, %195 : vector<8x1xi32>
    %197 = arith.extui %196 : vector<8x1xi1> to vector<8x1xi32>
    %198 = arith.sitofp %197 : vector<8x1xi32> to vector<8x1xf32>
    %cst_53 = arith.constant 0.000000e+00 : f32
    %199 = vector.broadcast %cst_53 : f32 to vector<1x1xf32>
    %200 = arith.cmpf ogt, %193, %199 : vector<1x1xf32>
    %201 = vector.shape_cast %200 : vector<1x1xi1> to vector<1x1xi1>
    %202 = vector.broadcast %201 : vector<1x1xi1> to vector<8x1xi1>
    %203 = arith.select %202, %188, %198 : vector<8x1xi1>, vector<8x1xf32>
    %204 = vector.shape_cast %203 : vector<8x1xf32> to vector<8x1xf32>
    %205 = vector.broadcast %204 : vector<8x1xf32> to vector<8x128xf32>
    %c0_54 = arith.constant 0 : index
    %c0_55 = arith.constant 0 : index
    %206 = vector.load %arg10[%c0_54, %c0_55] : memref<128x384xbf16, #tpu.memory_space<vmem>>, vector<128x384xbf16>
    %207 = arith.extf %206 : vector<128x384xbf16> to vector<128x384xf32>
    %c0_56 = arith.constant 0 : index
    %c0_57 = arith.constant 0 : index
    %208 = vector.load %arg11[%c0_56, %c0_57] : memref<1x128xf32, #tpu.memory_space<vmem>>, vector<1x128xf32>
    %cst_58 = arith.constant 0.000000e+00 : f32
    %209 = vector.broadcast %cst_58 : f32 to vector<1x128xf32>
    %cst_59 = arith.constant dense<0.000000e+00> : vector<1x384xf32>
    %210 = tpu.matmul %209, %207, %cst_59 {dimension_numbers = #tpu.dot_dimension_numbers<[1], [0], [0], [1], [0, 0, 1, 1], [], []>} : vector<1x128xf32>, vector<128x384xf32>, vector<1x384xf32> -> vector<1x384xf32>
    %211 = vector.extract_strided_slice %11 {offsets = [0, 0], sizes = [1, 256], strides = [1, 1]} : vector<8x384xf32> to vector<1x256xf32>
    %212 = vector.extract_strided_slice %210 {offsets = [0, 0], sizes = [1, 256], strides = [1, 1]} : vector<1x384xf32> to vector<1x256xf32>
    %213 = arith.addf %211, %212 : vector<1x256xf32>
    %214 = arith.negf %213 : vector<1x256xf32>
    %215 = math.exp %214 : vector<1x256xf32>
    %cst_60 = arith.constant 1.000000e+00 : f32
    %216 = vector.broadcast %cst_60 : f32 to vector<1x256xf32>
    %217 = arith.addf %216, %215 : vector<1x256xf32>
    %218 = arith.divf %216, %217 : vector<1x256xf32>
    %219 = vector.extract_strided_slice %218 {offsets = [0, 0], sizes = [1, 128], strides = [1, 1]} : vector<1x256xf32> to vector<1x128xf32>
    %220 = vector.extract_strided_slice %218 {offsets = [0, 128], sizes = [1, 128], strides = [1, 1]} : vector<1x256xf32> to vector<1x128xf32>
    %221 = vector.extract_strided_slice %11 {offsets = [0, 256], sizes = [1, 128], strides = [1, 1]} : vector<8x384xf32> to vector<1x128xf32>
    %222 = vector.extract_strided_slice %210 {offsets = [0, 256], sizes = [1, 128], strides = [1, 1]} : vector<1x384xf32> to vector<1x128xf32>
    %223 = arith.addf %222, %208 : vector<1x128xf32>
    %224 = arith.mulf %219, %223 : vector<1x128xf32>
    %225 = arith.addf %221, %224 : vector<1x128xf32>
    %226 = math.tanh %225 : vector<1x128xf32>
    %cst_61 = arith.constant 1.000000e+00 : f32
    %227 = vector.broadcast %cst_61 : f32 to vector<1x128xf32>
    %228 = arith.subf %227, %220 : vector<1x128xf32>
    %229 = arith.mulf %228, %226 : vector<1x128xf32>
    %230 = arith.mulf %220, %209 : vector<1x128xf32>
    %231 = arith.addf %229, %230 : vector<1x128xf32>
    %232 = vector.extract_strided_slice %205 {offsets = [0, 0], sizes = [1, 128], strides = [1, 1]} : vector<8x128xf32> to vector<1x128xf32>
    %cst_62 = arith.constant 5.000000e-01 : f32
    %233 = vector.broadcast %cst_62 : f32 to vector<1x128xf32>
    %234 = arith.cmpf ogt, %232, %233 : vector<1x128xf32>
    %235 = arith.select %234, %231, %209 : vector<1x128xi1>, vector<1x128xf32>
    %cst_63 = arith.constant dense<0.000000e+00> : vector<1x384xf32>
    %236 = tpu.matmul %235, %207, %cst_63 {dimension_numbers = #tpu.dot_dimension_numbers<[1], [0], [0], [1], [0, 0, 1, 1], [], []>} : vector<1x128xf32>, vector<128x384xf32>, vector<1x384xf32> -> vector<1x384xf32>
    %237 = vector.extract_strided_slice %11 {offsets = [1, 0], sizes = [1, 256], strides = [1, 1]} : vector<8x384xf32> to vector<1x256xf32>
    %238 = vector.extract_strided_slice %236 {offsets = [0, 0], sizes = [1, 256], strides = [1, 1]} : vector<1x384xf32> to vector<1x256xf32>
    %239 = arith.addf %237, %238 : vector<1x256xf32>
    %240 = arith.negf %239 : vector<1x256xf32>
    %241 = math.exp %240 : vector<1x256xf32>
    %cst_64 = arith.constant 1.000000e+00 : f32
    %242 = vector.broadcast %cst_64 : f32 to vector<1x256xf32>
    %243 = arith.addf %242, %241 : vector<1x256xf32>
    %244 = arith.divf %242, %243 : vector<1x256xf32>
    %245 = vector.extract_strided_slice %244 {offsets = [0, 0], sizes = [1, 128], strides = [1, 1]} : vector<1x256xf32> to vector<1x128xf32>
    %246 = vector.extract_strided_slice %244 {offsets = [0, 128], sizes = [1, 128], strides = [1, 1]} : vector<1x256xf32> to vector<1x128xf32>
    %247 = vector.extract_strided_slice %11 {offsets = [1, 256], sizes = [1, 128], strides = [1, 1]} : vector<8x384xf32> to vector<1x128xf32>
    %248 = vector.extract_strided_slice %236 {offsets = [0, 256], sizes = [1, 128], strides = [1, 1]} : vector<1x384xf32> to vector<1x128xf32>
    %249 = arith.addf %248, %208 : vector<1x128xf32>
    %250 = arith.mulf %245, %249 : vector<1x128xf32>
    %251 = arith.addf %247, %250 : vector<1x128xf32>
    %252 = math.tanh %251 : vector<1x128xf32>
    %cst_65 = arith.constant 1.000000e+00 : f32
    %253 = vector.broadcast %cst_65 : f32 to vector<1x128xf32>
    %254 = arith.subf %253, %246 : vector<1x128xf32>
    %255 = arith.mulf %254, %252 : vector<1x128xf32>
    %256 = arith.mulf %246, %235 : vector<1x128xf32>
    %257 = arith.addf %255, %256 : vector<1x128xf32>
    %258 = vector.extract_strided_slice %205 {offsets = [1, 0], sizes = [1, 128], strides = [1, 1]} : vector<8x128xf32> to vector<1x128xf32>
    %cst_66 = arith.constant 5.000000e-01 : f32
    %259 = vector.broadcast %cst_66 : f32 to vector<1x128xf32>
    %260 = arith.cmpf ogt, %258, %259 : vector<1x128xf32>
    %261 = arith.select %260, %257, %235 : vector<1x128xi1>, vector<1x128xf32>
    %cst_67 = arith.constant dense<0.000000e+00> : vector<1x384xf32>
    %262 = tpu.matmul %261, %207, %cst_67 {dimension_numbers = #tpu.dot_dimension_numbers<[1], [0], [0], [1], [0, 0, 1, 1], [], []>} : vector<1x128xf32>, vector<128x384xf32>, vector<1x384xf32> -> vector<1x384xf32>
    %263 = vector.extract_strided_slice %11 {offsets = [2, 0], sizes = [1, 256], strides = [1, 1]} : vector<8x384xf32> to vector<1x256xf32>
    %264 = vector.extract_strided_slice %262 {offsets = [0, 0], sizes = [1, 256], strides = [1, 1]} : vector<1x384xf32> to vector<1x256xf32>
    %265 = arith.addf %263, %264 : vector<1x256xf32>
    %266 = arith.negf %265 : vector<1x256xf32>
    %267 = math.exp %266 : vector<1x256xf32>
    %cst_68 = arith.constant 1.000000e+00 : f32
    %268 = vector.broadcast %cst_68 : f32 to vector<1x256xf32>
    %269 = arith.addf %268, %267 : vector<1x256xf32>
    %270 = arith.divf %268, %269 : vector<1x256xf32>
    %271 = vector.extract_strided_slice %270 {offsets = [0, 0], sizes = [1, 128], strides = [1, 1]} : vector<1x256xf32> to vector<1x128xf32>
    %272 = vector.extract_strided_slice %270 {offsets = [0, 128], sizes = [1, 128], strides = [1, 1]} : vector<1x256xf32> to vector<1x128xf32>
    %273 = vector.extract_strided_slice %11 {offsets = [2, 256], sizes = [1, 128], strides = [1, 1]} : vector<8x384xf32> to vector<1x128xf32>
    %274 = vector.extract_strided_slice %262 {offsets = [0, 256], sizes = [1, 128], strides = [1, 1]} : vector<1x384xf32> to vector<1x128xf32>
    %275 = arith.addf %274, %208 : vector<1x128xf32>
    %276 = arith.mulf %271, %275 : vector<1x128xf32>
    %277 = arith.addf %273, %276 : vector<1x128xf32>
    %278 = math.tanh %277 : vector<1x128xf32>
    %cst_69 = arith.constant 1.000000e+00 : f32
    %279 = vector.broadcast %cst_69 : f32 to vector<1x128xf32>
    %280 = arith.subf %279, %272 : vector<1x128xf32>
    %281 = arith.mulf %280, %278 : vector<1x128xf32>
    %282 = arith.mulf %272, %261 : vector<1x128xf32>
    %283 = arith.addf %281, %282 : vector<1x128xf32>
    %284 = vector.extract_strided_slice %205 {offsets = [2, 0], sizes = [1, 128], strides = [1, 1]} : vector<8x128xf32> to vector<1x128xf32>
    %cst_70 = arith.constant 5.000000e-01 : f32
    %285 = vector.broadcast %cst_70 : f32 to vector<1x128xf32>
    %286 = arith.cmpf ogt, %284, %285 : vector<1x128xf32>
    %287 = arith.select %286, %283, %261 : vector<1x128xi1>, vector<1x128xf32>
    %cst_71 = arith.constant dense<0.000000e+00> : vector<1x384xf32>
    %288 = tpu.matmul %287, %207, %cst_71 {dimension_numbers = #tpu.dot_dimension_numbers<[1], [0], [0], [1], [0, 0, 1, 1], [], []>} : vector<1x128xf32>, vector<128x384xf32>, vector<1x384xf32> -> vector<1x384xf32>
    %289 = vector.extract_strided_slice %11 {offsets = [3, 0], sizes = [1, 256], strides = [1, 1]} : vector<8x384xf32> to vector<1x256xf32>
    %290 = vector.extract_strided_slice %288 {offsets = [0, 0], sizes = [1, 256], strides = [1, 1]} : vector<1x384xf32> to vector<1x256xf32>
    %291 = arith.addf %289, %290 : vector<1x256xf32>
    %292 = arith.negf %291 : vector<1x256xf32>
    %293 = math.exp %292 : vector<1x256xf32>
    %cst_72 = arith.constant 1.000000e+00 : f32
    %294 = vector.broadcast %cst_72 : f32 to vector<1x256xf32>
    %295 = arith.addf %294, %293 : vector<1x256xf32>
    %296 = arith.divf %294, %295 : vector<1x256xf32>
    %297 = vector.extract_strided_slice %296 {offsets = [0, 0], sizes = [1, 128], strides = [1, 1]} : vector<1x256xf32> to vector<1x128xf32>
    %298 = vector.extract_strided_slice %296 {offsets = [0, 128], sizes = [1, 128], strides = [1, 1]} : vector<1x256xf32> to vector<1x128xf32>
    %299 = vector.extract_strided_slice %11 {offsets = [3, 256], sizes = [1, 128], strides = [1, 1]} : vector<8x384xf32> to vector<1x128xf32>
    %300 = vector.extract_strided_slice %288 {offsets = [0, 256], sizes = [1, 128], strides = [1, 1]} : vector<1x384xf32> to vector<1x128xf32>
    %301 = arith.addf %300, %208 : vector<1x128xf32>
    %302 = arith.mulf %297, %301 : vector<1x128xf32>
    %303 = arith.addf %299, %302 : vector<1x128xf32>
    %304 = math.tanh %303 : vector<1x128xf32>
    %cst_73 = arith.constant 1.000000e+00 : f32
    %305 = vector.broadcast %cst_73 : f32 to vector<1x128xf32>
    %306 = arith.subf %305, %298 : vector<1x128xf32>
    %307 = arith.mulf %306, %304 : vector<1x128xf32>
    %308 = arith.mulf %298, %287 : vector<1x128xf32>
    %309 = arith.addf %307, %308 : vector<1x128xf32>
    %310 = vector.extract_strided_slice %205 {offsets = [3, 0], sizes = [1, 128], strides = [1, 1]} : vector<8x128xf32> to vector<1x128xf32>
    %cst_74 = arith.constant 5.000000e-01 : f32
    %311 = vector.broadcast %cst_74 : f32 to vector<1x128xf32>
    %312 = arith.cmpf ogt, %310, %311 : vector<1x128xf32>
    %313 = arith.select %312, %309, %287 : vector<1x128xi1>, vector<1x128xf32>
    %cst_75 = arith.constant dense<0.000000e+00> : vector<1x384xf32>
    %314 = tpu.matmul %313, %207, %cst_75 {dimension_numbers = #tpu.dot_dimension_numbers<[1], [0], [0], [1], [0, 0, 1, 1], [], []>} : vector<1x128xf32>, vector<128x384xf32>, vector<1x384xf32> -> vector<1x384xf32>
    %315 = vector.extract_strided_slice %11 {offsets = [4, 0], sizes = [1, 256], strides = [1, 1]} : vector<8x384xf32> to vector<1x256xf32>
    %316 = vector.extract_strided_slice %314 {offsets = [0, 0], sizes = [1, 256], strides = [1, 1]} : vector<1x384xf32> to vector<1x256xf32>
    %317 = arith.addf %315, %316 : vector<1x256xf32>
    %318 = arith.negf %317 : vector<1x256xf32>
    %319 = math.exp %318 : vector<1x256xf32>
    %cst_76 = arith.constant 1.000000e+00 : f32
    %320 = vector.broadcast %cst_76 : f32 to vector<1x256xf32>
    %321 = arith.addf %320, %319 : vector<1x256xf32>
    %322 = arith.divf %320, %321 : vector<1x256xf32>
    %323 = vector.extract_strided_slice %322 {offsets = [0, 0], sizes = [1, 128], strides = [1, 1]} : vector<1x256xf32> to vector<1x128xf32>
    %324 = vector.extract_strided_slice %322 {offsets = [0, 128], sizes = [1, 128], strides = [1, 1]} : vector<1x256xf32> to vector<1x128xf32>
    %325 = vector.extract_strided_slice %11 {offsets = [4, 256], sizes = [1, 128], strides = [1, 1]} : vector<8x384xf32> to vector<1x128xf32>
    %326 = vector.extract_strided_slice %314 {offsets = [0, 256], sizes = [1, 128], strides = [1, 1]} : vector<1x384xf32> to vector<1x128xf32>
    %327 = arith.addf %326, %208 : vector<1x128xf32>
    %328 = arith.mulf %323, %327 : vector<1x128xf32>
    %329 = arith.addf %325, %328 : vector<1x128xf32>
    %330 = math.tanh %329 : vector<1x128xf32>
    %cst_77 = arith.constant 1.000000e+00 : f32
    %331 = vector.broadcast %cst_77 : f32 to vector<1x128xf32>
    %332 = arith.subf %331, %324 : vector<1x128xf32>
    %333 = arith.mulf %332, %330 : vector<1x128xf32>
    %334 = arith.mulf %324, %313 : vector<1x128xf32>
    %335 = arith.addf %333, %334 : vector<1x128xf32>
    %336 = vector.extract_strided_slice %205 {offsets = [4, 0], sizes = [1, 128], strides = [1, 1]} : vector<8x128xf32> to vector<1x128xf32>
    %cst_78 = arith.constant 5.000000e-01 : f32
    %337 = vector.broadcast %cst_78 : f32 to vector<1x128xf32>
    %338 = arith.cmpf ogt, %336, %337 : vector<1x128xf32>
    %339 = arith.select %338, %335, %313 : vector<1x128xi1>, vector<1x128xf32>
    %cst_79 = arith.constant dense<0.000000e+00> : vector<1x384xf32>
    %340 = tpu.matmul %339, %207, %cst_79 {dimension_numbers = #tpu.dot_dimension_numbers<[1], [0], [0], [1], [0, 0, 1, 1], [], []>} : vector<1x128xf32>, vector<128x384xf32>, vector<1x384xf32> -> vector<1x384xf32>
    %341 = vector.extract_strided_slice %11 {offsets = [5, 0], sizes = [1, 256], strides = [1, 1]} : vector<8x384xf32> to vector<1x256xf32>
    %342 = vector.extract_strided_slice %340 {offsets = [0, 0], sizes = [1, 256], strides = [1, 1]} : vector<1x384xf32> to vector<1x256xf32>
    %343 = arith.addf %341, %342 : vector<1x256xf32>
    %344 = arith.negf %343 : vector<1x256xf32>
    %345 = math.exp %344 : vector<1x256xf32>
    %cst_80 = arith.constant 1.000000e+00 : f32
    %346 = vector.broadcast %cst_80 : f32 to vector<1x256xf32>
    %347 = arith.addf %346, %345 : vector<1x256xf32>
    %348 = arith.divf %346, %347 : vector<1x256xf32>
    %349 = vector.extract_strided_slice %348 {offsets = [0, 0], sizes = [1, 128], strides = [1, 1]} : vector<1x256xf32> to vector<1x128xf32>
    %350 = vector.extract_strided_slice %348 {offsets = [0, 128], sizes = [1, 128], strides = [1, 1]} : vector<1x256xf32> to vector<1x128xf32>
    %351 = vector.extract_strided_slice %11 {offsets = [5, 256], sizes = [1, 128], strides = [1, 1]} : vector<8x384xf32> to vector<1x128xf32>
    %352 = vector.extract_strided_slice %340 {offsets = [0, 256], sizes = [1, 128], strides = [1, 1]} : vector<1x384xf32> to vector<1x128xf32>
    %353 = arith.addf %352, %208 : vector<1x128xf32>
    %354 = arith.mulf %349, %353 : vector<1x128xf32>
    %355 = arith.addf %351, %354 : vector<1x128xf32>
    %356 = math.tanh %355 : vector<1x128xf32>
    %cst_81 = arith.constant 1.000000e+00 : f32
    %357 = vector.broadcast %cst_81 : f32 to vector<1x128xf32>
    %358 = arith.subf %357, %350 : vector<1x128xf32>
    %359 = arith.mulf %358, %356 : vector<1x128xf32>
    %360 = arith.mulf %350, %339 : vector<1x128xf32>
    %361 = arith.addf %359, %360 : vector<1x128xf32>
    %362 = vector.extract_strided_slice %205 {offsets = [5, 0], sizes = [1, 128], strides = [1, 1]} : vector<8x128xf32> to vector<1x128xf32>
    %cst_82 = arith.constant 5.000000e-01 : f32
    %363 = vector.broadcast %cst_82 : f32 to vector<1x128xf32>
    %364 = arith.cmpf ogt, %362, %363 : vector<1x128xf32>
    %365 = arith.select %364, %361, %339 : vector<1x128xi1>, vector<1x128xf32>
    %cst_83 = arith.constant dense<0.000000e+00> : vector<1x384xf32>
    %366 = tpu.matmul %365, %207, %cst_83 {dimension_numbers = #tpu.dot_dimension_numbers<[1], [0], [0], [1], [0, 0, 1, 1], [], []>} : vector<1x128xf32>, vector<128x384xf32>, vector<1x384xf32> -> vector<1x384xf32>
    %367 = vector.extract_strided_slice %11 {offsets = [6, 0], sizes = [1, 256], strides = [1, 1]} : vector<8x384xf32> to vector<1x256xf32>
    %368 = vector.extract_strided_slice %366 {offsets = [0, 0], sizes = [1, 256], strides = [1, 1]} : vector<1x384xf32> to vector<1x256xf32>
    %369 = arith.addf %367, %368 : vector<1x256xf32>
    %370 = arith.negf %369 : vector<1x256xf32>
    %371 = math.exp %370 : vector<1x256xf32>
    %cst_84 = arith.constant 1.000000e+00 : f32
    %372 = vector.broadcast %cst_84 : f32 to vector<1x256xf32>
    %373 = arith.addf %372, %371 : vector<1x256xf32>
    %374 = arith.divf %372, %373 : vector<1x256xf32>
    %375 = vector.extract_strided_slice %374 {offsets = [0, 0], sizes = [1, 128], strides = [1, 1]} : vector<1x256xf32> to vector<1x128xf32>
    %376 = vector.extract_strided_slice %374 {offsets = [0, 128], sizes = [1, 128], strides = [1, 1]} : vector<1x256xf32> to vector<1x128xf32>
    %377 = vector.extract_strided_slice %11 {offsets = [6, 256], sizes = [1, 128], strides = [1, 1]} : vector<8x384xf32> to vector<1x128xf32>
    %378 = vector.extract_strided_slice %366 {offsets = [0, 256], sizes = [1, 128], strides = [1, 1]} : vector<1x384xf32> to vector<1x128xf32>
    %379 = arith.addf %378, %208 : vector<1x128xf32>
    %380 = arith.mulf %375, %379 : vector<1x128xf32>
    %381 = arith.addf %377, %380 : vector<1x128xf32>
    %382 = math.tanh %381 : vector<1x128xf32>
    %cst_85 = arith.constant 1.000000e+00 : f32
    %383 = vector.broadcast %cst_85 : f32 to vector<1x128xf32>
    %384 = arith.subf %383, %376 : vector<1x128xf32>
    %385 = arith.mulf %384, %382 : vector<1x128xf32>
    %386 = arith.mulf %376, %365 : vector<1x128xf32>
    %387 = arith.addf %385, %386 : vector<1x128xf32>
    %388 = vector.extract_strided_slice %205 {offsets = [6, 0], sizes = [1, 128], strides = [1, 1]} : vector<8x128xf32> to vector<1x128xf32>
    %cst_86 = arith.constant 5.000000e-01 : f32
    %389 = vector.broadcast %cst_86 : f32 to vector<1x128xf32>
    %390 = arith.cmpf ogt, %388, %389 : vector<1x128xf32>
    %391 = arith.select %390, %387, %365 : vector<1x128xi1>, vector<1x128xf32>
    %cst_87 = arith.constant dense<0.000000e+00> : vector<1x384xf32>
    %392 = tpu.matmul %391, %207, %cst_87 {dimension_numbers = #tpu.dot_dimension_numbers<[1], [0], [0], [1], [0, 0, 1, 1], [], []>} : vector<1x128xf32>, vector<128x384xf32>, vector<1x384xf32> -> vector<1x384xf32>
    %393 = vector.extract_strided_slice %11 {offsets = [7, 0], sizes = [1, 256], strides = [1, 1]} : vector<8x384xf32> to vector<1x256xf32>
    %394 = vector.extract_strided_slice %392 {offsets = [0, 0], sizes = [1, 256], strides = [1, 1]} : vector<1x384xf32> to vector<1x256xf32>
    %395 = arith.addf %393, %394 : vector<1x256xf32>
    %396 = arith.negf %395 : vector<1x256xf32>
    %397 = math.exp %396 : vector<1x256xf32>
    %cst_88 = arith.constant 1.000000e+00 : f32
    %398 = vector.broadcast %cst_88 : f32 to vector<1x256xf32>
    %399 = arith.addf %398, %397 : vector<1x256xf32>
    %400 = arith.divf %398, %399 : vector<1x256xf32>
    %401 = vector.extract_strided_slice %400 {offsets = [0, 0], sizes = [1, 128], strides = [1, 1]} : vector<1x256xf32> to vector<1x128xf32>
    %402 = vector.extract_strided_slice %400 {offsets = [0, 128], sizes = [1, 128], strides = [1, 1]} : vector<1x256xf32> to vector<1x128xf32>
    %403 = vector.extract_strided_slice %11 {offsets = [7, 256], sizes = [1, 128], strides = [1, 1]} : vector<8x384xf32> to vector<1x128xf32>
    %404 = vector.extract_strided_slice %392 {offsets = [0, 256], sizes = [1, 128], strides = [1, 1]} : vector<1x384xf32> to vector<1x128xf32>
    %405 = arith.addf %404, %208 : vector<1x128xf32>
    %406 = arith.mulf %401, %405 : vector<1x128xf32>
    %407 = arith.addf %403, %406 : vector<1x128xf32>
    %408 = math.tanh %407 : vector<1x128xf32>
    %cst_89 = arith.constant 1.000000e+00 : f32
    %409 = vector.broadcast %cst_89 : f32 to vector<1x128xf32>
    %410 = arith.subf %409, %402 : vector<1x128xf32>
    %411 = arith.mulf %410, %408 : vector<1x128xf32>
    %412 = arith.mulf %402, %391 : vector<1x128xf32>
    %413 = arith.addf %411, %412 : vector<1x128xf32>
    %414 = vector.extract_strided_slice %205 {offsets = [7, 0], sizes = [1, 128], strides = [1, 1]} : vector<8x128xf32> to vector<1x128xf32>
    %cst_90 = arith.constant 5.000000e-01 : f32
    %415 = vector.broadcast %cst_90 : f32 to vector<1x128xf32>
    %416 = arith.cmpf ogt, %414, %415 : vector<1x128xf32>
    %417 = arith.select %416, %413, %391 : vector<1x128xi1>, vector<1x128xf32>
    %c0_91 = arith.constant 0 : index
    %c0_92 = arith.constant 0 : index
    %418 = vector.load %arg12[%c0_91, %c0_92] : memref<128x16xf32, #tpu.memory_space<vmem>>, vector<128x16xf32>
    %cst_93 = arith.constant dense<0.000000e+00> : vector<1x16xf32>
    %419 = tpu.matmul %417, %418, %cst_93 {dimension_numbers = #tpu.dot_dimension_numbers<[1], [0], [0], [1], [0, 0, 1, 1], [], []>} : vector<1x128xf32>, vector<128x16xf32>, vector<1x16xf32> -> vector<1x16xf32>
    %c0_94 = arith.constant 0 : index
    %c0_95 = arith.constant 0 : index
    %420 = vector.load %arg13[%c0_94, %c0_95] : memref<1x16xf32, #tpu.memory_space<vmem>>, vector<1x16xf32>
    %421 = arith.addf %419, %420 : vector<1x16xf32>
    %cst_96 = arith.constant 0.000000e+00 : f32
    %422 = vector.broadcast %cst_96 : f32 to vector<1x16xf32>
    %423 = arith.maximumf %421, %422 : vector<1x16xf32>
    %424 = arith.mulf %423, %423 : vector<1x16xf32>
    %cst_97 = arith.constant dense<0.000000e+00> : vector<1xf32>
    %425 = vector.multi_reduction <add>, %424, %cst_97 [1] : vector<1x16xf32> to vector<1xf32>
    %426 = vector.shape_cast %425 : vector<1xf32> to vector<1x1xf32>
    %cst_98 = arith.constant 9.99999996E-13 : f32
    %427 = vector.broadcast %cst_98 : f32 to vector<1x1xf32>
    %428 = arith.addf %426, %427 : vector<1x1xf32>
    %429 = math.rsqrt %428 : vector<1x1xf32>
    %430 = vector.broadcast %429 : vector<1x1xf32> to vector<1x16xf32>
    %431 = arith.mulf %423, %430 : vector<1x16xf32>
    %c0_99 = arith.constant 0 : index
    %c0_100 = arith.constant 0 : index
    %432 = vector.load %arg14[%c0_99, %c0_100] : memref<16x128xf32, #tpu.memory_space<vmem>>, vector<16x128xf32>
    %cst_101 = arith.constant dense<0.000000e+00> : vector<1x128xf32>
    %433 = tpu.matmul %431, %432, %cst_101 {dimension_numbers = #tpu.dot_dimension_numbers<[1], [0], [0], [1], [0, 0, 1, 1], [], []>} : vector<1x16xf32>, vector<16x128xf32>, vector<1x128xf32> -> vector<1x128xf32>
    %c0_102 = arith.constant 0 : index
    %c0_103 = arith.constant 0 : index
    %434 = vector.load %arg15[%c0_102, %c0_103] : memref<1x128xf32, #tpu.memory_space<vmem>>, vector<1x128xf32>
    %435 = arith.addf %433, %434 : vector<1x128xf32>
    %436 = tpu.iota {dimensions = array<i32: 1>} : vector<8x128xi32>
    %c0_i32_104 = arith.constant 0 : i32
    %437 = vector.broadcast %c0_i32_104 : i32 to vector<8x128xi32>
    %438 = arith.cmpi eq, %436, %437 : vector<8x128xi32>
    %439 = vector.shape_cast %183 : vector<8x1xf32> to vector<8x1xf32>
    %440 = vector.broadcast %439 : vector<8x1xf32> to vector<8x128xf32>
    %c1_i32 = arith.constant 1 : i32
    %441 = vector.broadcast %c1_i32 : i32 to vector<8x128xi32>
    %442 = arith.cmpi eq, %436, %441 : vector<8x128xi32>
    %443 = vector.shape_cast %188 : vector<8x1xf32> to vector<8x1xf32>
    %444 = vector.broadcast %443 : vector<8x1xf32> to vector<8x128xf32>
    %cst_105 = arith.constant 0.000000e+00 : f32
    %445 = vector.broadcast %cst_105 : f32 to vector<8x128xf32>
    %446 = arith.select %442, %444, %445 : vector<8x128xi1>, vector<8x128xf32>
    %447 = arith.select %438, %440, %446 : vector<8x128xi1>, vector<8x128xf32>
    %c0_106 = arith.constant 0 : index
    %c0_107 = arith.constant 0 : index
    %448 = vector.load %arg16[%c0_106, %c0_107] : memref<9x128xf32, #tpu.memory_space<vmem>>, vector<1x128xf32>
    tpu.vector_store %arg16[%c0_106, %c0_107], %435 {strides = array<i32>} : memref<9x128xf32, #tpu.memory_space<vmem>>, vector<1x128xf32>,
    %c1_108 = arith.constant 1 : index
    %c0_109 = arith.constant 0 : index
    %449 = vector.load %arg16[%c1_108, %c0_109] : memref<9x128xf32, #tpu.memory_space<vmem>>, vector<8x128xf32>
    tpu.vector_store %arg16[%c1_108, %c0_109], %447 {strides = array<i32>} : memref<9x128xf32, #tpu.memory_space<vmem>>, vector<8x128xf32>,
    return
  }
}

</mosaic_0001>

<llo_original>
// kernel: venet_forward.1
$region0: #{venet_forward.1}
  #allocation0 [shape = 'u32[]', space=smem, size = 0x4, offset = 0x4, fixed_abs, tag = 'smem constant byte address 0x4 - core index']
  #allocation1 [shape = 'u32[144,128]{1,0:T(1,128)}', space=vmem, size = 0x12000, scoped, tag = 'internal scratch']
  #allocation2 [shape = 'f32[1,1]{1,0:T(1,128)S(1)}', space=vmem, size = 0x200, scoped, tag = 'scoped memory for venet_forward.1']
  %s0 = inlined_call_operand.vmem [shape: f32[8,256], index: 0, kind: input, shape index: {}]
  %s1 = inlined_call_operand.hbm [shape: bf16[256,512], index: 1, kind: input, shape index: {}]
  %s2 = inlined_call_operand.vmem [shape: f32[2,128], index: 2, kind: input, shape index: {}]
  %s3 = inlined_call_operand.vmem [shape: bf16[128,128], index: 3, kind: input, shape index: {}]
  %s4 = inlined_call_operand.vmem [shape: f32[2,128], index: 4, kind: input, shape index: {}]
  %s5 = inlined_call_operand.vmem [shape: f32[128,16], index: 5, kind: input, shape index: {}]
  %s6 = inlined_call_operand.vmem [shape: f32[1,16], index: 6, kind: input, shape index: {}]
  %s7 = inlined_call_operand.vmem [shape: f32[16,1], index: 7, kind: input, shape index: {}]
  %s8 = inlined_call_operand.<no memory space> [shape: f32[1,1], index: 8, kind: input, shape index: {}]
  %s9 = inlined_call_operand.vmem [shape: f32[1,384], index: 9, kind: input, shape index: {}]
  %s10 = inlined_call_operand.vmem [shape: bf16[128,384], index: 10, kind: input, shape index: {}]
  %s11 = inlined_call_operand.vmem [shape: f32[1,128], index: 11, kind: input, shape index: {}]
  %s12 = inlined_call_operand.vmem [shape: f32[128,16], index: 12, kind: input, shape index: {}]
  %s13 = inlined_call_operand.vmem [shape: f32[1,16], index: 13, kind: input, shape index: {}]
  %s14 = inlined_call_operand.vmem [shape: f32[16,128], index: 14, kind: input, shape index: {}]
  %s15 = inlined_call_operand.vmem [shape: f32[1,128], index: 15, kind: input, shape index: {}]
  %s16 = inlined_call_operand.vmem [shape: f32[9,128], index: 16, kind: output, shape index: {}]
  %s17 = sld [smem:[#allocation0]]
  $region78: #{venet_forward.1} parent=0
    _
  %s19 = ssub.s32 1, %s17
  %s20 = scalar_select 0, %s19, %s17
  %v21 = vstv %s8
  %22 = vst [vmem:[#allocation2] sm:$0x1] %v21
  $region1: #{venet_forward.1} parent=0
    #allocation3 [shape = 'u8[262144]{0}', space=vmem, size = 0x40000, scoped, tag = 'input window, operand 1, single buffered']
    #allocation4 [shape = 's32[1]{0}', space=sflag, size = 0x4, scoped, tag = 'scoped memory for venet_forward.1']
    %23 = vsyncpa [#allocation4], 0
    // Predicated region
    $region2: #{venet_forward.1} parent=1 // pred_check
      _
    $region3: #{venet_forward.1} parent=1 // pred_check_branch
      %25 = sbr.rel (0) target = $region5
    $region4: #{venet_forward.1} parent=1 // pred_region
      _
    $region5: #{venet_forward.1} parent=1 // pred_fallthru
      _
    // Predicated region
    $region6: #{venet_forward.1} parent=1 // pred_check
      _
    $region7: #{venet_forward.1} parent=1 // pred_check_branch
      %27 = sbr.rel (0) target = $region9
    $region8: #{venet_forward.1} parent=1 // pred_region
      %s29 = ssub.s32 8192, 8192
      %30 = vsyncadd [#allocation4], %s29
      %s31 = sshll.u32 [#allocation3], 4
      %s32 = int_to_ptr.vmem [resolvable:$true] %s31
      %37 = dma.hbm_to_vmem [thread:$0]  %s1, 8192, %s32, [#allocation4], 256, 256, 16
    $region9: #{venet_forward.1} parent=1 // pred_fallthru
      _
    // Predicated region
    $region10: #{venet_forward.1} parent=1 // pred_check
      _
    $region11: #{venet_forward.1} parent=1 // pred_check_branch
      %39 = sbr.rel (0) target = $region13
    $region12: #{venet_forward.1} parent=1 // pred_region
      _
    $region13: #{venet_forward.1} parent=1 // pred_fallthru
      _
    // Predicated region
    $region14: #{venet_forward.1} parent=1 // pred_check
      _
    $region15: #{venet_forward.1} parent=1 // pred_check_branch
      %41 = sbr.rel (0) target = $region17
    $region16: #{venet_forward.1} parent=1 // pred_region
      _
    $region17: #{venet_forward.1} parent=1 // pred_fallthru
      _
    // Predicated region
    $region18: #{venet_forward.1} parent=1 // pred_check
      _
    $region19: #{venet_forward.1} parent=1 // pred_check_branch
      %43 = sbr.rel (0) target = $region21
    $region20: #{venet_forward.1} parent=1 // pred_region
      _
    $region21: #{venet_forward.1} parent=1 // pred_fallthru
      _
    // Predicated region
    $region22: #{venet_forward.1} parent=1 // pred_check
      _
    $region23: #{venet_forward.1} parent=1 // pred_check_branch
      %45 = sbr.rel (0) target = $region25
    $region24: #{venet_forward.1} parent=1 // pred_region
      _
    $region25: #{venet_forward.1} parent=1 // pred_fallthru
      _
    // Predicated region
    $region26: #{venet_forward.1} parent=1 // pred_check
      _
    $region27: #{venet_forward.1} parent=1 // pred_check_branch
      %47 = sbr.rel (0) target = $region29
    $region28: #{venet_forward.1} parent=1 // pred_region
      _
    $region29: #{venet_forward.1} parent=1 // pred_fallthru
      _
    // Predicated region
    $region30: #{venet_forward.1} parent=1 // pred_check
      _
    $region31: #{venet_forward.1} parent=1 // pred_check_branch
      %49 = sbr.rel (0) target = $region33
    $region32: #{venet_forward.1} parent=1 // pred_region
      _
    $region33: #{venet_forward.1} parent=1 // pred_fallthru
      _
    // Predicated region
    $region34: #{venet_forward.1} parent=1 // pred_check
      _
    $region35: #{venet_forward.1} parent=1 // pred_check_branch
      %51 = sbr.rel (0) target = $region37
    $region36: #{venet_forward.1} parent=1 // pred_region
      _
    $region37: #{venet_forward.1} parent=1 // pred_fallthru
      _
    // Predicated region
    $region38: #{venet_forward.1} parent=1 // pred_check
      _
    $region39: #{venet_forward.1} parent=1 // pred_check_branch
      %53 = sbr.rel (0) target = $region41
    $region40: #{venet_forward.1} parent=1 // pred_region
      _
    $region41: #{venet_forward.1} parent=1 // pred_fallthru
      _
    // Predicated region
    $region42: #{venet_forward.1} parent=1 // pred_check
      _
    $region43: #{venet_forward.1} parent=1 // pred_check_branch
      %55 = sbr.rel (0) target = $region45
    $region44: #{venet_forward.1} parent=1 // pred_region
      _
    $region45: #{venet_forward.1} parent=1 // pred_fallthru
      _
    // Predicated region
    $region46: #{venet_forward.1} parent=1 // pred_check
      _
    $region47: #{venet_forward.1} parent=1 // pred_check_branch
      %57 = sbr.rel (0) target = $region49
    $region48: #{venet_forward.1} parent=1 // pred_region
      _
    $region49: #{venet_forward.1} parent=1 // pred_fallthru
      _
    // Predicated region
    $region50: #{venet_forward.1} parent=1 // pred_check
      _
    $region51: #{venet_forward.1} parent=1 // pred_check_branch
      %59 = sbr.rel (0) target = $region53
    $region52: #{venet_forward.1} parent=1 // pred_region
      _
    $region53: #{venet_forward.1} parent=1 // pred_fallthru
      _
    // Predicated region
    $region54: #{venet_forward.1} parent=1 // pred_check
      _
    $region55: #{venet_forward.1} parent=1 // pred_check_branch
      %61 = sbr.rel (0) target = $region57
    $region56: #{venet_forward.1} parent=1 // pred_region
      _
    $region57: #{venet_forward.1} parent=1 // pred_fallthru
      _
    // Predicated region
    $region58: #{venet_forward.1} parent=1 // pred_check
      _
    $region59: #{venet_forward.1} parent=1 // pred_check_branch
      %63 = sbr.rel (0) target = $region61
    $region60: #{venet_forward.1} parent=1 // pred_region
      _
    $region61: #{venet_forward.1} parent=1 // pred_fallthru
      _
    // Predicated region
    $region62: #{venet_forward.1} parent=1 // pred_check
      _
    $region63: #{venet_forward.1} parent=1 // pred_check_branch
      %65 = sbr.rel (0) target = $region65
    $region64: #{venet_forward.1} parent=1 // pred_region
      _
    $region65: #{venet_forward.1} parent=1 // pred_fallthru
      _
    // Predicated region
    $region66: #{venet_forward.1} parent=1 // pred_check
      _
    $region67: #{venet_forward.1} parent=1 // pred_check_branch
      %67 = sbr.rel (0) target = $region69
    $region68: #{venet_forward.1} parent=1 // pred_region
      %68 = dma.done [#allocation4], 8192
    $region69: #{venet_forward.1} parent=1 // pred_fallthru
      _
    %v69 = vld [vmem:[%s0] sm:$0xff]
    %v70 = vld [vmem:[%s0 + $0x8] sm:$0xff]
    %v71 = vmax.f32 %v69, 0.0
    %v72 = vmax.f32 %v70, 0.0
    %v73 = vlaneseq
    %v74 = vand.u32 %v73, 127
    %v75 = vld [vmem:[#allocation3] sm:$0xff]
    %v76 = vld [vmem:[#allocation3 + $0x8] sm:$0xff]
    %v77 = vld [vmem:[#allocation3 + $0x10] sm:$0xff]
    %v78 = vld [vmem:[#allocation3 + $0x18] sm:$0xff]
    %v79 = vld [vmem:[#allocation3 + $0x20] sm:$0xff]
    %v80 = vld [vmem:[#allocation3 + $0x28] sm:$0xff]
    %v81 = vld [vmem:[#allocation3 + $0x30] sm:$0xff]
    %v82 = vld [vmem:[#allocation3 + $0x38] sm:$0xff]
    %v83 = vld [vmem:[#allocation3 + $0x40] sm:$0xff]
    %v84 = vld [vmem:[#allocation3 + $0x48] sm:$0xff]
    %v85 = vld [vmem:[#allocation3 + $0x50] sm:$0xff]
    %v86 = vld [vmem:[#allocation3 + $0x58] sm:$0xff]
    %v87 = vld [vmem:[#allocation3 + $0x60] sm:$0xff]
    %v88 = vld [vmem:[#allocation3 + $0x68] sm:$0xff]
    %v89 = vld [vmem:[#allocation3 + $0x70] sm:$0xff]
    %v90 = vld [vmem:[#allocation3 + $0x78] sm:$0xff]
    %v91 = vld [vmem:[#allocation3 + $0x80] sm:$0xff]
    %v92 = vld [vmem:[#allocation3 + $0x88] sm:$0xff]
    %v93 = vld [vmem:[#allocation3 + $0x90] sm:$0xff]
    %v94 = vld [vmem:[#allocation3 + $0x98] sm:$0xff]
    %v95 = vld [vmem:[#allocation3 + $0xa0] sm:$0xff]
    %v96 = vld [vmem:[#allocation3 + $0xa8] sm:$0xff]
    %v97 = vld [vmem:[#allocation3 + $0xb0] sm:$0xff]
    %v98 = vld [vmem:[#allocation3 + $0xb8] sm:$0xff]
    %v99 = vld [vmem:[#allocation3 + $0xc0] sm:$0xff]
    %v100 = vld [vmem:[#allocation3 + $0xc8] sm:$0xff]
    %v101 = vld [vmem:[#allocation3 + $0xd0] sm:$0xff]
    %v102 = vld [vmem:[#allocation3 + $0xd8] sm:$0xff]
    %v103 = vld [vmem:[#allocation3 + $0xe0] sm:$0xff]
    %v104 = vld [vmem:[#allocation3 + $0xe8] sm:$0xff]
    %v105 = vld [vmem:[#allocation3 + $0xf0] sm:$0xff]
    %v106 = vld [vmem:[#allocation3 + $0xf8] sm:$0xff]
    %v107 = vld [vmem:[#allocation3 + $0x100] sm:$0xff]
    %v108 = vld [vmem:[#allocation3 + $0x108] sm:$0xff]
    %v109 = vld [vmem:[#allocation3 + $0x110] sm:$0xff]
    %v110 = vld [vmem:[#allocation3 + $0x118] sm:$0xff]
    %v111 = vld [vmem:[#allocation3 + $0x120] sm:$0xff]
    %v112 = vld [vmem:[#allocation3 + $0x128] sm:$0xff]
    %v113 = vld [vmem:[#allocation3 + $0x130] sm:$0xff]
    %v114 = vld [vmem:[#allocation3 + $0x138] sm:$0xff]
    %v115 = vld [vmem:[#allocation3 + $0x140] sm:$0xff]
    %v116 = vld [vmem:[#allocation3 + $0x148] sm:$0xff]
    %v117 = vld [vmem:[#allocation3 + $0x150] sm:$0xff]
    %v118 = vld [vmem:[#allocation3 + $0x158] sm:$0xff]
    %v119 = vld [vmem:[#allocation3 + $0x160] sm:$0xff]
    %v120 = vld [vmem:[#allocation3 + $0x168] sm:$0xff]
    %v121 = vld [vmem:[#allocation3 + $0x170] sm:$0xff]
    %v122 = vld [vmem:[#allocation3 + $0x178] sm:$0xff]
    %v123 = vld [vmem:[#allocation3 + $0x180] sm:$0xff]
    %v124 = vld [vmem:[#allocation3 + $0x188] sm:$0xff]
    %v125 = vld [vmem:[#allocation3 + $0x190] sm:$0xff]
    %v126 = vld [vmem:[#allocation3 + $0x198] sm:$0xff]
    %v127 = vld [vmem:[#allocation3 + $0x1a0] sm:$0xff]
    %v128 = vld [vmem:[#allocation3 + $0x1a8] sm:$0xff]
    %v129 = vld [vmem:[#allocation3 + $0x1b0] sm:$0xff]
    %v130 = vld [vmem:[#allocation3 + $0x1b8] sm:$0xff]
    %v131 = vld [vmem:[#allocation3 + $0x1c0] sm:$0xff]
    %v132 = vld [vmem:[#allocation3 + $0x1c8] sm:$0xff]
    %v133 = vld [vmem:[#allocation3 + $0x1d0] sm:$0xff]
    %v134 = vld [vmem:[#allocation3 + $0x1d8] sm:$0xff]
    %v135 = vld [vmem:[#allocation3 + $0x1e0] sm:$0xff]
    %v136 = vld [vmem:[#allocation3 + $0x1e8] sm:$0xff]
    %v137 = vld [vmem:[#allocation3 + $0x1f0] sm:$0xff]
    %v138 = vld [vmem:[#allocation3 + $0x1f8] sm:$0xff]
    %v139 = vunpack.c.l.bf16 %v75
    %v140 = vunpack.c.h.bf16 %v75
    %v141 = vunpack.c.l.bf16 %v76
    %v142 = vunpack.c.h.bf16 %v76
    %v143 = vunpack.c.l.bf16 %v77
    %v144 = vunpack.c.h.bf16 %v77
    %v145 = vunpack.c.l.bf16 %v78
    %v146 = vunpack.c.h.bf16 %v78
    %v147 = vunpack.c.l.bf16 %v79
    %v148 = vunpack.c.h.bf16 %v79
    %v149 = vunpack.c.l.bf16 %v80
    %v150 = vunpack.c.h.bf16 %v80
    %v151 = vunpack.c.l.bf16 %v81
    %v152 = vunpack.c.h.bf16 %v81
    %v153 = vunpack.c.l.bf16 %v82
    %v154 = vunpack.c.h.bf16 %v82
    %v155 = vunpack.c.l.bf16 %v83
    %v156 = vunpack.c.h.bf16 %v83
    %v157 = vunpack.c.l.bf16 %v84
    %v158 = vunpack.c.h.bf16 %v84
    %v159 = vunpack.c.l.bf16 %v85
    %v160 = vunpack.c.h.bf16 %v85
    %v161 = vunpack.c.l.bf16 %v86
    %v162 = vunpack.c.h.bf16 %v86
    %v163 = vunpack.c.l.bf16 %v87
    %v164 = vunpack.c.h.bf16 %v87
    %v165 = vunpack.c.l.bf16 %v88
    %v166 = vunpack.c.h.bf16 %v88
    %v167 = vunpack.c.l.bf16 %v89
    %v168 = vunpack.c.h.bf16 %v89
    %v169 = vunpack.c.l.bf16 %v90
    %v170 = vunpack.c.h.bf16 %v90
    %v171 = vunpack.c.l.bf16 %v91
    %v172 = vunpack.c.h.bf16 %v91
    %v173 = vunpack.c.l.bf16 %v92
    %v174 = vunpack.c.h.bf16 %v92
    %v175 = vunpack.c.l.bf16 %v93
    %v176 = vunpack.c.h.bf16 %v93
    %v177 = vunpack.c.l.bf16 %v94
    %v178 = vunpack.c.h.bf16 %v94
    %v179 = vunpack.c.l.bf16 %v95
    %v180 = vunpack.c.h.bf16 %v95
    %v181 = vunpack.c.l.bf16 %v96
    %v182 = vunpack.c.h.bf16 %v96
    %v183 = vunpack.c.l.bf16 %v97
    %v184 = vunpack.c.h.bf16 %v97
    %v185 = vunpack.c.l.bf16 %v98
    %v186 = vunpack.c.h.bf16 %v98
    %v187 = vunpack.c.l.bf16 %v99
    %v188 = vunpack.c.h.bf16 %v99
    %v189 = vunpack.c.l.bf16 %v100
    %v190 = vunpack.c.h.bf16 %v100
    %v191 = vunpack.c.l.bf16 %v101
    %v192 = vunpack.c.h.bf16 %v101
    %v193 = vunpack.c.l.bf16 %v102
    %v194 = vunpack.c.h.bf16 %v102
    %v195 = vunpack.c.l.bf16 %v103
    %v196 = vunpack.c.h.bf16 %v103
    %v197 = vunpack.c.l.bf16 %v104
    %v198 = vunpack.c.h.bf16 %v104
    %v199 = vunpack.c.l.bf16 %v105
    %v200 = vunpack.c.h.bf16 %v105
    %v201 = vunpack.c.l.bf16 %v106
    %v202 = vunpack.c.h.bf16 %v106
    %v203 = vunpack.c.l.bf16 %v107
    %v204 = vunpack.c.h.bf16 %v107
    %v205 = vunpack.c.l.bf16 %v108
    %v206 = vunpack.c.h.bf16 %v108
    %v207 = vunpack.c.l.bf16 %v109
    %v208 = vunpack.c.h.bf16 %v109
    %v209 = vunpack.c.l.bf16 %v110
    %v210 = vunpack.c.h.bf16 %v110
    %v211 = vunpack.c.l.bf16 %v111
    %v212 = vunpack.c.h.bf16 %v111
    %v213 = vunpack.c.l.bf16 %v112
    %v214 = vunpack.c.h.bf16 %v112
    %v215 = vunpack.c.l.bf16 %v113
    %v216 = vunpack.c.h.bf16 %v113
    %v217 = vunpack.c.l.bf16 %v114
    %v218 = vunpack.c.h.bf16 %v114
    %v219 = vunpack.c.l.bf16 %v115
    %v220 = vunpack.c.h.bf16 %v115
    %v221 = vunpack.c.l.bf16 %v116
    %v222 = vunpack.c.h.bf16 %v116
    %v223 = vunpack.c.l.bf16 %v117
    %v224 = vunpack.c.h.bf16 %v117
    %v225 = vunpack.c.l.bf16 %v118
    %v226 = vunpack.c.h.bf16 %v118
    %v227 = vunpack.c.l.bf16 %v119
    %v228 = vunpack.c.h.bf16 %v119
    %v229 = vunpack.c.l.bf16 %v120
    %v230 = vunpack.c.h.bf16 %v120
    %v231 = vunpack.c.l.bf16 %v121
    %v232 = vunpack.c.h.bf16 %v121
    %v233 = vunpack.c.l.bf16 %v122
    %v234 = vunpack.c.h.bf16 %v122
    %v235 = vunpack.c.l.bf16 %v123
    %v236 = vunpack.c.h.bf16 %v123
    %v237 = vunpack.c.l.bf16 %v124
    %v238 = vunpack.c.h.bf16 %v124
    %v239 = vunpack.c.l.bf16 %v125
    %v240 = vunpack.c.h.bf16 %v125
    %v241 = vunpack.c.l.bf16 %v126
    %v242 = vunpack.c.h.bf16 %v126
    %v243 = vunpack.c.l.bf16 %v127
    %v244 = vunpack.c.h.bf16 %v127
    %v245 = vunpack.c.l.bf16 %v128
    %v246 = vunpack.c.h.bf16 %v128
    %v247 = vunpack.c.l.bf16 %v129
    %v248 = vunpack.c.h.bf16 %v129
    %v249 = vunpack.c.l.bf16 %v130
    %v250 = vunpack.c.h.bf16 %v130
    %v251 = vunpack.c.l.bf16 %v131
    %v252 = vunpack.c.h.bf16 %v131
    %v253 = vunpack.c.l.bf16 %v132
    %v254 = vunpack.c.h.bf16 %v132
    %v255 = vunpack.c.l.bf16 %v133
    %v256 = vunpack.c.h.bf16 %v133
    %v257 = vunpack.c.l.bf16 %v134
    %v258 = vunpack.c.h.bf16 %v134
    %v259 = vunpack.c.l.bf16 %v135
    %v260 = vunpack.c.h.bf16 %v135
    %v261 = vunpack.c.l.bf16 %v136
    %v262 = vunpack.c.h.bf16 %v136
    %v263 = vunpack.c.l.bf16 %v137
    %v264 = vunpack.c.h.bf16 %v137
    %v265 = vunpack.c.l.bf16 %v138
    %v266 = vunpack.c.h.bf16 %v138
    %267 = vmatprep.subr.mxu0 %v140
    %268 = vmatpush1.msra.mxu0 %v139
    %269 = vmatprep.subr.mxu0 %v144
    %270 = vmatpush1.msra.mxu0 %v143
    %271 = vmatprep.subr.mxu0 %v148
    %272 = vmatpush1.msra.mxu0 %v147
    %273 = vmatprep.subr.mxu0 %v152
    %274 = vmatpush1.msra.mxu0 %v151
    %275 = vmatprep.subr.mxu0 %v156
    %276 = vmatpush1.msra.mxu0 %v155
    %277 = vmatprep.subr.mxu0 %v160
    %278 = vmatpush1.msra.mxu0 %v159
    %279 = vmatprep.subr.mxu0 %v164
    %280 = vmatpush1.msra.mxu0 %v163
    %281 = vmatprep.subr.mxu0 %v168
    %282 = vmatpush1.msra.mxu0 %v167
    %283 = vmatprep.subr.mxu0 %v172
    %284 = vmatpush1.msra.mxu0 %v171
    %285 = vmatprep.subr.mxu0 %v176
    %286 = vmatpush1.msra.mxu0 %v175
    %287 = vmatprep.subr.mxu0 %v180
    %288 = vmatpush1.msra.mxu0 %v179
    %289 = vmatprep.subr.mxu0 %v184
    %290 = vmatpush1.msra.mxu0 %v183
    %291 = vmatprep.subr.mxu0 %v188
    %292 = vmatpush1.msra.mxu0 %v187
    %293 = vmatprep.subr.mxu0 %v192
    %294 = vmatpush1.msra.mxu0 %v191
    %295 = vmatprep.subr.mxu0 %v196
    %296 = vmatpush1.msra.mxu0 %v195
    %297 = vmatprep.subr.mxu0 %v200
    %298 = vmatpush1.msra.mxu0 %v199
    %299 = vmatprep.subr.mxu0 %v204
    %300 = vmatpush1.msra.mxu0 %v203
    %301 = vmatprep.subr.mxu0 %v208
    %302 = vmatpush1.msra.mxu0 %v207
    %303 = vmatprep.subr.mxu0 %v212
    %304 = vmatpush1.msra.mxu0 %v211
    %305 = vmatprep.subr.mxu0 %v216
    %306 = vmatpush1.msra.mxu0 %v215
    %307 = vmatprep.subr.mxu0 %v220
    %308 = vmatpush1.msra.mxu0 %v219
    %309 = vmatprep.subr.mxu0 %v224
    %310 = vmatpush1.msra.mxu0 %v223
    %311 = vmatprep.subr.mxu0 %v228
    %312 = vmatpush1.msra.mxu0 %v227
    %313 = vmatprep.subr.mxu0 %v232
    %314 = vmatpush1.msra.mxu0 %v231
    %315 = vmatprep.subr.mxu0 %v236
    %316 = vmatpush1.msra.mxu0 %v235
    %317 = vmatprep.subr.mxu0 %v240
    %318 = vmatpush1.msra.mxu0 %v239
    %319 = vmatprep.subr.mxu0 %v244
    %320 = vmatpush1.msra.mxu0 %v243
    %321 = vmatprep.subr.mxu0 %v248
    %322 = vmatpush1.msra.mxu0 %v247
    %323 = vmatprep.subr.mxu0 %v252
    %324 = vmatpush1.msra.mxu0 %v251
    %325 = vmatprep.subr.mxu0 %v256
    %326 = vmatpush1.msra.mxu0 %v255
    %327 = vmatprep.subr.mxu0 %v260
    %328 = vmatpush1.msra.mxu0 %v259
    %329 = vmatprep.subr.mxu0 %v264
    %330 = vmatpush1.msra.mxu0 %v263
    %331 = vmatprep.mubr.f32.mxu0 %v72
    %332 = vmatmul.mubr.f32.gmra.mrb[0].mxu0 %v71
    %v333 = vpop.f32.mrb[0].mxu0
    %v334 = vadd.f32 0.0, %v333
    %v335 = vpop.f32.mrb[0].mxu0
    %v336 = vadd.f32 0.0, %v335
    %337 = vdwg.mxu0
    %338 = vmatprep.subr.mxu0 %v142
    %339 = vmatpush1.msra.mxu0 %v141
    %340 = vmatprep.subr.mxu0 %v146
    %341 = vmatpush1.msra.mxu0 %v145
    %342 = vmatprep.subr.mxu0 %v150
    %343 = vmatpush1.msra.mxu0 %v149
    %344 = vmatprep.subr.mxu0 %v154
    %345 = vmatpush1.msra.mxu0 %v153
    %346 = vmatprep.subr.mxu0 %v158
    %347 = vmatpush1.msra.mxu0 %v157
    %348 = vmatprep.subr.mxu0 %v162
    %349 = vmatpush1.msra.mxu0 %v161
    %350 = vmatprep.subr.mxu0 %v166
    %351 = vmatpush1.msra.mxu0 %v165
    %352 = vmatprep.subr.mxu0 %v170
    %353 = vmatpush1.msra.mxu0 %v169
    %354 = vmatprep.subr.mxu0 %v174
    %355 = vmatpush1.msra.mxu0 %v173
    %356 = vmatprep.subr.mxu0 %v178
    %357 = vmatpush1.msra.mxu0 %v177
    %358 = vmatprep.subr.mxu0 %v182
    %359 = vmatpush1.msra.mxu0 %v181
    %360 = vmatprep.subr.mxu0 %v186
    %361 = vmatpush1.msra.mxu0 %v185
    %362 = vmatprep.subr.mxu0 %v190
    %363 = vmatpush1.msra.mxu0 %v189
    %364 = vmatprep.subr.mxu0 %v194
    %365 = vmatpush1.msra.mxu0 %v193
    %366 = vmatprep.subr.mxu0 %v198
    %367 = vmatpush1.msra.mxu0 %v197
    %368 = vmatprep.subr.mxu0 %v202
    %369 = vmatpush1.msra.mxu0 %v201
    %370 = vmatprep.subr.mxu0 %v206
    %371 = vmatpush1.msra.mxu0 %v205
    %372 = vmatprep.subr.mxu0 %v210
    %373 = vmatpush1.msra.mxu0 %v209
    %374 = vmatprep.subr.mxu0 %v214
    %375 = vmatpush1.msra.mxu0 %v213
    %376 = vmatprep.subr.mxu0 %v218
    %377 = vmatpush1.msra.mxu0 %v217
    %378 = vmatprep.subr.mxu0 %v222
    %379 = vmatpush1.msra.mxu0 %v221
    %380 = vmatprep.subr.mxu0 %v226
    %381 = vmatpush1.msra.mxu0 %v225
    %382 = vmatprep.subr.mxu0 %v230
    %383 = vmatpush1.msra.mxu0 %v229
    %384 = vmatprep.subr.mxu0 %v234
    %385 = vmatpush1.msra.mxu0 %v233
    %386 = vmatprep.subr.mxu0 %v238
    %387 = vmatpush1.msra.mxu0 %v237
    %388 = vmatprep.subr.mxu0 %v242
    %389 = vmatpush1.msra.mxu0 %v241
    %390 = vmatprep.subr.mxu0 %v246
    %391 = vmatpush1.msra.mxu0 %v245
    %392 = vmatprep.subr.mxu0 %v250
    %393 = vmatpush1.msra.mxu0 %v249
    %394 = vmatprep.subr.mxu0 %v254
    %395 = vmatpush1.msra.mxu0 %v253
    %396 = vmatprep.subr.mxu0 %v258
    %397 = vmatpush1.msra.mxu0 %v257
    %398 = vmatprep.subr.mxu0 %v262
    %399 = vmatpush1.msra.mxu0 %v261
    %400 = vmatprep.subr.mxu0 %v266
    %401 = vmatpush1.msra.mxu0 %v265
    %402 = vmatprep.mubr.f32.mxu0 %v72
    %403 = vmatmul.mubr.f32.gmra.mrb[0].mxu0 %v71
    %v404 = vpop.f32.mrb[0].mxu0
    %v405 = vadd.f32 0.0, %v404
    %v406 = vpop.f32.mrb[0].mxu0
    %v407 = vadd.f32 0.0, %v406
    %408 = vdwg.mxu0
    %v409 = vld [vmem:[%s9] sm:$0x7]
    %v411 = vlaneseq
    %v412 = vshrl.u32 %v411, 7
    %v413 = vsub.s32 0, %v412
    %v414 = vrot.slane %v409, %v413
    %v415 = vlaneseq
    %v416 = vshrl.u32 %v415, 7
    %v417 = vsub.s32 1, %v416
    %v418 = vrot.slane %v409, %v417
    %v419 = vlaneseq
    %v420 = vshrl.u32 %v419, 7
    %v421 = vsub.s32 2, %v420
    %v422 = vrot.slane %v409, %v421
    %v426 = vadd.f32 %v336, %v414
    %v427 = vadd.f32 %v405, %v418
    %v428 = vadd.f32 %v407, %v422
    %v429 = vld [vmem:[%s2] sm:$0x1]
    %v430 = vld [vmem:[%s2 + $0x1] sm:$0x1]
    %vm431 = vcmp.lt.s32.totalorder %v74, 64
    %v433 = vrot.slane %v334, 7
    %v435 = vrot.slane %v334, 5
    %v437 = vrot.slane %v334, 3
    %v439 = vrot.slane %v334, 1
    %vm441 = vcmask 1040384
    %v442 = vsel %vm441, %v433, %v435
    %vm443 = vcmask 1041408
    %v444 = vsel %vm443, %v442, %v437
    %vm445 = vcmask 1042432
    %v446 = vsel %vm445, %v444, %v439
    %vm447 = vcmask 1043456
    %v448 = vsel %vm447, %v446, %v433
    %vm449 = vcmask 1044480
    %v450 = vsel %vm449, %v448, %v435
    %vm451 = vcmask 1045504
    %v452 = vsel %vm451, %v450, %v437
    %vm453 = vcmask 1046528
    %v454 = vsel %vm453, %v452, %v439
    %v455 = vsel %vm431, %v334, %v454
    %v456 = vmul.f32 %v429, 0.0
    %v457 = vadd.f32 %v455, %v456
    %v458 = vadd.f32 %v457, %v430
    %v459 = vmax.f32 %v458, 0.0
    %v460 = vmul.f32 %v429, %v459
    %v462 = vrot.slane %v460, 7
    %v464 = vadd.f32 %v455, %v462
    %v466 = vrot.slane %v430, 7
    %v468 = vadd.f32 %v464, %v466
    %v469 = vmax.f32 %v468, 0.0
    %v471 = vrot.slane %v469, 1
    %v473 = vmul.f32 %v429, %v471
    %v475 = vrot.slane %v473, 6
    %v477 = vadd.f32 %v455, %v475
    %v478 = vrot.slane %v430, 6
    %v480 = vadd.f32 %v477, %v478
    %v481 = vmax.f32 %v480, 0.0
    %v483 = vrot.slane %v481, 2
    %v485 = vmul.f32 %v429, %v483
    %v487 = vrot.slane %v485, 5
    %v489 = vadd.f32 %v455, %v487
    %v490 = vrot.slane %v430, 5
    %v492 = vadd.f32 %v489, %v490
    %v493 = vmax.f32 %v492, 0.0
    %v495 = vrot.slane %v493, 3
    %v497 = vmul.f32 %v429, %v495
    %v499 = vrot.slane %v497, 4
    %v501 = vadd.f32 %v455, %v499
    %v502 = vrot.slane %v430, 4
    %v504 = vadd.f32 %v501, %v502
    %v505 = vmax.f32 %v504, 0.0
    %v507 = vrot.slane %v505, 4
    %v509 = vmul.f32 %v429, %v507
    %v511 = vrot.slane %v509, 3
    %v513 = vadd.f32 %v455, %v511
    %v514 = vrot.slane %v430, 3
    %v516 = vadd.f32 %v513, %v514
    %v517 = vmax.f32 %v516, 0.0
    %v519 = vrot.slane %v517, 5
    %v521 = vmul.f32 %v429, %v519
    %v523 = vrot.slane %v521, 2
    %v525 = vadd.f32 %v455, %v523
    %v526 = vrot.slane %v430, 2
    %v528 = vadd.f32 %v525, %v526
    %v529 = vmax.f32 %v528, 0.0
    %v531 = vrot.slane %v529, 6
    %v533 = vmul.f32 %v429, %v531
    %v535 = vrot.slane %v533, 1
    %v537 = vadd.f32 %v455, %v535
    %v538 = vrot.slane %v430, 1
    %v540 = vadd.f32 %v537, %v538
    %v541 = vmax.f32 %v540, 0.0
    %v542 = vsel %vm441, %v459, %v469
    %v543 = vsel %vm443, %v542, %v481
    %v544 = vsel %vm445, %v543, %v493
    %v545 = vsel %vm447, %v544, %v505
    %v546 = vsel %vm449, %v545, %v517
    %v547 = vsel %vm451, %v546, %v529
    %v548 = vsel %vm453, %v547, %v541
    %v550 = vrot.slane %v548, 7
    %v552 = vrot.slane %v548, 5
    %v554 = vrot.slane %v548, 3
    %v556 = vrot.slane %v548, 1
    %v558 = vsel %vm441, %v550, %v552
    %v559 = vsel %vm443, %v558, %v554
    %v560 = vsel %vm445, %v559, %v556
    %v561 = vsel %vm447, %v560, %v550
    %v562 = vsel %vm449, %v561, %v552
    %v563 = vsel %vm451, %v562, %v554
    %v564 = vsel %vm453, %v563, %v556
    %v565 = vsel %vm431, %v548, %v564
    %v566 = vld [vmem:[%s3] sm:$0xf]
    %v567 = vld [vmem:[%s3 + $0x4] sm:$0xf]
    %v568 = vld [vmem:[%s3 + $0x8] sm:$0xf]
    %v569 = vld [vmem:[%s3 + $0xc] sm:$0xf]
    %v570 = vld [vmem:[%s3 + $0x10] sm:$0xf]
    %v571 = vld [vmem:[%s3 + $0x14] sm:$0xf]
    %v572 = vld [vmem:[%s3 + $0x18] sm:$0xf]
    %v573 = vld [vmem:[%s3 + $0x1c] sm:$0xf]
    %v574 = vld [vmem:[%s3 + $0x20] sm:$0xf]
    %v575 = vld [vmem:[%s3 + $0x24] sm:$0xf]
    %v576 = vld [vmem:[%s3 + $0x28] sm:$0xf]
    %v577 = vld [vmem:[%s3 + $0x2c] sm:$0xf]
    %v578 = vld [vmem:[%s3 + $0x30] sm:$0xf]
    %v579 = vld [vmem:[%s3 + $0x34] sm:$0xf]
    %v580 = vld [vmem:[%s3 + $0x38] sm:$0xf]
    %v581 = vld [vmem:[%s3 + $0x3c] sm:$0xf]
    %v582 = vunpack.c.l.bf16 %v566
    %v583 = vunpack.c.l.bf16 %v567
    %v584 = vunpack.c.l.bf16 %v568
    %v585 = vunpack.c.l.bf16 %v569
    %v586 = vunpack.c.l.bf16 %v570
    %v587 = vunpack.c.l.bf16 %v571
    %v588 = vunpack.c.l.bf16 %v572
    %v589 = vunpack.c.l.bf16 %v573
    %v590 = vunpack.c.l.bf16 %v574
    %v591 = vunpack.c.l.bf16 %v575
    %v592 = vunpack.c.l.bf16 %v576
    %v593 = vunpack.c.l.bf16 %v577
    %v594 = vunpack.c.l.bf16 %v578
    %v595 = vunpack.c.l.bf16 %v579
    %v596 = vunpack.c.l.bf16 %v580
    %v597 = vunpack.c.l.bf16 %v581
    %598 = vmatprep.subr.mxu0 0.0
    %599 = vmatpush1.msra.mxu0 %v582
    %600 = vmatprep.subr.mxu0 0.0
    %601 = vmatpush1.msra.mxu0 %v583
    %602 = vmatprep.subr.mxu0 0.0
    %603 = vmatpush1.msra.mxu0 %v584
    %604 = vmatprep.subr.mxu0 0.0
    %605 = vmatpush1.msra.mxu0 %v585
    %606 = vmatprep.subr.mxu0 0.0
    %607 = vmatpush1.msra.mxu0 %v586
    %608 = vmatprep.subr.mxu0 0.0
    %609 = vmatpush1.msra.mxu0 %v587
    %610 = vmatprep.subr.mxu0 0.0
    %611 = vmatpush1.msra.mxu0 %v588
    %612 = vmatprep.subr.mxu0 0.0
    %613 = vmatpush1.msra.mxu0 %v589
    %614 = vmatprep.subr.mxu0 0.0
    %615 = vmatpush1.msra.mxu0 %v590
    %616 = vmatprep.subr.mxu0 0.0
    %617 = vmatpush1.msra.mxu0 %v591
    %618 = vmatprep.subr.mxu0 0.0
    %619 = vmatpush1.msra.mxu0 %v592
    %620 = vmatprep.subr.mxu0 0.0
    %621 = vmatpush1.msra.mxu0 %v593
    %622 = vmatprep.subr.mxu0 0.0
    %623 = vmatpush1.msra.mxu0 %v594
    %624 = vmatprep.subr.mxu0 0.0
    %625 = vmatpush1.msra.mxu0 %v595
    %626 = vmatprep.subr.mxu0 0.0
    %627 = vmatpush1.msra.mxu0 %v596
    %628 = vmatprep.subr.mxu0 0.0
    %629 = vmatpush1.msra.mxu0 %v597
    %630 = vmatprep.subr.mxu0 0.0
    %631 = vmatpush1.msra.mxu0 0.0
    %632 = vmatprep.subr.mxu0 0.0
    %633 = vmatpush1.msra.mxu0 0.0
    %634 = vmatprep.subr.mxu0 0.0
    %635 = vmatpush1.msra.mxu0 0.0
    %636 = vmatprep.subr.mxu0 0.0
    %637 = vmatpush1.msra.mxu0 0.0
    %638 = vmatprep.subr.mxu0 0.0
    %639 = vmatpush1.msra.mxu0 0.0
    %640 = vmatprep.subr.mxu0 0.0
    %641 = vmatpush1.msra.mxu0 0.0
    %642 = vmatprep.subr.mxu0 0.0
    %643 = vmatpush1.msra.mxu0 0.0
    %644 = vmatprep.subr.mxu0 0.0
    %645 = vmatpush1.msra.mxu0 0.0
    %646 = vmatprep.subr.mxu0 0.0
    %647 = vmatpush1.msra.mxu0 0.0
    %648 = vmatprep.subr.mxu0 0.0
    %649 = vmatpush1.msra.mxu0 0.0
    %650 = vmatprep.subr.mxu0 0.0
    %651 = vmatpush1.msra.mxu0 0.0
    %652 = vmatprep.subr.mxu0 0.0
    %653 = vmatpush1.msra.mxu0 0.0
    %654 = vmatprep.subr.mxu0 0.0
    %655 = vmatpush1.msra.mxu0 0.0
    %656 = vmatprep.subr.mxu0 0.0
    %657 = vmatpush1.msra.mxu0 0.0
    %658 = vmatprep.subr.mxu0 0.0
    %659 = vmatpush1.msra.mxu0 0.0
    %660 = vmatprep.subr.mxu0 0.0
    %661 = vmatpush1.msra.mxu0 0.0
    %662 = vmatprep.mubr.f32.mxu0 0.0
    %663 = vmatmul.mubr.f32.gmra.mrb[0].mxu0 %v565
    %v664 = vpop.f32.mrb[0].mxu0
    %v665 = vadd.f32 0.0, %v664
    %v666 = vpop.f32.mrb[0].mxu0
    %667 = vdwg.mxu0
    %v668 = vld [vmem:[%s4] sm:$0x1]
    %v669 = vld [vmem:[%s4 + $0x1] sm:$0x1]
    %v671 = vrot.slane %v665, 7
    %v673 = vrot.slane %v665, 5
    %v675 = vrot.slane %v665, 3
    %v677 = vrot.slane %v665, 1
    %v679 = vsel %vm441, %v671, %v673
    %v680 = vsel %vm443, %v679, %v675
    %v681 = vsel %vm445, %v680, %v677
    %v682 = vsel %vm447, %v681, %v671
    %v683 = vsel %vm449, %v682, %v673
    %v684 = vsel %vm451, %v683, %v675
    %v685 = vsel %vm453, %v684, %v677
    %v686 = vsel %vm431, %v665, %v685
    %v687 = vmul.f32 %v668, 0.0
    %v688 = vadd.f32 %v686, %v687
    %v689 = vadd.f32 %v688, %v669
    %v690 = vmax.f32 %v689, 0.0
    %v691 = vmul.f32 %v668, %v690
    %v693 = vrot.slane %v691, 7
    %v695 = vadd.f32 %v686, %v693
    %v697 = vrot.slane %v669, 7
    %v699 = vadd.f32 %v695, %v697
    %v700 = vmax.f32 %v699, 0.0
    %v702 = vrot.slane %v700, 1
    %v704 = vmul.f32 %v668, %v702
    %v706 = vrot.slane %v704, 6
    %v708 = vadd.f32 %v686, %v706
    %v709 = vrot.slane %v669, 6
    %v711 = vadd.f32 %v708, %v709
    %v712 = vmax.f32 %v711, 0.0
    %v714 = vrot.slane %v712, 2
    %v716 = vmul.f32 %v668, %v714
    %v718 = vrot.slane %v716, 5
    %v720 = vadd.f32 %v686, %v718
    %v721 = vrot.slane %v669, 5
    %v723 = vadd.f32 %v720, %v721
    %v724 = vmax.f32 %v723, 0.0
    %v726 = vrot.slane %v724, 3
    %v728 = vmul.f32 %v668, %v726
    %v730 = vrot.slane %v728, 4
    %v732 = vadd.f32 %v686, %v730
    %v733 = vrot.slane %v669, 4
    %v735 = vadd.f32 %v732, %v733
    %v736 = vmax.f32 %v735, 0.0
    %v738 = vrot.slane %v736, 4
    %v740 = vmul.f32 %v668, %v738
    %v742 = vrot.slane %v740, 3
    %v744 = vadd.f32 %v686, %v742
    %v745 = vrot.slane %v669, 3
    %v747 = vadd.f32 %v744, %v745
    %v748 = vmax.f32 %v747, 0.0
    %v750 = vrot.slane %v748, 5
    %v752 = vmul.f32 %v668, %v750
    %v754 = vrot.slane %v752, 2
    %v756 = vadd.f32 %v686, %v754
    %v757 = vrot.slane %v669, 2
    %v759 = vadd.f32 %v756, %v757
    %v760 = vmax.f32 %v759, 0.0
    %v762 = vrot.slane %v760, 6
    %v764 = vmul.f32 %v668, %v762
    %v766 = vrot.slane %v764, 1
    %v768 = vadd.f32 %v686, %v766
    %v769 = vrot.slane %v669, 1
    %v771 = vadd.f32 %v768, %v769
    %v772 = vmax.f32 %v771, 0.0
    %v773 = vsel %vm441, %v690, %v700
    %v774 = vsel %vm443, %v773, %v712
    %v775 = vsel %vm445, %v774, %v724
    %v776 = vsel %vm447, %v775, %v736
    %v777 = vsel %vm449, %v776, %v748
    %v778 = vsel %vm451, %v777, %v760
    %v779 = vsel %vm453, %v778, %v772
    %v781 = vrot.slane %v779, 7
    %v783 = vrot.slane %v779, 5
    %v785 = vrot.slane %v779, 3
    %v787 = vrot.slane %v779, 1
    %v789 = vsel %vm441, %v781, %v783
    %v790 = vsel %vm443, %v789, %v785
    %v791 = vsel %vm445, %v790, %v787
    %v792 = vsel %vm447, %v791, %v781
    %v793 = vsel %vm449, %v792, %v783
    %v794 = vsel %vm451, %v793, %v785
    %v795 = vsel %vm453, %v794, %v787
    %v796 = vsel %vm431, %v779, %v795
    %v797 = vld [vmem:[%s5] sm:$0xff]
    %v798 = vld [vmem:[%s5 + $0x8] sm:$0xff]
    %v799 = vld [vmem:[%s5 + $0x10] sm:$0xff]
    %v800 = vld [vmem:[%s5 + $0x18] sm:$0xff]
    %v801 = vld [vmem:[%s5 + $0x20] sm:$0xff]
    %v802 = vld [vmem:[%s5 + $0x28] sm:$0xff]
    %v803 = vld [vmem:[%s5 + $0x30] sm:$0xff]
    %v804 = vld [vmem:[%s5 + $0x38] sm:$0xff]
    %v805 = vld [vmem:[%s5 + $0x40] sm:$0xff]
    %v806 = vld [vmem:[%s5 + $0x48] sm:$0xff]
    %v807 = vld [vmem:[%s5 + $0x50] sm:$0xff]
    %v808 = vld [vmem:[%s5 + $0x58] sm:$0xff]
    %v809 = vld [vmem:[%s5 + $0x60] sm:$0xff]
    %v810 = vld [vmem:[%s5 + $0x68] sm:$0xff]
    %v811 = vld [vmem:[%s5 + $0x70] sm:$0xff]
    %v812 = vld [vmem:[%s5 + $0x78] sm:$0xff]
    %v813 = vld [vmem:[%s6] sm:$0x1]
    %v815 = vlaneseq
    %v816 = vshrl.u32 %v815, 7
    %v817 = vsub.s32 0, %v816
    %v818 = vrot.slane %v813, %v817
    %820 = vmatprep.subr.mxu0 0.0
    %821 = vmatpush1.msra.mxu0 %v797
    %822 = vmatprep.subr.mxu0 0.0
    %823 = vmatpush1.msra.mxu0 %v798
    %824 = vmatprep.subr.mxu0 0.0
    %825 = vmatpush1.msra.mxu0 %v799
    %826 = vmatprep.subr.mxu0 0.0
    %827 = vmatpush1.msra.mxu0 %v800
    %828 = vmatprep.subr.mxu0 0.0
    %829 = vmatpush1.msra.mxu0 %v801
    %830 = vmatprep.subr.mxu0 0.0
    %831 = vmatpush1.msra.mxu0 %v802
    %832 = vmatprep.subr.mxu0 0.0
    %833 = vmatpush1.msra.mxu0 %v803
    %834 = vmatprep.subr.mxu0 0.0
    %835 = vmatpush1.msra.mxu0 %v804
    %836 = vmatprep.subr.mxu0 0.0
    %837 = vmatpush1.msra.mxu0 %v805
    %838 = vmatprep.subr.mxu0 0.0
    %839 = vmatpush1.msra.mxu0 %v806
    %840 = vmatprep.subr.mxu0 0.0
    %841 = vmatpush1.msra.mxu0 %v807
    %842 = vmatprep.subr.mxu0 0.0
    %843 = vmatpush1.msra.mxu0 %v808
    %844 = vmatprep.subr.mxu0 0.0
    %845 = vmatpush1.msra.mxu0 %v809
    %846 = vmatprep.subr.mxu0 0.0
    %847 = vmatpush1.msra.mxu0 %v810
    %848 = vmatprep.subr.mxu0 0.0
    %849 = vmatpush1.msra.mxu0 %v811
    %850 = vmatprep.subr.mxu0 0.0
    %851 = vmatpush1.msra.mxu0 %v812
    %852 = vmatprep.subr.mxu0 0.0
    %853 = vmatpush1.msra.mxu0 0.0
    %854 = vmatprep.subr.mxu0 0.0
    %855 = vmatpush1.msra.mxu0 0.0
    %856 = vmatprep.subr.mxu0 0.0
    %857 = vmatpush1.msra.mxu0 0.0
    %858 = vmatprep.subr.mxu0 0.0
    %859 = vmatpush1.msra.mxu0 0.0
    %860 = vmatprep.subr.mxu0 0.0
    %861 = vmatpush1.msra.mxu0 0.0
    %862 = vmatprep.subr.mxu0 0.0
    %863 = vmatpush1.msra.mxu0 0.0
    %864 = vmatprep.subr.mxu0 0.0
    %865 = vmatpush1.msra.mxu0 0.0
    %866 = vmatprep.subr.mxu0 0.0
    %867 = vmatpush1.msra.mxu0 0.0
    %868 = vmatprep.subr.mxu0 0.0
    %869 = vmatpush1.msra.mxu0 0.0
    %870 = vmatprep.subr.mxu0 0.0
    %871 = vmatpush1.msra.mxu0 0.0
    %872 = vmatprep.subr.mxu0 0.0
    %873 = vmatpush1.msra.mxu0 0.0
    %874 = vmatprep.subr.mxu0 0.0
    %875 = vmatpush1.msra.mxu0 0.0
    %876 = vmatprep.subr.mxu0 0.0
    %877 = vmatpush1.msra.mxu0 0.0
    %878 = vmatprep.subr.mxu0 0.0
    %879 = vmatpush1.msra.mxu0 0.0
    %880 = vmatprep.subr.mxu0 0.0
    %881 = vmatpush1.msra.mxu0 0.0
    %882 = vmatprep.subr.mxu0 0.0
    %883 = vmatpush1.msra.mxu0 0.0
    %884 = vmatprep.mubr.f32.mxu0 0.0
    %885 = vmatmul.mubr.f32.gmra.mrb[0].mxu0 %v796
    %v886 = vpop.f32.mrb[0].mxu0
    %v887 = vadd.f32 %v818, %v886
    %v888 = vpop.f32.mrb[0].mxu0
    %889 = vdwg.mxu0
    %v890 = vmax.f32 %v887, 0.0
    %v891 = vld [vmem:[%s7] sm:$0xff]
    %v892 = vld [vmem:[%s7 + $0x8] sm:$0xff]
    %v893 = vld [vmem:[#allocation2] sm:$0x1]
    %v895 = vlaneseq
    %v896 = vshrl.u32 %v895, 7
    %v897 = vsub.s32 0, %v896
    %v898 = vrot.slane %v893, %v897
    %vm900 = vcmask 130048
    %v902 = vsel %vm900, %v890, 0
    %904 = vmatprep.subr.mxu0 0.0
    %905 = vmatpush1.msra.mxu0 %v891
    %906 = vmatprep.subr.mxu0 0.0
    %907 = vmatpush1.msra.mxu0 %v892
    %908 = vmatprep.subr.mxu0 0.0
    %909 = vmatpush1.msra.mxu0 0.0
    %910 = vmatprep.subr.mxu0 0.0
    %911 = vmatpush1.msra.mxu0 0.0
    %912 = vmatprep.subr.mxu0 0.0
    %913 = vmatpush1.msra.mxu0 0.0
    %914 = vmatprep.subr.mxu0 0.0
    %915 = vmatpush1.msra.mxu0 0.0
    %916 = vmatprep.subr.mxu0 0.0
    %917 = vmatpush1.msra.mxu0 0.0
    %918 = vmatprep.subr.mxu0 0.0
    %919 = vmatpush1.msra.mxu0 0.0
    %920 = vmatprep.subr.mxu0 0.0
    %921 = vmatpush1.msra.mxu0 0.0
    %922 = vmatprep.subr.mxu0 0.0
    %923 = vmatpush1.msra.mxu0 0.0
    %924 = vmatprep.subr.mxu0 0.0
    %925 = vmatpush1.msra.mxu0 0.0
    %926 = vmatprep.subr.mxu0 0.0
    %927 = vmatpush1.msra.mxu0 0.0
    %928 = vmatprep.subr.mxu0 0.0
    %929 = vmatpush1.msra.mxu0 0.0
    %930 = vmatprep.subr.mxu0 0.0
    %931 = vmatpush1.msra.mxu0 0.0
    %932 = vmatprep.subr.mxu0 0.0
    %933 = vmatpush1.msra.mxu0 0.0
    %934 = vmatprep.subr.mxu0 0.0
    %935 = vmatpush1.msra.mxu0 0.0
    %936 = vmatprep.subr.mxu0 0.0
    %937 = vmatpush1.msra.mxu0 0.0
    %938 = vmatprep.subr.mxu0 0.0
    %939 = vmatpush1.msra.mxu0 0.0
    %940 = vmatprep.subr.mxu0 0.0
    %941 = vmatpush1.msra.mxu0 0.0
    %942 = vmatprep.subr.mxu0 0.0
    %943 = vmatpush1.msra.mxu0 0.0
    %944 = vmatprep.subr.mxu0 0.0
    %945 = vmatpush1.msra.mxu0 0.0
    %946 = vmatprep.subr.mxu0 0.0
    %947 = vmatpush1.msra.mxu0 0.0
    %948 = vmatprep.subr.mxu0 0.0
    %949 = vmatpush1.msra.mxu0 0.0
    %950 = vmatprep.subr.mxu0 0.0
    %951 = vmatpush1.msra.mxu0 0.0
    %952 = vmatprep.subr.mxu0 0.0
    %953 = vmatpush1.msra.mxu0 0.0
    %954 = vmatprep.subr.mxu0 0.0
    %955 = vmatpush1.msra.mxu0 0.0
    %956 = vmatprep.subr.mxu0 0.0
    %957 = vmatpush1.msra.mxu0 0.0
    %958 = vmatprep.subr.mxu0 0.0
    %959 = vmatpush1.msra.mxu0 0.0
    %960 = vmatprep.subr.mxu0 0.0
    %961 = vmatpush1.msra.mxu0 0.0
    %962 = vmatprep.subr.mxu0 0.0
    %963 = vmatpush1.msra.mxu0 0.0
    %964 = vmatprep.subr.mxu0 0.0
    %965 = vmatpush1.msra.mxu0 0.0
    %966 = vmatprep.subr.mxu0 0.0
    %967 = vmatpush1.msra.mxu0 0.0
    %968 = vmatprep.mubr.f32.mxu0 0.0
    %969 = vmatmul.mubr.f32.gmra.mrb[0].mxu0 %v902
    %v970 = vpop.f32.mrb[0].mxu0
    %v971 = vadd.f32 %v898, %v970
    %v972 = vpop.f32.mrb[0].mxu0
    %973 = vdwg.mxu0
    %v974 = vxor.u32 %v971, 2147483648
    %v975 = vmul.f32 %v974, 1.442695
    %v976 = vpow.pop %v975
    %v977 = vadd.f32 %v976, 1.0
    %v978 = vrcp.pop %v977
    %v979 = vmul.f32 1.0, %v978
    %vm980 = vcmp.gt.f32.partialorder %v979, 0.5
    %v981 = vsel %vm980, 1.0, 0.0
    %vm982 = vcmask 7168
    %v983 = vsel %vm982, %v981, 0.0
    %984 = vadd.xlane.f32.xlu0 %v983
    %v985 = vpop.xlane.xlu0 %984
    %v986 = vrot.slane %v985, 4
    %v987 = vadd.f32 %v985, %v986
    %v988 = vrot.slane %v987, 2
    %v989 = vadd.f32 %v987, %v988
    %v990 = vrot.slane %v989, 1
    %v991 = vadd.f32 %v989, %v990
    %s992 = vtos %v991
    %v993 = vstv %s992
    %v994 = vlaneseq
    %v995 = vshrl.u32 %v994, 7
    %vm996 = vcmp.eq.s32.totalorder %v995, 0
    %v997 = vsel %vm996, 1, 0
    %v998 = vcvt.s32.f32 %v997
    %vm999 = vcmp.gt.f32.partialorder %v993, 0.0
    %v1000 = vsel %vm999, 1, 0
    %vm1001 = vcmp.eq.s32.totalorder %v1000, 1
    %v1002 = vsel %vm1001, %v981, %v998
    %v1003 = vld [vmem:[%s10] sm:$0xff]
    %v1004 = vld [vmem:[%s10 + $0x8] sm:$0xf]
    %v1005 = vld [vmem:[%s10 + $0xc] sm:$0xff]
    %v1006 = vld [vmem:[%s10 + $0x14] sm:$0xf]
    %v1007 = vld [vmem:[%s10 + $0x18] sm:$0xff]
    %v1008 = vld [vmem:[%s10 + $0x20] sm:$0xf]
    %v1009 = vld [vmem:[%s10 + $0x24] sm:$0xff]
    %v1010 = vld [vmem:[%s10 + $0x2c] sm:$0xf]
    %v1011 = vld [vmem:[%s10 + $0x30] sm:$0xff]
    %v1012 = vld [vmem:[%s10 + $0x38] sm:$0xf]
    %v1013 = vld [vmem:[%s10 + $0x3c] sm:$0xff]
    %v1014 = vld [vmem:[%s10 + $0x44] sm:$0xf]
    %v1015 = vld [vmem:[%s10 + $0x48] sm:$0xff]
    %v1016 = vld [vmem:[%s10 + $0x50] sm:$0xf]
    %v1017 = vld [vmem:[%s10 + $0x54] sm:$0xff]
    %v1018 = vld [vmem:[%s10 + $0x5c] sm:$0xf]
    %v1019 = vld [vmem:[%s10 + $0x60] sm:$0xff]
    %v1020 = vld [vmem:[%s10 + $0x68] sm:$0xf]
    %v1021 = vld [vmem:[%s10 + $0x6c] sm:$0xff]
    %v1022 = vld [vmem:[%s10 + $0x74] sm:$0xf]
    %v1023 = vld [vmem:[%s10 + $0x78] sm:$0xff]
    %v1024 = vld [vmem:[%s10 + $0x80] sm:$0xf]
    %v1025 = vld [vmem:[%s10 + $0x84] sm:$0xff]
    %v1026 = vld [vmem:[%s10 + $0x8c] sm:$0xf]
    %v1027 = vld [vmem:[%s10 + $0x90] sm:$0xff]
    %v1028 = vld [vmem:[%s10 + $0x98] sm:$0xf]
    %v1029 = vld [vmem:[%s10 + $0x9c] sm:$0xff]
    %v1030 = vld [vmem:[%s10 + $0xa4] sm:$0xf]
    %v1031 = vld [vmem:[%s10 + $0xa8] sm:$0xff]
    %v1032 = vld [vmem:[%s10 + $0xb0] sm:$0xf]
    %v1033 = vld [vmem:[%s10 + $0xb4] sm:$0xff]
    %v1034 = vld [vmem:[%s10 + $0xbc] sm:$0xf]
    %v1035 = vunpack.c.l.bf16 %v1003
    %v1036 = vunpack.c.h.bf16 %v1003
    %v1037 = vunpack.c.l.bf16 %v1004
    %v1038 = vunpack.c.l.bf16 %v1005
    %v1039 = vunpack.c.h.bf16 %v1005
    %v1040 = vunpack.c.l.bf16 %v1006
    %v1041 = vunpack.c.l.bf16 %v1007
    %v1042 = vunpack.c.h.bf16 %v1007
    %v1043 = vunpack.c.l.bf16 %v1008
    %v1044 = vunpack.c.l.bf16 %v1009
    %v1045 = vunpack.c.h.bf16 %v1009
    %v1046 = vunpack.c.l.bf16 %v1010
    %v1047 = vunpack.c.l.bf16 %v1011
    %v1048 = vunpack.c.h.bf16 %v1011
    %v1049 = vunpack.c.l.bf16 %v1012
    %v1050 = vunpack.c.l.bf16 %v1013
    %v1051 = vunpack.c.h.bf16 %v1013
    %v1052 = vunpack.c.l.bf16 %v1014
    %v1053 = vunpack.c.l.bf16 %v1015
    %v1054 = vunpack.c.h.bf16 %v1015
    %v1055 = vunpack.c.l.bf16 %v1016
    %v1056 = vunpack.c.l.bf16 %v1017
    %v1057 = vunpack.c.h.bf16 %v1017
    %v1058 = vunpack.c.l.bf16 %v1018
    %v1059 = vunpack.c.l.bf16 %v1019
    %v1060 = vunpack.c.h.bf16 %v1019
    %v1061 = vunpack.c.l.bf16 %v1020
    %v1062 = vunpack.c.l.bf16 %v1021
    %v1063 = vunpack.c.h.bf16 %v1021
    %v1064 = vunpack.c.l.bf16 %v1022
    %v1065 = vunpack.c.l.bf16 %v1023
    %v1066 = vunpack.c.h.bf16 %v1023
    %v1067 = vunpack.c.l.bf16 %v1024
    %v1068 = vunpack.c.l.bf16 %v1025
    %v1069 = vunpack.c.h.bf16 %v1025
    %v1070 = vunpack.c.l.bf16 %v1026
    %v1071 = vunpack.c.l.bf16 %v1027
    %v1072 = vunpack.c.h.bf16 %v1027
    %v1073 = vunpack.c.l.bf16 %v1028
    %v1074 = vunpack.c.l.bf16 %v1029
    %v1075 = vunpack.c.h.bf16 %v1029
    %v1076 = vunpack.c.l.bf16 %v1030
    %v1077 = vunpack.c.l.bf16 %v1031
    %v1078 = vunpack.c.h.bf16 %v1031
    %v1079 = vunpack.c.l.bf16 %v1032
    %v1080 = vunpack.c.l.bf16 %v1033
    %v1081 = vunpack.c.h.bf16 %v1033
    %v1082 = vunpack.c.l.bf16 %v1034
    %v1083 = vld [vmem:[%s11] sm:$0x1]
    %1084 = vmatprep.subr.mxu0 %v1036
    %1085 = vmatpush1.msra.mxu0 %v1035
    %1086 = vmatprep.subr.mxu0 %v1039
    %1087 = vmatpush1.msra.mxu0 %v1038
    %1088 = vmatprep.subr.mxu0 %v1042
    %1089 = vmatpush1.msra.mxu0 %v1041
    %1090 = vmatprep.subr.mxu0 %v1045
    %1091 = vmatpush1.msra.mxu0 %v1044
    %1092 = vmatprep.subr.mxu0 %v1048
    %1093 = vmatpush1.msra.mxu0 %v1047
    %1094 = vmatprep.subr.mxu0 %v1051
    %1095 = vmatpush1.msra.mxu0 %v1050
    %1096 = vmatprep.subr.mxu0 %v1054
    %1097 = vmatpush1.msra.mxu0 %v1053
    %1098 = vmatprep.subr.mxu0 %v1057
    %1099 = vmatpush1.msra.mxu0 %v1056
    %1100 = vmatprep.subr.mxu0 %v1060
    %1101 = vmatpush1.msra.mxu0 %v1059
    %1102 = vmatprep.subr.mxu0 %v1063
    %1103 = vmatpush1.msra.mxu0 %v1062
    %1104 = vmatprep.subr.mxu0 %v1066
    %1105 = vmatpush1.msra.mxu0 %v1065
    %1106 = vmatprep.subr.mxu0 %v1069
    %1107 = vmatpush1.msra.mxu0 %v1068
    %1108 = vmatprep.subr.mxu0 %v1072
    %1109 = vmatpush1.msra.mxu0 %v1071
    %1110 = vmatprep.subr.mxu0 %v1075
    %1111 = vmatpush1.msra.mxu0 %v1074
    %1112 = vmatprep.subr.mxu0 %v1078
    %1113 = vmatpush1.msra.mxu0 %v1077
    %1114 = vmatprep.subr.mxu0 %v1081
    %1115 = vmatpush1.msra.mxu0 %v1080
    %1116 = vmatprep.subr.mxu0 0.0
    %1117 = vmatpush1.msra.mxu0 0.0
    %1118 = vmatprep.subr.mxu0 0.0
    %1119 = vmatpush1.msra.mxu0 0.0
    %1120 = vmatprep.subr.mxu0 0.0
    %1121 = vmatpush1.msra.mxu0 0.0
    %1122 = vmatprep.subr.mxu0 0.0
    %1123 = vmatpush1.msra.mxu0 0.0
    %1124 = vmatprep.subr.mxu0 0.0
    %1125 = vmatpush1.msra.mxu0 0.0
    %1126 = vmatprep.subr.mxu0 0.0
    %1127 = vmatpush1.msra.mxu0 0.0
    %1128 = vmatprep.subr.mxu0 0.0
    %1129 = vmatpush1.msra.mxu0 0.0
    %1130 = vmatprep.subr.mxu0 0.0
    %1131 = vmatpush1.msra.mxu0 0.0
    %1132 = vmatprep.subr.mxu0 0.0
    %1133 = vmatpush1.msra.mxu0 0.0
    %1134 = vmatprep.subr.mxu0 0.0
    %1135 = vmatpush1.msra.mxu0 0.0
    %1136 = vmatprep.subr.mxu0 0.0
    %1137 = vmatpush1.msra.mxu0 0.0
    %1138 = vmatprep.subr.mxu0 0.0
    %1139 = vmatpush1.msra.mxu0 0.0
    %1140 = vmatprep.subr.mxu0 0.0
    %1141 = vmatpush1.msra.mxu0 0.0
    %1142 = vmatprep.subr.mxu0 0.0
    %1143 = vmatpush1.msra.mxu0 0.0
    %1144 = vmatprep.subr.mxu0 0.0
    %1145 = vmatpush1.msra.mxu0 0.0
    %1146 = vmatprep.subr.mxu0 0.0
    %1147 = vmatpush1.msra.mxu0 0.0
    %1148 = vmatprep.mubr.f32.mxu0 0.0
    %1149 = vmatmul.mubr.f32.gmra.mrb[0].mxu0 0.0
    %v1150 = vpop.f32.mrb[0].mxu0
    %v1151 = vadd.f32 0.0, %v1150
    %v1152 = vpop.f32.mrb[0].mxu0
    %v1153 = vadd.f32 0.0, %v1152
    %1154 = vdwg.mxu0
    %1155 = vmatprep.subr.mxu0 0.0
    %1156 = vmatpush1.msra.mxu0 %v1037
    %1157 = vmatprep.subr.mxu0 0.0
    %1158 = vmatpush1.msra.mxu0 %v1040
    %1159 = vmatprep.subr.mxu0 0.0
    %1160 = vmatpush1.msra.mxu0 %v1043
    %1161 = vmatprep.subr.mxu0 0.0
    %1162 = vmatpush1.msra.mxu0 %v1046
    %1163 = vmatprep.subr.mxu0 0.0
    %1164 = vmatpush1.msra.mxu0 %v1049
    %1165 = vmatprep.subr.mxu0 0.0
    %1166 = vmatpush1.msra.mxu0 %v1052
    %1167 = vmatprep.subr.mxu0 0.0
    %1168 = vmatpush1.msra.mxu0 %v1055
    %1169 = vmatprep.subr.mxu0 0.0
    %1170 = vmatpush1.msra.mxu0 %v1058
    %1171 = vmatprep.subr.mxu0 0.0
    %1172 = vmatpush1.msra.mxu0 %v1061
    %1173 = vmatprep.subr.mxu0 0.0
    %1174 = vmatpush1.msra.mxu0 %v1064
    %1175 = vmatprep.subr.mxu0 0.0
    %1176 = vmatpush1.msra.mxu0 %v1067
    %1177 = vmatprep.subr.mxu0 0.0
    %1178 = vmatpush1.msra.mxu0 %v1070
    %1179 = vmatprep.subr.mxu0 0.0
    %1180 = vmatpush1.msra.mxu0 %v1073
    %1181 = vmatprep.subr.mxu0 0.0
    %1182 = vmatpush1.msra.mxu0 %v1076
    %1183 = vmatprep.subr.mxu0 0.0
    %1184 = vmatpush1.msra.mxu0 %v1079
    %1185 = vmatprep.subr.mxu0 0.0
    %1186 = vmatpush1.msra.mxu0 %v1082
    %1187 = vmatprep.subr.mxu0 0.0
    %1188 = vmatpush1.msra.mxu0 0.0
    %1189 = vmatprep.subr.mxu0 0.0
    %1190 = vmatpush1.msra.mxu0 0.0
    %1191 = vmatprep.subr.mxu0 0.0
    %1192 = vmatpush1.msra.mxu0 0.0
    %1193 = vmatprep.subr.mxu0 0.0
    %1194 = vmatpush1.msra.mxu0 0.0
    %1195 = vmatprep.subr.mxu0 0.0
    %1196 = vmatpush1.msra.mxu0 0.0
    %1197 = vmatprep.subr.mxu0 0.0
    %1198 = vmatpush1.msra.mxu0 0.0
    %1199 = vmatprep.subr.mxu0 0.0
    %1200 = vmatpush1.msra.mxu0 0.0
    %1201 = vmatprep.subr.mxu0 0.0
    %1202 = vmatpush1.msra.mxu0 0.0
    %1203 = vmatprep.subr.mxu0 0.0
    %1204 = vmatpush1.msra.mxu0 0.0
    %1205 = vmatprep.subr.mxu0 0.0
    %1206 = vmatpush1.msra.mxu0 0.0
    %1207 = vmatprep.subr.mxu0 0.0
    %1208 = vmatpush1.msra.mxu0 0.0
    %1209 = vmatprep.subr.mxu0 0.0
    %1210 = vmatpush1.msra.mxu0 0.0
    %1211 = vmatprep.subr.mxu0 0.0
    %1212 = vmatpush1.msra.mxu0 0.0
    %1213 = vmatprep.subr.mxu0 0.0
    %1214 = vmatpush1.msra.mxu0 0.0
    %1215 = vmatprep.subr.mxu0 0.0
    %1216 = vmatpush1.msra.mxu0 0.0
    %1217 = vmatprep.subr.mxu0 0.0
    %1218 = vmatpush1.msra.mxu0 0.0
    %1219 = vmatprep.mubr.f32.mxu0 0.0
    %1220 = vmatmul.mubr.f32.gmra.mrb[0].mxu0 0.0
    %v1221 = vpop.f32.mrb[0].mxu0
    %v1222 = vadd.f32 0.0, %v1221
    %v1223 = vpop.f32.mrb[0].mxu0
    %1224 = vdwg.mxu0
    %v1225 = vadd.f32 %v426, %v1151
    %v1226 = vadd.f32 %v427, %v1153
    %v1227 = vxor.u32 %v1225, 2147483648
    %v1228 = vxor.u32 %v1226, 2147483648
    %v1229 = vmul.f32 %v1227, 1.442695
    %v1230 = vpow.pop %v1229
    %v1231 = vmul.f32 %v1228, 1.442695
    %v1232 = vpow.pop %v1231
    %v1233 = vadd.f32 %v1230, 1.0
    %v1234 = vadd.f32 %v1232, 1.0
    %v1235 = vrcp.pop %v1233
    %v1236 = vmul.f32 1.0, %v1235
    %v1237 = vrcp.pop %v1234
    %v1238 = vmul.f32 1.0, %v1237
    %v1239 = vadd.f32 %v1222, %v1083
    %v1240 = vmul.f32 %v1236, %v1239
    %v1241 = vadd.f32 %v428, %v1240
    %v1242 = vtanh.pop %v1241
    %v1243 = vsub.f32 1.0, %v1238
    %v1244 = vmul.f32 %v1243, %v1242
    %v1245 = vmul.f32 %v1238, 0.0
    %v1246 = vadd.f32 %v1244, %v1245
    %1248 = vset.pattern.permute.xlu0 0
    %1249 = vperm.xlu0 %1248, %v1002
    %v1250 = vpop.permute.xlu0 %1249
    %vm1252 = vcmp.gt.f32.partialorder %v1250, 0.5
    %v1253 = vsel %vm1252, %v1246, 0.0
    %1254 = vmatprep.subr.mxu0 %v1036
    %1255 = vmatpush1.msra.mxu0 %v1035
    %1256 = vmatprep.subr.mxu0 %v1039
    %1257 = vmatpush1.msra.mxu0 %v1038
    %1258 = vmatprep.subr.mxu0 %v1042
    %1259 = vmatpush1.msra.mxu0 %v1041
    %1260 = vmatprep.subr.mxu0 %v1045
    %1261 = vmatpush1.msra.mxu0 %v1044
    %1262 = vmatprep.subr.mxu0 %v1048
    %1263 = vmatpush1.msra.mxu0 %v1047
    %1264 = vmatprep.subr.mxu0 %v1051
    %1265 = vmatpush1.msra.mxu0 %v1050
    %1266 = vmatprep.subr.mxu0 %v1054
    %1267 = vmatpush1.msra.mxu0 %v1053
    %1268 = vmatprep.subr.mxu0 %v1057
    %1269 = vmatpush1.msra.mxu0 %v1056
    %1270 = vmatprep.subr.mxu0 %v1060
    %1271 = vmatpush1.msra.mxu0 %v1059
    %1272 = vmatprep.subr.mxu0 %v1063
    %1273 = vmatpush1.msra.mxu0 %v1062
    %1274 = vmatprep.subr.mxu0 %v1066
    %1275 = vmatpush1.msra.mxu0 %v1065
    %1276 = vmatprep.subr.mxu0 %v1069
    %1277 = vmatpush1.msra.mxu0 %v1068
    %1278 = vmatprep.subr.mxu0 %v1072
    %1279 = vmatpush1.msra.mxu0 %v1071
    %1280 = vmatprep.subr.mxu0 %v1075
    %1281 = vmatpush1.msra.mxu0 %v1074
    %1282 = vmatprep.subr.mxu0 %v1078
    %1283 = vmatpush1.msra.mxu0 %v1077
    %1284 = vmatprep.subr.mxu0 %v1081
    %1285 = vmatpush1.msra.mxu0 %v1080
    %1286 = vmatprep.subr.mxu0 0.0
    %1287 = vmatpush1.msra.mxu0 0.0
    %1288 = vmatprep.subr.mxu0 0.0
    %1289 = vmatpush1.msra.mxu0 0.0
    %1290 = vmatprep.subr.mxu0 0.0
    %1291 = vmatpush1.msra.mxu0 0.0
    %1292 = vmatprep.subr.mxu0 0.0
    %1293 = vmatpush1.msra.mxu0 0.0
    %1294 = vmatprep.subr.mxu0 0.0
    %1295 = vmatpush1.msra.mxu0 0.0
    %1296 = vmatprep.subr.mxu0 0.0
    %1297 = vmatpush1.msra.mxu0 0.0
    %1298 = vmatprep.subr.mxu0 0.0
    %1299 = vmatpush1.msra.mxu0 0.0
    %1300 = vmatprep.subr.mxu0 0.0
    %1301 = vmatpush1.msra.mxu0 0.0
    %1302 = vmatprep.subr.mxu0 0.0
    %1303 = vmatpush1.msra.mxu0 0.0
    %1304 = vmatprep.subr.mxu0 0.0
    %1305 = vmatpush1.msra.mxu0 0.0
    %1306 = vmatprep.subr.mxu0 0.0
    %1307 = vmatpush1.msra.mxu0 0.0
    %1308 = vmatprep.subr.mxu0 0.0
    %1309 = vmatpush1.msra.mxu0 0.0
    %1310 = vmatprep.subr.mxu0 0.0
    %1311 = vmatpush1.msra.mxu0 0.0
    %1312 = vmatprep.subr.mxu0 0.0
    %1313 = vmatpush1.msra.mxu0 0.0
    %1314 = vmatprep.subr.mxu0 0.0
    %1315 = vmatpush1.msra.mxu0 0.0
    %1316 = vmatprep.subr.mxu0 0.0
    %1317 = vmatpush1.msra.mxu0 0.0
    %1318 = vmatprep.mubr.f32.mxu0 0.0
    %1319 = vmatmul.mubr.f32.gmra.mrb[0].mxu0 %v1253
    %v1320 = vpop.f32.mrb[0].mxu0
    %v1321 = vadd.f32 0.0, %v1320
    %v1322 = vpop.f32.mrb[0].mxu0
    %v1323 = vadd.f32 0.0, %v1322
    %1324 = vdwg.mxu0
    %1325 = vmatprep.subr.mxu0 0.0
    %1326 = vmatpush1.msra.mxu0 %v1037
    %1327 = vmatprep.subr.mxu0 0.0
    %1328 = vmatpush1.msra.mxu0 %v1040
    %1329 = vmatprep.subr.mxu0 0.0
    %1330 = vmatpush1.msra.mxu0 %v1043
    %1331 = vmatprep.subr.mxu0 0.0
    %1332 = vmatpush1.msra.mxu0 %v1046
    %1333 = vmatprep.subr.mxu0 0.0
    %1334 = vmatpush1.msra.mxu0 %v1049
    %1335 = vmatprep.subr.mxu0 0.0
    %1336 = vmatpush1.msra.mxu0 %v1052
    %1337 = vmatprep.subr.mxu0 0.0
    %1338 = vmatpush1.msra.mxu0 %v1055
    %1339 = vmatprep.subr.mxu0 0.0
    %1340 = vmatpush1.msra.mxu0 %v1058
    %1341 = vmatprep.subr.mxu0 0.0
    %1342 = vmatpush1.msra.mxu0 %v1061
    %1343 = vmatprep.subr.mxu0 0.0
    %1344 = vmatpush1.msra.mxu0 %v1064
    %1345 = vmatprep.subr.mxu0 0.0
    %1346 = vmatpush1.msra.mxu0 %v1067
    %1347 = vmatprep.subr.mxu0 0.0
    %1348 = vmatpush1.msra.mxu0 %v1070
    %1349 = vmatprep.subr.mxu0 0.0
    %1350 = vmatpush1.msra.mxu0 %v1073
    %1351 = vmatprep.subr.mxu0 0.0
    %1352 = vmatpush1.msra.mxu0 %v1076
    %1353 = vmatprep.subr.mxu0 0.0
    %1354 = vmatpush1.msra.mxu0 %v1079
    %1355 = vmatprep.subr.mxu0 0.0
    %1356 = vmatpush1.msra.mxu0 %v1082
    %1357 = vmatprep.subr.mxu0 0.0
    %1358 = vmatpush1.msra.mxu0 0.0
    %1359 = vmatprep.subr.mxu0 0.0
    %1360 = vmatpush1.msra.mxu0 0.0
    %1361 = vmatprep.subr.mxu0 0.0
    %1362 = vmatpush1.msra.mxu0 0.0
    %1363 = vmatprep.subr.mxu0 0.0
    %1364 = vmatpush1.msra.mxu0 0.0
    %1365 = vmatprep.subr.mxu0 0.0
    %1366 = vmatpush1.msra.mxu0 0.0
    %1367 = vmatprep.subr.mxu0 0.0
    %1368 = vmatpush1.msra.mxu0 0.0
    %1369 = vmatprep.subr.mxu0 0.0
    %1370 = vmatpush1.msra.mxu0 0.0
    %1371 = vmatprep.subr.mxu0 0.0
    %1372 = vmatpush1.msra.mxu0 0.0
    %1373 = vmatprep.subr.mxu0 0.0
    %1374 = vmatpush1.msra.mxu0 0.0
    %1375 = vmatprep.subr.mxu0 0.0
    %1376 = vmatpush1.msra.mxu0 0.0
    %1377 = vmatprep.subr.mxu0 0.0
    %1378 = vmatpush1.msra.mxu0 0.0
    %1379 = vmatprep.subr.mxu0 0.0
    %1380 = vmatpush1.msra.mxu0 0.0
    %1381 = vmatprep.subr.mxu0 0.0
    %1382 = vmatpush1.msra.mxu0 0.0
    %1383 = vmatprep.subr.mxu0 0.0
    %1384 = vmatpush1.msra.mxu0 0.0
    %1385 = vmatprep.subr.mxu0 0.0
    %1386 = vmatpush1.msra.mxu0 0.0
    %1387 = vmatprep.subr.mxu0 0.0
    %1388 = vmatpush1.msra.mxu0 0.0
    %1389 = vmatprep.mubr.f32.mxu0 0.0
    %1390 = vmatmul.mubr.f32.gmra.mrb[0].mxu0 %v1253
    %v1391 = vpop.f32.mrb[0].mxu0
    %v1392 = vadd.f32 0.0, %v1391
    %v1393 = vpop.f32.mrb[0].mxu0
    %1394 = vdwg.mxu0
    %v1397 = vrot.slane %v1321, 7
    %v1398 = vrot.slane %v1323, 7
    %v1401 = vadd.f32 %v426, %v1397
    %v1402 = vadd.f32 %v427, %v1398
    %v1403 = vxor.u32 %v1401, 2147483648
    %v1404 = vxor.u32 %v1402, 2147483648
    %v1405 = vmul.f32 %v1403, 1.442695
    %v1406 = vpow.pop %v1405
    %v1407 = vmul.f32 %v1404, 1.442695
    %v1408 = vpow.pop %v1407
    %v1409 = vadd.f32 %v1406, 1.0
    %v1410 = vadd.f32 %v1408, 1.0
    %v1411 = vrcp.pop %v1409
    %v1412 = vmul.f32 1.0, %v1411
    %v1413 = vrcp.pop %v1410
    %v1414 = vmul.f32 1.0, %v1413
    %v1415 = vadd.f32 %v1392, %v1083
    %v1417 = vrot.slane %v1415, 7
    %v1419 = vmul.f32 %v1412, %v1417
    %v1420 = vadd.f32 %v428, %v1419
    %v1421 = vtanh.pop %v1420
    %v1422 = vsub.f32 1.0, %v1414
    %v1423 = vmul.f32 %v1422, %v1421
    %v1425 = vrot.slane %v1253, 7
    %v1427 = vmul.f32 %v1414, %v1425
    %v1428 = vadd.f32 %v1423, %v1427
    %v1429 = vsel %vm1252, %v1428, %v1425
    %v1431 = vrot.slane %v1429, 1
    %1433 = vmatprep.subr.mxu0 %v1036
    %1434 = vmatpush1.msra.mxu0 %v1035
    %1435 = vmatprep.subr.mxu0 %v1039
    %1436 = vmatpush1.msra.mxu0 %v1038
    %1437 = vmatprep.subr.mxu0 %v1042
    %1438 = vmatpush1.msra.mxu0 %v1041
    %1439 = vmatprep.subr.mxu0 %v1045
    %1440 = vmatpush1.msra.mxu0 %v1044
    %1441 = vmatprep.subr.mxu0 %v1048
    %1442 = vmatpush1.msra.mxu0 %v1047
    %1443 = vmatprep.subr.mxu0 %v1051
    %1444 = vmatpush1.msra.mxu0 %v1050
    %1445 = vmatprep.subr.mxu0 %v1054
    %1446 = vmatpush1.msra.mxu0 %v1053
    %1447 = vmatprep.subr.mxu0 %v1057
    %1448 = vmatpush1.msra.mxu0 %v1056
    %1449 = vmatprep.subr.mxu0 %v1060
    %1450 = vmatpush1.msra.mxu0 %v1059
    %1451 = vmatprep.subr.mxu0 %v1063
    %1452 = vmatpush1.msra.mxu0 %v1062
    %1453 = vmatprep.subr.mxu0 %v1066
    %1454 = vmatpush1.msra.mxu0 %v1065
    %1455 = vmatprep.subr.mxu0 %v1069
    %1456 = vmatpush1.msra.mxu0 %v1068
    %1457 = vmatprep.subr.mxu0 %v1072
    %1458 = vmatpush1.msra.mxu0 %v1071
    %1459 = vmatprep.subr.mxu0 %v1075
    %1460 = vmatpush1.msra.mxu0 %v1074
    %1461 = vmatprep.subr.mxu0 %v1078
    %1462 = vmatpush1.msra.mxu0 %v1077
    %1463 = vmatprep.subr.mxu0 %v1081
    %1464 = vmatpush1.msra.mxu0 %v1080
    %1465 = vmatprep.subr.mxu0 0.0
    %1466 = vmatpush1.msra.mxu0 0.0
    %1467 = vmatprep.subr.mxu0 0.0
    %1468 = vmatpush1.msra.mxu0 0.0
    %1469 = vmatprep.subr.mxu0 0.0
    %1470 = vmatpush1.msra.mxu0 0.0
    %1471 = vmatprep.subr.mxu0 0.0
    %1472 = vmatpush1.msra.mxu0 0.0
    %1473 = vmatprep.subr.mxu0 0.0
    %1474 = vmatpush1.msra.mxu0 0.0
    %1475 = vmatprep.subr.mxu0 0.0
    %1476 = vmatpush1.msra.mxu0 0.0
    %1477 = vmatprep.subr.mxu0 0.0
    %1478 = vmatpush1.msra.mxu0 0.0
    %1479 = vmatprep.subr.mxu0 0.0
    %1480 = vmatpush1.msra.mxu0 0.0
    %1481 = vmatprep.subr.mxu0 0.0
    %1482 = vmatpush1.msra.mxu0 0.0
    %1483 = vmatprep.subr.mxu0 0.0
    %1484 = vmatpush1.msra.mxu0 0.0
    %1485 = vmatprep.subr.mxu0 0.0
    %1486 = vmatpush1.msra.mxu0 0.0
    %1487 = vmatprep.subr.mxu0 0.0
    %1488 = vmatpush1.msra.mxu0 0.0
    %1489 = vmatprep.subr.mxu0 0.0
    %1490 = vmatpush1.msra.mxu0 0.0
    %1491 = vmatprep.subr.mxu0 0.0
    %1492 = vmatpush1.msra.mxu0 0.0
    %1493 = vmatprep.subr.mxu0 0.0
    %1494 = vmatpush1.msra.mxu0 0.0
    %1495 = vmatprep.subr.mxu0 0.0
    %1496 = vmatpush1.msra.mxu0 0.0
    %1497 = vmatprep.mubr.f32.mxu0 0.0
    %1498 = vmatmul.mubr.f32.gmra.mrb[0].mxu0 %v1431
    %v1499 = vpop.f32.mrb[0].mxu0
    %v1500 = vadd.f32 0.0, %v1499
    %v1501 = vpop.f32.mrb[0].mxu0
    %v1502 = vadd.f32 0.0, %v1501
    %1503 = vdwg.mxu0
    %1504 = vmatprep.subr.mxu0 0.0
    %1505 = vmatpush1.msra.mxu0 %v1037
    %1506 = vmatprep.subr.mxu0 0.0
    %1507 = vmatpush1.msra.mxu0 %v1040
    %1508 = vmatprep.subr.mxu0 0.0
    %1509 = vmatpush1.msra.mxu0 %v1043
    %1510 = vmatprep.subr.mxu0 0.0
    %1511 = vmatpush1.msra.mxu0 %v1046
    %1512 = vmatprep.subr.mxu0 0.0
    %1513 = vmatpush1.msra.mxu0 %v1049
    %1514 = vmatprep.subr.mxu0 0.0
    %1515 = vmatpush1.msra.mxu0 %v1052
    %1516 = vmatprep.subr.mxu0 0.0
    %1517 = vmatpush1.msra.mxu0 %v1055
    %1518 = vmatprep.subr.mxu0 0.0
    %1519 = vmatpush1.msra.mxu0 %v1058
    %1520 = vmatprep.subr.mxu0 0.0
    %1521 = vmatpush1.msra.mxu0 %v1061
    %1522 = vmatprep.subr.mxu0 0.0
    %1523 = vmatpush1.msra.mxu0 %v1064
    %1524 = vmatprep.subr.mxu0 0.0
    %1525 = vmatpush1.msra.mxu0 %v1067
    %1526 = vmatprep.subr.mxu0 0.0
    %1527 = vmatpush1.msra.mxu0 %v1070
    %1528 = vmatprep.subr.mxu0 0.0
    %1529 = vmatpush1.msra.mxu0 %v1073
    %1530 = vmatprep.subr.mxu0 0.0
    %1531 = vmatpush1.msra.mxu0 %v1076
    %1532 = vmatprep.subr.mxu0 0.0
    %1533 = vmatpush1.msra.mxu0 %v1079
    %1534 = vmatprep.subr.mxu0 0.0
    %1535 = vmatpush1.msra.mxu0 %v1082
    %1536 = vmatprep.subr.mxu0 0.0
    %1537 = vmatpush1.msra.mxu0 0.0
    %1538 = vmatprep.subr.mxu0 0.0
    %1539 = vmatpush1.msra.mxu0 0.0
    %1540 = vmatprep.subr.mxu0 0.0
    %1541 = vmatpush1.msra.mxu0 0.0
    %1542 = vmatprep.subr.mxu0 0.0
    %1543 = vmatpush1.msra.mxu0 0.0
    %1544 = vmatprep.subr.mxu0 0.0
    %1545 = vmatpush1.msra.mxu0 0.0
    %1546 = vmatprep.subr.mxu0 0.0
    %1547 = vmatpush1.msra.mxu0 0.0
    %1548 = vmatprep.subr.mxu0 0.0
    %1549 = vmatpush1.msra.mxu0 0.0
    %1550 = vmatprep.subr.mxu0 0.0
    %1551 = vmatpush1.msra.mxu0 0.0
    %1552 = vmatprep.subr.mxu0 0.0
    %1553 = vmatpush1.msra.mxu0 0.0
    %1554 = vmatprep.subr.mxu0 0.0
    %1555 = vmatpush1.msra.mxu0 0.0
    %1556 = vmatprep.subr.mxu0 0.0
    %1557 = vmatpush1.msra.mxu0 0.0
    %1558 = vmatprep.subr.mxu0 0.0
    %1559 = vmatpush1.msra.mxu0 0.0
    %1560 = vmatprep.subr.mxu0 0.0
    %1561 = vmatpush1.msra.mxu0 0.0
    %1562 = vmatprep.subr.mxu0 0.0
    %1563 = vmatpush1.msra.mxu0 0.0
    %1564 = vmatprep.subr.mxu0 0.0
    %1565 = vmatpush1.msra.mxu0 0.0
    %1566 = vmatprep.subr.mxu0 0.0
    %1567 = vmatpush1.msra.mxu0 0.0
    %1568 = vmatprep.mubr.f32.mxu0 0.0
    %1569 = vmatmul.mubr.f32.gmra.mrb[0].mxu0 %v1431
    %v1570 = vpop.f32.mrb[0].mxu0
    %v1571 = vadd.f32 0.0, %v1570
    %v1572 = vpop.f32.mrb[0].mxu0
    %1573 = vdwg.mxu0
    %v1576 = vrot.slane %v1500, 6
    %v1577 = vrot.slane %v1502, 6
    %v1580 = vadd.f32 %v426, %v1576
    %v1581 = vadd.f32 %v427, %v1577
    %v1582 = vxor.u32 %v1580, 2147483648
    %v1583 = vxor.u32 %v1581, 2147483648
    %v1584 = vmul.f32 %v1582, 1.442695
    %v1585 = vpow.pop %v1584
    %v1586 = vmul.f32 %v1583, 1.442695
    %v1587 = vpow.pop %v1586
    %v1588 = vadd.f32 %v1585, 1.0
    %v1589 = vadd.f32 %v1587, 1.0
    %v1590 = vrcp.pop %v1588
    %v1591 = vmul.f32 1.0, %v1590
    %v1592 = vrcp.pop %v1589
    %v1593 = vmul.f32 1.0, %v1592
    %v1594 = vadd.f32 %v1571, %v1083
    %v1596 = vrot.slane %v1594, 6
    %v1598 = vmul.f32 %v1591, %v1596
    %v1599 = vadd.f32 %v428, %v1598
    %v1600 = vtanh.pop %v1599
    %v1601 = vsub.f32 1.0, %v1593
    %v1602 = vmul.f32 %v1601, %v1600
    %v1603 = vrot.slane %v1429, 7
    %v1605 = vmul.f32 %v1593, %v1603
    %v1606 = vadd.f32 %v1602, %v1605
    %v1607 = vsel %vm1252, %v1606, %v1603
    %v1609 = vrot.slane %v1607, 2
    %1611 = vmatprep.subr.mxu0 %v1036
    %1612 = vmatpush1.msra.mxu0 %v1035
    %1613 = vmatprep.subr.mxu0 %v1039
    %1614 = vmatpush1.msra.mxu0 %v1038
    %1615 = vmatprep.subr.mxu0 %v1042
    %1616 = vmatpush1.msra.mxu0 %v1041
    %1617 = vmatprep.subr.mxu0 %v1045
    %1618 = vmatpush1.msra.mxu0 %v1044
    %1619 = vmatprep.subr.mxu0 %v1048
    %1620 = vmatpush1.msra.mxu0 %v1047
    %1621 = vmatprep.subr.mxu0 %v1051
    %1622 = vmatpush1.msra.mxu0 %v1050
    %1623 = vmatprep.subr.mxu0 %v1054
    %1624 = vmatpush1.msra.mxu0 %v1053
    %1625 = vmatprep.subr.mxu0 %v1057
    %1626 = vmatpush1.msra.mxu0 %v1056
    %1627 = vmatprep.subr.mxu0 %v1060
    %1628 = vmatpush1.msra.mxu0 %v1059
    %1629 = vmatprep.subr.mxu0 %v1063
    %1630 = vmatpush1.msra.mxu0 %v1062
    %1631 = vmatprep.subr.mxu0 %v1066
    %1632 = vmatpush1.msra.mxu0 %v1065
    %1633 = vmatprep.subr.mxu0 %v1069
    %1634 = vmatpush1.msra.mxu0 %v1068
    %1635 = vmatprep.subr.mxu0 %v1072
    %1636 = vmatpush1.msra.mxu0 %v1071
    %1637 = vmatprep.subr.mxu0 %v1075
    %1638 = vmatpush1.msra.mxu0 %v1074
    %1639 = vmatprep.subr.mxu0 %v1078
    %1640 = vmatpush1.msra.mxu0 %v1077
    %1641 = vmatprep.subr.mxu0 %v1081
    %1642 = vmatpush1.msra.mxu0 %v1080
    %1643 = vmatprep.subr.mxu0 0.0
    %1644 = vmatpush1.msra.mxu0 0.0
    %1645 = vmatprep.subr.mxu0 0.0
    %1646 = vmatpush1.msra.mxu0 0.0
    %1647 = vmatprep.subr.mxu0 0.0
    %1648 = vmatpush1.msra.mxu0 0.0
    %1649 = vmatprep.subr.mxu0 0.0
    %1650 = vmatpush1.msra.mxu0 0.0
    %1651 = vmatprep.subr.mxu0 0.0
    %1652 = vmatpush1.msra.mxu0 0.0
    %1653 = vmatprep.subr.mxu0 0.0
    %1654 = vmatpush1.msra.mxu0 0.0
    %1655 = vmatprep.subr.mxu0 0.0
    %1656 = vmatpush1.msra.mxu0 0.0
    %1657 = vmatprep.subr.mxu0 0.0
    %1658 = vmatpush1.msra.mxu0 0.0
    %1659 = vmatprep.subr.mxu0 0.0
    %1660 = vmatpush1.msra.mxu0 0.0
    %1661 = vmatprep.subr.mxu0 0.0
    %1662 = vmatpush1.msra.mxu0 0.0
    %1663 = vmatprep.subr.mxu0 0.0
    %1664 = vmatpush1.msra.mxu0 0.0
    %1665 = vmatprep.subr.mxu0 0.0
    %1666 = vmatpush1.msra.mxu0 0.0
    %1667 = vmatprep.subr.mxu0 0.0
    %1668 = vmatpush1.msra.mxu0 0.0
    %1669 = vmatprep.subr.mxu0 0.0
    %1670 = vmatpush1.msra.mxu0 0.0
    %1671 = vmatprep.subr.mxu0 0.0
    %1672 = vmatpush1.msra.mxu0 0.0
    %1673 = vmatprep.subr.mxu0 0.0
    %1674 = vmatpush1.msra.mxu0 0.0
    %1675 = vmatprep.mubr.f32.mxu0 0.0
    %1676 = vmatmul.mubr.f32.gmra.mrb[0].mxu0 %v1609
    %v1677 = vpop.f32.mrb[0].mxu0
    %v1678 = vadd.f32 0.0, %v1677
    %v1679 = vpop.f32.mrb[0].mxu0
    %v1680 = vadd.f32 0.0, %v1679
    %1681 = vdwg.mxu0
    %1682 = vmatprep.subr.mxu0 0.0
    %1683 = vmatpush1.msra.mxu0 %v1037
    %1684 = vmatprep.subr.mxu0 0.0
    %1685 = vmatpush1.msra.mxu0 %v1040
    %1686 = vmatprep.subr.mxu0 0.0
    %1687 = vmatpush1.msra.mxu0 %v1043
    %1688 = vmatprep.subr.mxu0 0.0
    %1689 = vmatpush1.msra.mxu0 %v1046
    %1690 = vmatprep.subr.mxu0 0.0
    %1691 = vmatpush1.msra.mxu0 %v1049
    %1692 = vmatprep.subr.mxu0 0.0
    %1693 = vmatpush1.msra.mxu0 %v1052
    %1694 = vmatprep.subr.mxu0 0.0
    %1695 = vmatpush1.msra.mxu0 %v1055
    %1696 = vmatprep.subr.mxu0 0.0
    %1697 = vmatpush1.msra.mxu0 %v1058
    %1698 = vmatprep.subr.mxu0 0.0
    %1699 = vmatpush1.msra.mxu0 %v1061
    %1700 = vmatprep.subr.mxu0 0.0
    %1701 = vmatpush1.msra.mxu0 %v1064
    %1702 = vmatprep.subr.mxu0 0.0
    %1703 = vmatpush1.msra.mxu0 %v1067
    %1704 = vmatprep.subr.mxu0 0.0
    %1705 = vmatpush1.msra.mxu0 %v1070
    %1706 = vmatprep.subr.mxu0 0.0
    %1707 = vmatpush1.msra.mxu0 %v1073
    %1708 = vmatprep.subr.mxu0 0.0
    %1709 = vmatpush1.msra.mxu0 %v1076
    %1710 = vmatprep.subr.mxu0 0.0
    %1711 = vmatpush1.msra.mxu0 %v1079
    %1712 = vmatprep.subr.mxu0 0.0
    %1713 = vmatpush1.msra.mxu0 %v1082
    %1714 = vmatprep.subr.mxu0 0.0
    %1715 = vmatpush1.msra.mxu0 0.0
    %1716 = vmatprep.subr.mxu0 0.0
    %1717 = vmatpush1.msra.mxu0 0.0
    %1718 = vmatprep.subr.mxu0 0.0
    %1719 = vmatpush1.msra.mxu0 0.0
    %1720 = vmatprep.subr.mxu0 0.0
    %1721 = vmatpush1.msra.mxu0 0.0
    %1722 = vmatprep.subr.mxu0 0.0
    %1723 = vmatpush1.msra.mxu0 0.0
    %1724 = vmatprep.subr.mxu0 0.0
    %1725 = vmatpush1.msra.mxu0 0.0
    %1726 = vmatprep.subr.mxu0 0.0
    %1727 = vmatpush1.msra.mxu0 0.0
    %1728 = vmatprep.subr.mxu0 0.0
    %1729 = vmatpush1.msra.mxu0 0.0
    %1730 = vmatprep.subr.mxu0 0.0
    %1731 = vmatpush1.msra.mxu0 0.0
    %1732 = vmatprep.subr.mxu0 0.0
    %1733 = vmatpush1.msra.mxu0 0.0
    %1734 = vmatprep.subr.mxu0 0.0
    %1735 = vmatpush1.msra.mxu0 0.0
    %1736 = vmatprep.subr.mxu0 0.0
    %1737 = vmatpush1.msra.mxu0 0.0
    %1738 = vmatprep.subr.mxu0 0.0
    %1739 = vmatpush1.msra.mxu0 0.0
    %1740 = vmatprep.subr.mxu0 0.0
    %1741 = vmatpush1.msra.mxu0 0.0
    %1742 = vmatprep.subr.mxu0 0.0
    %1743 = vmatpush1.msra.mxu0 0.0
    %1744 = vmatprep.subr.mxu0 0.0
    %1745 = vmatpush1.msra.mxu0 0.0
    %1746 = vmatprep.mubr.f32.mxu0 0.0
    %1747 = vmatmul.mubr.f32.gmra.mrb[0].mxu0 %v1609
    %v1748 = vpop.f32.mrb[0].mxu0
    %v1749 = vadd.f32 0.0, %v1748
    %v1750 = vpop.f32.mrb[0].mxu0
    %1751 = vdwg.mxu0
    %v1754 = vrot.slane %v1678, 5
    %v1755 = vrot.slane %v1680, 5
    %v1758 = vadd.f32 %v426, %v1754
    %v1759 = vadd.f32 %v427, %v1755
    %v1760 = vxor.u32 %v1758, 2147483648
    %v1761 = vxor.u32 %v1759, 2147483648
    %v1762 = vmul.f32 %v1760, 1.442695
    %v1763 = vpow.pop %v1762
    %v1764 = vmul.f32 %v1761, 1.442695
    %v1765 = vpow.pop %v1764
    %v1766 = vadd.f32 %v1763, 1.0
    %v1767 = vadd.f32 %v1765, 1.0
    %v1768 = vrcp.pop %v1766
    %v1769 = vmul.f32 1.0, %v1768
    %v1770 = vrcp.pop %v1767
    %v1771 = vmul.f32 1.0, %v1770
    %v1772 = vadd.f32 %v1749, %v1083
    %v1774 = vrot.slane %v1772, 5
    %v1776 = vmul.f32 %v1769, %v1774
    %v1777 = vadd.f32 %v428, %v1776
    %v1778 = vtanh.pop %v1777
    %v1779 = vsub.f32 1.0, %v1771
    %v1780 = vmul.f32 %v1779, %v1778
    %v1781 = vrot.slane %v1607, 7
    %v1783 = vmul.f32 %v1771, %v1781
    %v1784 = vadd.f32 %v1780, %v1783
    %v1785 = vsel %vm1252, %v1784, %v1781
    %v1787 = vrot.slane %v1785, 3
    %1789 = vmatprep.subr.mxu0 %v1036
    %1790 = vmatpush1.msra.mxu0 %v1035
    %1791 = vmatprep.subr.mxu0 %v1039
    %1792 = vmatpush1.msra.mxu0 %v1038
    %1793 = vmatprep.subr.mxu0 %v1042
    %1794 = vmatpush1.msra.mxu0 %v1041
    %1795 = vmatprep.subr.mxu0 %v1045
    %1796 = vmatpush1.msra.mxu0 %v1044
    %1797 = vmatprep.subr.mxu0 %v1048
    %1798 = vmatpush1.msra.mxu0 %v1047
    %1799 = vmatprep.subr.mxu0 %v1051
    %1800 = vmatpush1.msra.mxu0 %v1050
    %1801 = vmatprep.subr.mxu0 %v1054
    %1802 = vmatpush1.msra.mxu0 %v1053
    %1803 = vmatprep.subr.mxu0 %v1057
    %1804 = vmatpush1.msra.mxu0 %v1056
    %1805 = vmatprep.subr.mxu0 %v1060
    %1806 = vmatpush1.msra.mxu0 %v1059
    %1807 = vmatprep.subr.mxu0 %v1063
    %1808 = vmatpush1.msra.mxu0 %v1062
    %1809 = vmatprep.subr.mxu0 %v1066
    %1810 = vmatpush1.msra.mxu0 %v1065
    %1811 = vmatprep.subr.mxu0 %v1069
    %1812 = vmatpush1.msra.mxu0 %v1068
    %1813 = vmatprep.subr.mxu0 %v1072
    %1814 = vmatpush1.msra.mxu0 %v1071
    %1815 = vmatprep.subr.mxu0 %v1075
    %1816 = vmatpush1.msra.mxu0 %v1074
    %1817 = vmatprep.subr.mxu0 %v1078
    %1818 = vmatpush1.msra.mxu0 %v1077
    %1819 = vmatprep.subr.mxu0 %v1081
    %1820 = vmatpush1.msra.mxu0 %v1080
    %1821 = vmatprep.subr.mxu0 0.0
    %1822 = vmatpush1.msra.mxu0 0.0
    %1823 = vmatprep.subr.mxu0 0.0
    %1824 = vmatpush1.msra.mxu0 0.0
    %1825 = vmatprep.subr.mxu0 0.0
    %1826 = vmatpush1.msra.mxu0 0.0
    %1827 = vmatprep.subr.mxu0 0.0
    %1828 = vmatpush1.msra.mxu0 0.0
    %1829 = vmatprep.subr.mxu0 0.0
    %1830 = vmatpush1.msra.mxu0 0.0
    %1831 = vmatprep.subr.mxu0 0.0
    %1832 = vmatpush1.msra.mxu0 0.0
    %1833 = vmatprep.subr.mxu0 0.0
    %1834 = vmatpush1.msra.mxu0 0.0
    %1835 = vmatprep.subr.mxu0 0.0
    %1836 = vmatpush1.msra.mxu0 0.0
    %1837 = vmatprep.subr.mxu0 0.0
    %1838 = vmatpush1.msra.mxu0 0.0
    %1839 = vmatprep.subr.mxu0 0.0
    %1840 = vmatpush1.msra.mxu0 0.0
    %1841 = vmatprep.subr.mxu0 0.0
    %1842 = vmatpush1.msra.mxu0 0.0
    %1843 = vmatprep.subr.mxu0 0.0
    %1844 = vmatpush1.msra.mxu0 0.0
    %1845 = vmatprep.subr.mxu0 0.0
    %1846 = vmatpush1.msra.mxu0 0.0
    %1847 = vmatprep.subr.mxu0 0.0
    %1848 = vmatpush1.msra.mxu0 0.0
    %1849 = vmatprep.subr.mxu0 0.0
    %1850 = vmatpush1.msra.mxu0 0.0
    %1851 = vmatprep.subr.mxu0 0.0
    %1852 = vmatpush1.msra.mxu0 0.0
    %1853 = vmatprep.mubr.f32.mxu0 0.0
    %1854 = vmatmul.mubr.f32.gmra.mrb[0].mxu0 %v1787
    %v1855 = vpop.f32.mrb[0].mxu0
    %v1856 = vadd.f32 0.0, %v1855
    %v1857 = vpop.f32.mrb[0].mxu0
    %v1858 = vadd.f32 0.0, %v1857
    %1859 = vdwg.mxu0
    %1860 = vmatprep.subr.mxu0 0.0
    %1861 = vmatpush1.msra.mxu0 %v1037
    %1862 = vmatprep.subr.mxu0 0.0
    %1863 = vmatpush1.msra.mxu0 %v1040
    %1864 = vmatprep.subr.mxu0 0.0
    %1865 = vmatpush1.msra.mxu0 %v1043
    %1866 = vmatprep.subr.mxu0 0.0
    %1867 = vmatpush1.msra.mxu0 %v1046
    %1868 = vmatprep.subr.mxu0 0.0
    %1869 = vmatpush1.msra.mxu0 %v1049
    %1870 = vmatprep.subr.mxu0 0.0
    %1871 = vmatpush1.msra.mxu0 %v1052
    %1872 = vmatprep.subr.mxu0 0.0
    %1873 = vmatpush1.msra.mxu0 %v1055
    %1874 = vmatprep.subr.mxu0 0.0
    %1875 = vmatpush1.msra.mxu0 %v1058
    %1876 = vmatprep.subr.mxu0 0.0
    %1877 = vmatpush1.msra.mxu0 %v1061
    %1878 = vmatprep.subr.mxu0 0.0
    %1879 = vmatpush1.msra.mxu0 %v1064
    %1880 = vmatprep.subr.mxu0 0.0
    %1881 = vmatpush1.msra.mxu0 %v1067
    %1882 = vmatprep.subr.mxu0 0.0
    %1883 = vmatpush1.msra.mxu0 %v1070
    %1884 = vmatprep.subr.mxu0 0.0
    %1885 = vmatpush1.msra.mxu0 %v1073
    %1886 = vmatprep.subr.mxu0 0.0
    %1887 = vmatpush1.msra.mxu0 %v1076
    %1888 = vmatprep.subr.mxu0 0.0
    %1889 = vmatpush1.msra.mxu0 %v1079
    %1890 = vmatprep.subr.mxu0 0.0
    %1891 = vmatpush1.msra.mxu0 %v1082
    %1892 = vmatprep.subr.mxu0 0.0
    %1893 = vmatpush1.msra.mxu0 0.0
    %1894 = vmatprep.subr.mxu0 0.0
    %1895 = vmatpush1.msra.mxu0 0.0
    %1896 = vmatprep.subr.mxu0 0.0
    %1897 = vmatpush1.msra.mxu0 0.0
    %1898 = vmatprep.subr.mxu0 0.0
    %1899 = vmatpush1.msra.mxu0 0.0
    %1900 = vmatprep.subr.mxu0 0.0
    %1901 = vmatpush1.msra.mxu0 0.0
    %1902 = vmatprep.subr.mxu0 0.0
    %1903 = vmatpush1.msra.mxu0 0.0
    %1904 = vmatprep.subr.mxu0 0.0
    %1905 = vmatpush1.msra.mxu0 0.0
    %1906 = vmatprep.subr.mxu0 0.0
    %1907 = vmatpush1.msra.mxu0 0.0
    %1908 = vmatprep.subr.mxu0 0.0
    %1909 = vmatpush1.msra.mxu0 0.0
    %1910 = vmatprep.subr.mxu0 0.0
    %1911 = vmatpush1.msra.mxu0 0.0
    %1912 = vmatprep.subr.mxu0 0.0
    %1913 = vmatpush1.msra.mxu0 0.0
    %1914 = vmatprep.subr.mxu0 0.0
    %1915 = vmatpush1.msra.mxu0 0.0
    %1916 = vmatprep.subr.mxu0 0.0
    %1917 = vmatpush1.msra.mxu0 0.0
    %1918 = vmatprep.subr.mxu0 0.0
    %1919 = vmatpush1.msra.mxu0 0.0
    %1920 = vmatprep.subr.mxu0 0.0
    %1921 = vmatpush1.msra.mxu0 0.0
    %1922 = vmatprep.subr.mxu0 0.0
    %1923 = vmatpush1.msra.mxu0 0.0
    %1924 = vmatprep.mubr.f32.mxu0 0.0
    %1925 = vmatmul.mubr.f32.gmra.mrb[0].mxu0 %v1787
    %v1926 = vpop.f32.mrb[0].mxu0
    %v1927 = vadd.f32 0.0, %v1926
    %v1928 = vpop.f32.mrb[0].mxu0
    %1929 = vdwg.mxu0
    %v1932 = vrot.slane %v1856, 4
    %v1933 = vrot.slane %v1858, 4
    %v1936 = vadd.f32 %v426, %v1932
    %v1937 = vadd.f32 %v427, %v1933
    %v1938 = vxor.u32 %v1936, 2147483648
    %v1939 = vxor.u32 %v1937, 2147483648
    %v1940 = vmul.f32 %v1938, 1.442695
    %v1941 = vpow.pop %v1940
    %v1942 = vmul.f32 %v1939, 1.442695
    %v1943 = vpow.pop %v1942
    %v1944 = vadd.f32 %v1941, 1.0
    %v1945 = vadd.f32 %v1943, 1.0
    %v1946 = vrcp.pop %v1944
    %v1947 = vmul.f32 1.0, %v1946
    %v1948 = vrcp.pop %v1945
    %v1949 = vmul.f32 1.0, %v1948
    %v1950 = vadd.f32 %v1927, %v1083
    %v1952 = vrot.slane %v1950, 4
    %v1954 = vmul.f32 %v1947, %v1952
    %v1955 = vadd.f32 %v428, %v1954
    %v1956 = vtanh.pop %v1955
    %v1957 = vsub.f32 1.0, %v1949
    %v1958 = vmul.f32 %v1957, %v1956
    %v1959 = vrot.slane %v1785, 7
    %v1961 = vmul.f32 %v1949, %v1959
    %v1962 = vadd.f32 %v1958, %v1961
    %v1963 = vsel %vm1252, %v1962, %v1959
    %v1965 = vrot.slane %v1963, 4
    %1967 = vmatprep.subr.mxu0 %v1036
    %1968 = vmatpush1.msra.mxu0 %v1035
    %1969 = vmatprep.subr.mxu0 %v1039
    %1970 = vmatpush1.msra.mxu0 %v1038
    %1971 = vmatprep.subr.mxu0 %v1042
    %1972 = vmatpush1.msra.mxu0 %v1041
    %1973 = vmatprep.subr.mxu0 %v1045
    %1974 = vmatpush1.msra.mxu0 %v1044
    %1975 = vmatprep.subr.mxu0 %v1048
    %1976 = vmatpush1.msra.mxu0 %v1047
    %1977 = vmatprep.subr.mxu0 %v1051
    %1978 = vmatpush1.msra.mxu0 %v1050
    %1979 = vmatprep.subr.mxu0 %v1054
    %1980 = vmatpush1.msra.mxu0 %v1053
    %1981 = vmatprep.subr.mxu0 %v1057
    %1982 = vmatpush1.msra.mxu0 %v1056
    %1983 = vmatprep.subr.mxu0 %v1060
    %1984 = vmatpush1.msra.mxu0 %v1059
    %1985 = vmatprep.subr.mxu0 %v1063
    %1986 = vmatpush1.msra.mxu0 %v1062
    %1987 = vmatprep.subr.mxu0 %v1066
    %1988 = vmatpush1.msra.mxu0 %v1065
    %1989 = vmatprep.subr.mxu0 %v1069
    %1990 = vmatpush1.msra.mxu0 %v1068
    %1991 = vmatprep.subr.mxu0 %v1072
    %1992 = vmatpush1.msra.mxu0 %v1071
    %1993 = vmatprep.subr.mxu0 %v1075
    %1994 = vmatpush1.msra.mxu0 %v1074
    %1995 = vmatprep.subr.mxu0 %v1078
    %1996 = vmatpush1.msra.mxu0 %v1077
    %1997 = vmatprep.subr.mxu0 %v1081
    %1998 = vmatpush1.msra.mxu0 %v1080
    %1999 = vmatprep.subr.mxu0 0.0
    %2000 = vmatpush1.msra.mxu0 0.0
    %2001 = vmatprep.subr.mxu0 0.0
    %2002 = vmatpush1.msra.mxu0 0.0
    %2003 = vmatprep.subr.mxu0 0.0
    %2004 = vmatpush1.msra.mxu0 0.0
    %2005 = vmatprep.subr.mxu0 0.0
    %2006 = vmatpush1.msra.mxu0 0.0
    %2007 = vmatprep.subr.mxu0 0.0
    %2008 = vmatpush1.msra.mxu0 0.0
    %2009 = vmatprep.subr.mxu0 0.0
    %2010 = vmatpush1.msra.mxu0 0.0
    %2011 = vmatprep.subr.mxu0 0.0
    %2012 = vmatpush1.msra.mxu0 0.0
    %2013 = vmatprep.subr.mxu0 0.0
    %2014 = vmatpush1.msra.mxu0 0.0
    %2015 = vmatprep.subr.mxu0 0.0
    %2016 = vmatpush1.msra.mxu0 0.0
    %2017 = vmatprep.subr.mxu0 0.0
    %2018 = vmatpush1.msra.mxu0 0.0
    %2019 = vmatprep.subr.mxu0 0.0
    %2020 = vmatpush1.msra.mxu0 0.0
    %2021 = vmatprep.subr.mxu0 0.0
    %2022 = vmatpush1.msra.mxu0 0.0
    %2023 = vmatprep.subr.mxu0 0.0
    %2024 = vmatpush1.msra.mxu0 0.0
    %2025 = vmatprep.subr.mxu0 0.0
    %2026 = vmatpush1.msra.mxu0 0.0
    %2027 = vmatprep.subr.mxu0 0.0
    %2028 = vmatpush1.msra.mxu0 0.0
    %2029 = vmatprep.subr.mxu0 0.0
    %2030 = vmatpush1.msra.mxu0 0.0
    %2031 = vmatprep.mubr.f32.mxu0 0.0
    %2032 = vmatmul.mubr.f32.gmra.mrb[0].mxu0 %v1965
    %v2033 = vpop.f32.mrb[0].mxu0
    %v2034 = vadd.f32 0.0, %v2033
    %v2035 = vpop.f32.mrb[0].mxu0
    %v2036 = vadd.f32 0.0, %v2035
    %2037 = vdwg.mxu0
    %2038 = vmatprep.subr.mxu0 0.0
    %2039 = vmatpush1.msra.mxu0 %v1037
    %2040 = vmatprep.subr.mxu0 0.0
    %2041 = vmatpush1.msra.mxu0 %v1040
    %2042 = vmatprep.subr.mxu0 0.0
    %2043 = vmatpush1.msra.mxu0 %v1043
    %2044 = vmatprep.subr.mxu0 0.0
    %2045 = vmatpush1.msra.mxu0 %v1046
    %2046 = vmatprep.subr.mxu0 0.0
    %2047 = vmatpush1.msra.mxu0 %v1049
    %2048 = vmatprep.subr.mxu0 0.0
    %2049 = vmatpush1.msra.mxu0 %v1052
    %2050 = vmatprep.subr.mxu0 0.0
    %2051 = vmatpush1.msra.mxu0 %v1055
    %2052 = vmatprep.subr.mxu0 0.0
    %2053 = vmatpush1.msra.mxu0 %v1058
    %2054 = vmatprep.subr.mxu0 0.0
    %2055 = vmatpush1.msra.mxu0 %v1061
    %2056 = vmatprep.subr.mxu0 0.0
    %2057 = vmatpush1.msra.mxu0 %v1064
    %2058 = vmatprep.subr.mxu0 0.0
    %2059 = vmatpush1.msra.mxu0 %v1067
    %2060 = vmatprep.subr.mxu0 0.0
    %2061 = vmatpush1.msra.mxu0 %v1070
    %2062 = vmatprep.subr.mxu0 0.0
    %2063 = vmatpush1.msra.mxu0 %v1073
    %2064 = vmatprep.subr.mxu0 0.0
    %2065 = vmatpush1.msra.mxu0 %v1076
    %2066 = vmatprep.subr.mxu0 0.0
    %2067 = vmatpush1.msra.mxu0 %v1079
    %2068 = vmatprep.subr.mxu0 0.0
    %2069 = vmatpush1.msra.mxu0 %v1082
    %2070 = vmatprep.subr.mxu0 0.0
    %2071 = vmatpush1.msra.mxu0 0.0
    %2072 = vmatprep.subr.mxu0 0.0
    %2073 = vmatpush1.msra.mxu0 0.0
    %2074 = vmatprep.subr.mxu0 0.0
    %2075 = vmatpush1.msra.mxu0 0.0
    %2076 = vmatprep.subr.mxu0 0.0
    %2077 = vmatpush1.msra.mxu0 0.0
    %2078 = vmatprep.subr.mxu0 0.0
    %2079 = vmatpush1.msra.mxu0 0.0
    %2080 = vmatprep.subr.mxu0 0.0
    %2081 = vmatpush1.msra.mxu0 0.0
    %2082 = vmatprep.subr.mxu0 0.0
    %2083 = vmatpush1.msra.mxu0 0.0
    %2084 = vmatprep.subr.mxu0 0.0
    %2085 = vmatpush1.msra.mxu0 0.0
    %2086 = vmatprep.subr.mxu0 0.0
    %2087 = vmatpush1.msra.mxu0 0.0
    %2088 = vmatprep.subr.mxu0 0.0
    %2089 = vmatpush1.msra.mxu0 0.0
    %2090 = vmatprep.subr.mxu0 0.0
    %2091 = vmatpush1.msra.mxu0 0.0
    %2092 = vmatprep.subr.mxu0 0.0
    %2093 = vmatpush1.msra.mxu0 0.0
    %2094 = vmatprep.subr.mxu0 0.0
    %2095 = vmatpush1.msra.mxu0 0.0
    %2096 = vmatprep.subr.mxu0 0.0
    %2097 = vmatpush1.msra.mxu0 0.0
    %2098 = vmatprep.subr.mxu0 0.0
    %2099 = vmatpush1.msra.mxu0 0.0
    %2100 = vmatprep.subr.mxu0 0.0
    %2101 = vmatpush1.msra.mxu0 0.0
    %2102 = vmatprep.mubr.f32.mxu0 0.0
    %2103 = vmatmul.mubr.f32.gmra.mrb[0].mxu0 %v1965
    %v2104 = vpop.f32.mrb[0].mxu0
    %v2105 = vadd.f32 0.0, %v2104
    %v2106 = vpop.f32.mrb[0].mxu0
    %2107 = vdwg.mxu0
    %v2110 = vrot.slane %v2034, 3
    %v2111 = vrot.slane %v2036, 3
    %v2114 = vadd.f32 %v426, %v2110
    %v2115 = vadd.f32 %v427, %v2111
    %v2116 = vxor.u32 %v2114, 2147483648
    %v2117 = vxor.u32 %v2115, 2147483648
    %v2118 = vmul.f32 %v2116, 1.442695
    %v2119 = vpow.pop %v2118
    %v2120 = vmul.f32 %v2117, 1.442695
    %v2121 = vpow.pop %v2120
    %v2122 = vadd.f32 %v2119, 1.0
    %v2123 = vadd.f32 %v2121, 1.0
    %v2124 = vrcp.pop %v2122
    %v2125 = vmul.f32 1.0, %v2124
    %v2126 = vrcp.pop %v2123
    %v2127 = vmul.f32 1.0, %v2126
    %v2128 = vadd.f32 %v2105, %v1083
    %v2130 = vrot.slane %v2128, 3
    %v2132 = vmul.f32 %v2125, %v2130
    %v2133 = vadd.f32 %v428, %v2132
    %v2134 = vtanh.pop %v2133
    %v2135 = vsub.f32 1.0, %v2127
    %v2136 = vmul.f32 %v2135, %v2134
    %v2137 = vrot.slane %v1963, 7
    %v2139 = vmul.f32 %v2127, %v2137
    %v2140 = vadd.f32 %v2136, %v2139
    %v2141 = vsel %vm1252, %v2140, %v2137
    %v2143 = vrot.slane %v2141, 5
    %2145 = vmatprep.subr.mxu0 %v1036
    %2146 = vmatpush1.msra.mxu0 %v1035
    %2147 = vmatprep.subr.mxu0 %v1039
    %2148 = vmatpush1.msra.mxu0 %v1038
    %2149 = vmatprep.subr.mxu0 %v1042
    %2150 = vmatpush1.msra.mxu0 %v1041
    %2151 = vmatprep.subr.mxu0 %v1045
    %2152 = vmatpush1.msra.mxu0 %v1044
    %2153 = vmatprep.subr.mxu0 %v1048
    %2154 = vmatpush1.msra.mxu0 %v1047
    %2155 = vmatprep.subr.mxu0 %v1051
    %2156 = vmatpush1.msra.mxu0 %v1050
    %2157 = vmatprep.subr.mxu0 %v1054
    %2158 = vmatpush1.msra.mxu0 %v1053
    %2159 = vmatprep.subr.mxu0 %v1057
    %2160 = vmatpush1.msra.mxu0 %v1056
    %2161 = vmatprep.subr.mxu0 %v1060
    %2162 = vmatpush1.msra.mxu0 %v1059
    %2163 = vmatprep.subr.mxu0 %v1063
    %2164 = vmatpush1.msra.mxu0 %v1062
    %2165 = vmatprep.subr.mxu0 %v1066
    %2166 = vmatpush1.msra.mxu0 %v1065
    %2167 = vmatprep.subr.mxu0 %v1069
    %2168 = vmatpush1.msra.mxu0 %v1068
    %2169 = vmatprep.subr.mxu0 %v1072
    %2170 = vmatpush1.msra.mxu0 %v1071
    %2171 = vmatprep.subr.mxu0 %v1075
    %2172 = vmatpush1.msra.mxu0 %v1074
    %2173 = vmatprep.subr.mxu0 %v1078
    %2174 = vmatpush1.msra.mxu0 %v1077
    %2175 = vmatprep.subr.mxu0 %v1081
    %2176 = vmatpush1.msra.mxu0 %v1080
    %2177 = vmatprep.subr.mxu0 0.0
    %2178 = vmatpush1.msra.mxu0 0.0
    %2179 = vmatprep.subr.mxu0 0.0
    %2180 = vmatpush1.msra.mxu0 0.0
    %2181 = vmatprep.subr.mxu0 0.0
    %2182 = vmatpush1.msra.mxu0 0.0
    %2183 = vmatprep.subr.mxu0 0.0
    %2184 = vmatpush1.msra.mxu0 0.0
    %2185 = vmatprep.subr.mxu0 0.0
    %2186 = vmatpush1.msra.mxu0 0.0
    %2187 = vmatprep.subr.mxu0 0.0
    %2188 = vmatpush1.msra.mxu0 0.0
    %2189 = vmatprep.subr.mxu0 0.0
    %2190 = vmatpush1.msra.mxu0 0.0
    %2191 = vmatprep.subr.mxu0 0.0
    %2192 = vmatpush1.msra.mxu0 0.0
    %2193 = vmatprep.subr.mxu0 0.0
    %2194 = vmatpush1.msra.mxu0 0.0
    %2195 = vmatprep.subr.mxu0 0.0
    %2196 = vmatpush1.msra.mxu0 0.0
    %2197 = vmatprep.subr.mxu0 0.0
    %2198 = vmatpush1.msra.mxu0 0.0
    %2199 = vmatprep.subr.mxu0 0.0
    %2200 = vmatpush1.msra.mxu0 0.0
    %2201 = vmatprep.subr.mxu0 0.0
    %2202 = vmatpush1.msra.mxu0 0.0
    %2203 = vmatprep.subr.mxu0 0.0
    %2204 = vmatpush1.msra.mxu0 0.0
    %2205 = vmatprep.subr.mxu0 0.0
    %2206 = vmatpush1.msra.mxu0 0.0
    %2207 = vmatprep.subr.mxu0 0.0
    %2208 = vmatpush1.msra.mxu0 0.0
    %2209 = vmatprep.mubr.f32.mxu0 0.0
    %2210 = vmatmul.mubr.f32.gmra.mrb[0].mxu0 %v2143
    %v2211 = vpop.f32.mrb[0].mxu0
    %v2212 = vadd.f32 0.0, %v2211
    %v2213 = vpop.f32.mrb[0].mxu0
    %v2214 = vadd.f32 0.0, %v2213
    %2215 = vdwg.mxu0
    %2216 = vmatprep.subr.mxu0 0.0
    %2217 = vmatpush1.msra.mxu0 %v1037
    %2218 = vmatprep.subr.mxu0 0.0
    %2219 = vmatpush1.msra.mxu0 %v1040
    %2220 = vmatprep.subr.mxu0 0.0
    %2221 = vmatpush1.msra.mxu0 %v1043
    %2222 = vmatprep.subr.mxu0 0.0
    %2223 = vmatpush1.msra.mxu0 %v1046
    %2224 = vmatprep.subr.mxu0 0.0
    %2225 = vmatpush1.msra.mxu0 %v1049
    %2226 = vmatprep.subr.mxu0 0.0
    %2227 = vmatpush1.msra.mxu0 %v1052
    %2228 = vmatprep.subr.mxu0 0.0
    %2229 = vmatpush1.msra.mxu0 %v1055
    %2230 = vmatprep.subr.mxu0 0.0
    %2231 = vmatpush1.msra.mxu0 %v1058
    %2232 = vmatprep.subr.mxu0 0.0
    %2233 = vmatpush1.msra.mxu0 %v1061
    %2234 = vmatprep.subr.mxu0 0.0
    %2235 = vmatpush1.msra.mxu0 %v1064
    %2236 = vmatprep.subr.mxu0 0.0
    %2237 = vmatpush1.msra.mxu0 %v1067
    %2238 = vmatprep.subr.mxu0 0.0
    %2239 = vmatpush1.msra.mxu0 %v1070
    %2240 = vmatprep.subr.mxu0 0.0
    %2241 = vmatpush1.msra.mxu0 %v1073
    %2242 = vmatprep.subr.mxu0 0.0
    %2243 = vmatpush1.msra.mxu0 %v1076
    %2244 = vmatprep.subr.mxu0 0.0
    %2245 = vmatpush1.msra.mxu0 %v1079
    %2246 = vmatprep.subr.mxu0 0.0
    %2247 = vmatpush1.msra.mxu0 %v1082
    %2248 = vmatprep.subr.mxu0 0.0
    %2249 = vmatpush1.msra.mxu0 0.0
    %2250 = vmatprep.subr.mxu0 0.0
    %2251 = vmatpush1.msra.mxu0 0.0
    %2252 = vmatprep.subr.mxu0 0.0
    %2253 = vmatpush1.msra.mxu0 0.0
    %2254 = vmatprep.subr.mxu0 0.0
    %2255 = vmatpush1.msra.mxu0 0.0
    %2256 = vmatprep.subr.mxu0 0.0
    %2257 = vmatpush1.msra.mxu0 0.0
    %2258 = vmatprep.subr.mxu0 0.0
    %2259 = vmatpush1.msra.mxu0 0.0
    %2260 = vmatprep.subr.mxu0 0.0
    %2261 = vmatpush1.msra.mxu0 0.0
    %2262 = vmatprep.subr.mxu0 0.0
    %2263 = vmatpush1.msra.mxu0 0.0
    %2264 = vmatprep.subr.mxu0 0.0
    %2265 = vmatpush1.msra.mxu0 0.0
    %2266 = vmatprep.subr.mxu0 0.0
    %2267 = vmatpush1.msra.mxu0 0.0
    %2268 = vmatprep.subr.mxu0 0.0
    %2269 = vmatpush1.msra.mxu0 0.0
    %2270 = vmatprep.subr.mxu0 0.0
    %2271 = vmatpush1.msra.mxu0 0.0
    %2272 = vmatprep.subr.mxu0 0.0
    %2273 = vmatpush1.msra.mxu0 0.0
    %2274 = vmatprep.subr.mxu0 0.0
    %2275 = vmatpush1.msra.mxu0 0.0
    %2276 = vmatprep.subr.mxu0 0.0
    %2277 = vmatpush1.msra.mxu0 0.0
    %2278 = vmatprep.subr.mxu0 0.0
    %2279 = vmatpush1.msra.mxu0 0.0
    %2280 = vmatprep.mubr.f32.mxu0 0.0
    %2281 = vmatmul.mubr.f32.gmra.mrb[0].mxu0 %v2143
    %v2282 = vpop.f32.mrb[0].mxu0
    %v2283 = vadd.f32 0.0, %v2282
    %v2284 = vpop.f32.mrb[0].mxu0
    %2285 = vdwg.mxu0
    %v2288 = vrot.slane %v2212, 2
    %v2289 = vrot.slane %v2214, 2
    %v2292 = vadd.f32 %v426, %v2288
    %v2293 = vadd.f32 %v427, %v2289
    %v2294 = vxor.u32 %v2292, 2147483648
    %v2295 = vxor.u32 %v2293, 2147483648
    %v2296 = vmul.f32 %v2294, 1.442695
    %v2297 = vpow.pop %v2296
    %v2298 = vmul.f32 %v2295, 1.442695
    %v2299 = vpow.pop %v2298
    %v2300 = vadd.f32 %v2297, 1.0
    %v2301 = vadd.f32 %v2299, 1.0
    %v2302 = vrcp.pop %v2300
    %v2303 = vmul.f32 1.0, %v2302
    %v2304 = vrcp.pop %v2301
    %v2305 = vmul.f32 1.0, %v2304
    %v2306 = vadd.f32 %v2283, %v1083
    %v2308 = vrot.slane %v2306, 2
    %v2310 = vmul.f32 %v2303, %v2308
    %v2311 = vadd.f32 %v428, %v2310
    %v2312 = vtanh.pop %v2311
    %v2313 = vsub.f32 1.0, %v2305
    %v2314 = vmul.f32 %v2313, %v2312
    %v2315 = vrot.slane %v2141, 7
    %v2317 = vmul.f32 %v2305, %v2315
    %v2318 = vadd.f32 %v2314, %v2317
    %v2319 = vsel %vm1252, %v2318, %v2315
    %v2321 = vrot.slane %v2319, 6
    %2323 = vmatprep.subr.mxu0 %v1036
    %2324 = vmatpush1.msra.mxu0 %v1035
    %2325 = vmatprep.subr.mxu0 %v1039
    %2326 = vmatpush1.msra.mxu0 %v1038
    %2327 = vmatprep.subr.mxu0 %v1042
    %2328 = vmatpush1.msra.mxu0 %v1041
    %2329 = vmatprep.subr.mxu0 %v1045
    %2330 = vmatpush1.msra.mxu0 %v1044
    %2331 = vmatprep.subr.mxu0 %v1048
    %2332 = vmatpush1.msra.mxu0 %v1047
    %2333 = vmatprep.subr.mxu0 %v1051
    %2334 = vmatpush1.msra.mxu0 %v1050
    %2335 = vmatprep.subr.mxu0 %v1054
    %2336 = vmatpush1.msra.mxu0 %v1053
    %2337 = vmatprep.subr.mxu0 %v1057
    %2338 = vmatpush1.msra.mxu0 %v1056
    %2339 = vmatprep.subr.mxu0 %v1060
    %2340 = vmatpush1.msra.mxu0 %v1059
    %2341 = vmatprep.subr.mxu0 %v1063
    %2342 = vmatpush1.msra.mxu0 %v1062
    %2343 = vmatprep.subr.mxu0 %v1066
    %2344 = vmatpush1.msra.mxu0 %v1065
    %2345 = vmatprep.subr.mxu0 %v1069
    %2346 = vmatpush1.msra.mxu0 %v1068
    %2347 = vmatprep.subr.mxu0 %v1072
    %2348 = vmatpush1.msra.mxu0 %v1071
    %2349 = vmatprep.subr.mxu0 %v1075
    %2350 = vmatpush1.msra.mxu0 %v1074
    %2351 = vmatprep.subr.mxu0 %v1078
    %2352 = vmatpush1.msra.mxu0 %v1077
    %2353 = vmatprep.subr.mxu0 %v1081
    %2354 = vmatpush1.msra.mxu0 %v1080
    %2355 = vmatprep.subr.mxu0 0.0
    %2356 = vmatpush1.msra.mxu0 0.0
    %2357 = vmatprep.subr.mxu0 0.0
    %2358 = vmatpush1.msra.mxu0 0.0
    %2359 = vmatprep.subr.mxu0 0.0
    %2360 = vmatpush1.msra.mxu0 0.0
    %2361 = vmatprep.subr.mxu0 0.0
    %2362 = vmatpush1.msra.mxu0 0.0
    %2363 = vmatprep.subr.mxu0 0.0
    %2364 = vmatpush1.msra.mxu0 0.0
    %2365 = vmatprep.subr.mxu0 0.0
    %2366 = vmatpush1.msra.mxu0 0.0
    %2367 = vmatprep.subr.mxu0 0.0
    %2368 = vmatpush1.msra.mxu0 0.0
    %2369 = vmatprep.subr.mxu0 0.0
    %2370 = vmatpush1.msra.mxu0 0.0
    %2371 = vmatprep.subr.mxu0 0.0
    %2372 = vmatpush1.msra.mxu0 0.0
    %2373 = vmatprep.subr.mxu0 0.0
    %2374 = vmatpush1.msra.mxu0 0.0
    %2375 = vmatprep.subr.mxu0 0.0
    %2376 = vmatpush1.msra.mxu0 0.0
    %2377 = vmatprep.subr.mxu0 0.0
    %2378 = vmatpush1.msra.mxu0 0.0
    %2379 = vmatprep.subr.mxu0 0.0
    %2380 = vmatpush1.msra.mxu0 0.0
    %2381 = vmatprep.subr.mxu0 0.0
    %2382 = vmatpush1.msra.mxu0 0.0
    %2383 = vmatprep.subr.mxu0 0.0
    %2384 = vmatpush1.msra.mxu0 0.0
    %2385 = vmatprep.subr.mxu0 0.0
    %2386 = vmatpush1.msra.mxu0 0.0
    %2387 = vmatprep.mubr.f32.mxu0 0.0
    %2388 = vmatmul.mubr.f32.gmra.mrb[0].mxu0 %v2321
    %v2389 = vpop.f32.mrb[0].mxu0
    %v2390 = vadd.f32 0.0, %v2389
    %v2391 = vpop.f32.mrb[0].mxu0
    %v2392 = vadd.f32 0.0, %v2391
    %2393 = vdwg.mxu0
    %2394 = vmatprep.subr.mxu0 0.0
    %2395 = vmatpush1.msra.mxu0 %v1037
    %2396 = vmatprep.subr.mxu0 0.0
    %2397 = vmatpush1.msra.mxu0 %v1040
    %2398 = vmatprep.subr.mxu0 0.0
    %2399 = vmatpush1.msra.mxu0 %v1043
    %2400 = vmatprep.subr.mxu0 0.0
    %2401 = vmatpush1.msra.mxu0 %v1046
    %2402 = vmatprep.subr.mxu0 0.0
    %2403 = vmatpush1.msra.mxu0 %v1049
    %2404 = vmatprep.subr.mxu0 0.0
    %2405 = vmatpush1.msra.mxu0 %v1052
    %2406 = vmatprep.subr.mxu0 0.0
    %2407 = vmatpush1.msra.mxu0 %v1055
    %2408 = vmatprep.subr.mxu0 0.0
    %2409 = vmatpush1.msra.mxu0 %v1058
    %2410 = vmatprep.subr.mxu0 0.0
    %2411 = vmatpush1.msra.mxu0 %v1061
    %2412 = vmatprep.subr.mxu0 0.0
    %2413 = vmatpush1.msra.mxu0 %v1064
    %2414 = vmatprep.subr.mxu0 0.0
    %2415 = vmatpush1.msra.mxu0 %v1067
    %2416 = vmatprep.subr.mxu0 0.0
    %2417 = vmatpush1.msra.mxu0 %v1070
    %2418 = vmatprep.subr.mxu0 0.0
    %2419 = vmatpush1.msra.mxu0 %v1073
    %2420 = vmatprep.subr.mxu0 0.0
    %2421 = vmatpush1.msra.mxu0 %v1076
    %2422 = vmatprep.subr.mxu0 0.0
    %2423 = vmatpush1.msra.mxu0 %v1079
    %2424 = vmatprep.subr.mxu0 0.0
    %2425 = vmatpush1.msra.mxu0 %v1082
    %2426 = vmatprep.subr.mxu0 0.0
    %2427 = vmatpush1.msra.mxu0 0.0
    %2428 = vmatprep.subr.mxu0 0.0
    %2429 = vmatpush1.msra.mxu0 0.0
    %2430 = vmatprep.subr.mxu0 0.0
    %2431 = vmatpush1.msra.mxu0 0.0
    %2432 = vmatprep.subr.mxu0 0.0
    %2433 = vmatpush1.msra.mxu0 0.0
    %2434 = vmatprep.subr.mxu0 0.0
    %2435 = vmatpush1.msra.mxu0 0.0
    %2436 = vmatprep.subr.mxu0 0.0
    %2437 = vmatpush1.msra.mxu0 0.0
    %2438 = vmatprep.subr.mxu0 0.0
    %2439 = vmatpush1.msra.mxu0 0.0
    %2440 = vmatprep.subr.mxu0 0.0
    %2441 = vmatpush1.msra.mxu0 0.0
    %2442 = vmatprep.subr.mxu0 0.0
    %2443 = vmatpush1.msra.mxu0 0.0
    %2444 = vmatprep.subr.mxu0 0.0
    %2445 = vmatpush1.msra.mxu0 0.0
    %2446 = vmatprep.subr.mxu0 0.0
    %2447 = vmatpush1.msra.mxu0 0.0
    %2448 = vmatprep.subr.mxu0 0.0
    %2449 = vmatpush1.msra.mxu0 0.0
    %2450 = vmatprep.subr.mxu0 0.0
    %2451 = vmatpush1.msra.mxu0 0.0
    %2452 = vmatprep.subr.mxu0 0.0
    %2453 = vmatpush1.msra.mxu0 0.0
    %2454 = vmatprep.subr.mxu0 0.0
    %2455 = vmatpush1.msra.mxu0 0.0
    %2456 = vmatprep.subr.mxu0 0.0
    %2457 = vmatpush1.msra.mxu0 0.0
    %2458 = vmatprep.mubr.f32.mxu0 0.0
    %2459 = vmatmul.mubr.f32.gmra.mrb[0].mxu0 %v2321
    %v2460 = vpop.f32.mrb[0].mxu0
    %v2461 = vadd.f32 0.0, %v2460
    %v2462 = vpop.f32.mrb[0].mxu0
    %2463 = vdwg.mxu0
    %v2466 = vrot.slane %v2390, 1
    %v2467 = vrot.slane %v2392, 1
    %v2470 = vadd.f32 %v426, %v2466
    %v2471 = vadd.f32 %v427, %v2467
    %v2472 = vxor.u32 %v2470, 2147483648
    %v2473 = vxor.u32 %v2471, 2147483648
    %v2474 = vmul.f32 %v2472, 1.442695
    %v2475 = vpow.pop %v2474
    %v2476 = vmul.f32 %v2473, 1.442695
    %v2477 = vpow.pop %v2476
    %v2478 = vadd.f32 %v2475, 1.0
    %v2479 = vadd.f32 %v2477, 1.0
    %v2480 = vrcp.pop %v2478
    %v2481 = vmul.f32 1.0, %v2480
    %v2482 = vrcp.pop %v2479
    %v2483 = vmul.f32 1.0, %v2482
    %v2484 = vadd.f32 %v2461, %v1083
    %v2486 = vrot.slane %v2484, 1
    %v2488 = vmul.f32 %v2481, %v2486
    %v2489 = vadd.f32 %v428, %v2488
    %v2490 = vtanh.pop %v2489
    %v2491 = vsub.f32 1.0, %v2483
    %v2492 = vmul.f32 %v2491, %v2490
    %v2493 = vrot.slane %v2319, 7
    %v2495 = vmul.f32 %v2483, %v2493
    %v2496 = vadd.f32 %v2492, %v2495
    %v2497 = vsel %vm1252, %v2496, %v2493
    %v2498 = vld [vmem:[%s12] sm:$0xff]
    %v2499 = vld [vmem:[%s12 + $0x8] sm:$0xff]
    %v2500 = vld [vmem:[%s12 + $0x10] sm:$0xff]
    %v2501 = vld [vmem:[%s12 + $0x18] sm:$0xff]
    %v2502 = vld [vmem:[%s12 + $0x20] sm:$0xff]
    %v2503 = vld [vmem:[%s12 + $0x28] sm:$0xff]
    %v2504 = vld [vmem:[%s12 + $0x30] sm:$0xff]
    %v2505 = vld [vmem:[%s12 + $0x38] sm:$0xff]
    %v2506 = vld [vmem:[%s12 + $0x40] sm:$0xff]
    %v2507 = vld [vmem:[%s12 + $0x48] sm:$0xff]
    %v2508 = vld [vmem:[%s12 + $0x50] sm:$0xff]
    %v2509 = vld [vmem:[%s12 + $0x58] sm:$0xff]
    %v2510 = vld [vmem:[%s12 + $0x60] sm:$0xff]
    %v2511 = vld [vmem:[%s12 + $0x68] sm:$0xff]
    %v2512 = vld [vmem:[%s12 + $0x70] sm:$0xff]
    %v2513 = vld [vmem:[%s12 + $0x78] sm:$0xff]
    %v2514 = vld [vmem:[%s13] sm:$0x1]
    %v2516 = vrot.slane %v2497, 7
    %2518 = vmatprep.subr.mxu0 0.0
    %2519 = vmatpush1.msra.mxu0 %v2498
    %2520 = vmatprep.subr.mxu0 0.0
    %2521 = vmatpush1.msra.mxu0 %v2499
    %2522 = vmatprep.subr.mxu0 0.0
    %2523 = vmatpush1.msra.mxu0 %v2500
    %2524 = vmatprep.subr.mxu0 0.0
    %2525 = vmatpush1.msra.mxu0 %v2501
    %2526 = vmatprep.subr.mxu0 0.0
    %2527 = vmatpush1.msra.mxu0 %v2502
    %2528 = vmatprep.subr.mxu0 0.0
    %2529 = vmatpush1.msra.mxu0 %v2503
    %2530 = vmatprep.subr.mxu0 0.0
    %2531 = vmatpush1.msra.mxu0 %v2504
    %2532 = vmatprep.subr.mxu0 0.0
    %2533 = vmatpush1.msra.mxu0 %v2505
    %2534 = vmatprep.subr.mxu0 0.0
    %2535 = vmatpush1.msra.mxu0 %v2506
    %2536 = vmatprep.subr.mxu0 0.0
    %2537 = vmatpush1.msra.mxu0 %v2507
    %2538 = vmatprep.subr.mxu0 0.0
    %2539 = vmatpush1.msra.mxu0 %v2508
    %2540 = vmatprep.subr.mxu0 0.0
    %2541 = vmatpush1.msra.mxu0 %v2509
    %2542 = vmatprep.subr.mxu0 0.0
    %2543 = vmatpush1.msra.mxu0 %v2510
    %2544 = vmatprep.subr.mxu0 0.0
    %2545 = vmatpush1.msra.mxu0 %v2511
    %2546 = vmatprep.subr.mxu0 0.0
    %2547 = vmatpush1.msra.mxu0 %v2512
    %2548 = vmatprep.subr.mxu0 0.0
    %2549 = vmatpush1.msra.mxu0 %v2513
    %2550 = vmatprep.subr.mxu0 0.0
    %2551 = vmatpush1.msra.mxu0 0.0
    %2552 = vmatprep.subr.mxu0 0.0
    %2553 = vmatpush1.msra.mxu0 0.0
    %2554 = vmatprep.subr.mxu0 0.0
    %2555 = vmatpush1.msra.mxu0 0.0
    %2556 = vmatprep.subr.mxu0 0.0
    %2557 = vmatpush1.msra.mxu0 0.0
    %2558 = vmatprep.subr.mxu0 0.0
    %2559 = vmatpush1.msra.mxu0 0.0
    %2560 = vmatprep.subr.mxu0 0.0
    %2561 = vmatpush1.msra.mxu0 0.0
    %2562 = vmatprep.subr.mxu0 0.0
    %2563 = vmatpush1.msra.mxu0 0.0
    %2564 = vmatprep.subr.mxu0 0.0
    %2565 = vmatpush1.msra.mxu0 0.0
    %2566 = vmatprep.subr.mxu0 0.0
    %2567 = vmatpush1.msra.mxu0 0.0
    %2568 = vmatprep.subr.mxu0 0.0
    %2569 = vmatpush1.msra.mxu0 0.0
    %2570 = vmatprep.subr.mxu0 0.0
    %2571 = vmatpush1.msra.mxu0 0.0
    %2572 = vmatprep.subr.mxu0 0.0
    %2573 = vmatpush1.msra.mxu0 0.0
    %2574 = vmatprep.subr.mxu0 0.0
    %2575 = vmatpush1.msra.mxu0 0.0
    %2576 = vmatprep.subr.mxu0 0.0
    %2577 = vmatpush1.msra.mxu0 0.0
    %2578 = vmatprep.subr.mxu0 0.0
    %2579 = vmatpush1.msra.mxu0 0.0
    %2580 = vmatprep.subr.mxu0 0.0
    %2581 = vmatpush1.msra.mxu0 0.0
    %2582 = vmatprep.mubr.f32.mxu0 0.0
    %2583 = vmatmul.mubr.f32.gmra.mrb[0].mxu0 %v2516
    %v2584 = vpop.f32.mrb[0].mxu0
    %v2585 = vadd.f32 %v2514, %v2584
    %v2586 = vpop.f32.mrb[0].mxu0
    %2587 = vdwg.mxu0
    %v2588 = vmax.f32 %v2585, 0.0
    %v2589 = vmul.f32 %v2588, %v2588
    %vm2590 = vcmask 122880
    %v2591 = vsel %vm2590, %v2589, 0.0
    %2592 = vadd.xlane.f32.xlu0 %v2591
    %v2593 = vpop.xlane.xlu0 %2592
    %v2594 = vadd.f32 %v2593, 1e-12
    %v2595 = vrsqrt.pop %v2594
    %v2596 = vmul.f32 %v2588, %v2595
    %v2597 = vld [vmem:[%s14] sm:$0xff]
    %v2598 = vld [vmem:[%s14 + $0x8] sm:$0xff]
    %v2599 = vld [vmem:[%s15] sm:$0x1]
    %v2601 = vsel %vm900, %v2596, 0
    %2603 = vmatprep.subr.mxu0 0.0
    %2604 = vmatpush1.msra.mxu0 %v2597
    %2605 = vmatprep.subr.mxu0 0.0
    %2606 = vmatpush1.msra.mxu0 %v2598
    %2607 = vmatprep.subr.mxu0 0.0
    %2608 = vmatpush1.msra.mxu0 0.0
    %2609 = vmatprep.subr.mxu0 0.0
    %2610 = vmatpush1.msra.mxu0 0.0
    %2611 = vmatprep.subr.mxu0 0.0
    %2612 = vmatpush1.msra.mxu0 0.0
    %2613 = vmatprep.subr.mxu0 0.0
    %2614 = vmatpush1.msra.mxu0 0.0
    %2615 = vmatprep.subr.mxu0 0.0
    %2616 = vmatpush1.msra.mxu0 0.0
    %2617 = vmatprep.subr.mxu0 0.0
    %2618 = vmatpush1.msra.mxu0 0.0
    %2619 = vmatprep.subr.mxu0 0.0
    %2620 = vmatpush1.msra.mxu0 0.0
    %2621 = vmatprep.subr.mxu0 0.0
    %2622 = vmatpush1.msra.mxu0 0.0
    %2623 = vmatprep.subr.mxu0 0.0
    %2624 = vmatpush1.msra.mxu0 0.0
    %2625 = vmatprep.subr.mxu0 0.0
    %2626 = vmatpush1.msra.mxu0 0.0
    %2627 = vmatprep.subr.mxu0 0.0
    %2628 = vmatpush1.msra.mxu0 0.0
    %2629 = vmatprep.subr.mxu0 0.0
    %2630 = vmatpush1.msra.mxu0 0.0
    %2631 = vmatprep.subr.mxu0 0.0
    %2632 = vmatpush1.msra.mxu0 0.0
    %2633 = vmatprep.subr.mxu0 0.0
    %2634 = vmatpush1.msra.mxu0 0.0
    %2635 = vmatprep.subr.mxu0 0.0
    %2636 = vmatpush1.msra.mxu0 0.0
    %2637 = vmatprep.subr.mxu0 0.0
    %2638 = vmatpush1.msra.mxu0 0.0
    %2639 = vmatprep.subr.mxu0 0.0
    %2640 = vmatpush1.msra.mxu0 0.0
    %2641 = vmatprep.subr.mxu0 0.0
    %2642 = vmatpush1.msra.mxu0 0.0
    %2643 = vmatprep.subr.mxu0 0.0
    %2644 = vmatpush1.msra.mxu0 0.0
    %2645 = vmatprep.subr.mxu0 0.0
    %2646 = vmatpush1.msra.mxu0 0.0
    %2647 = vmatprep.subr.mxu0 0.0
    %2648 = vmatpush1.msra.mxu0 0.0
    %2649 = vmatprep.subr.mxu0 0.0
    %2650 = vmatpush1.msra.mxu0 0.0
    %2651 = vmatprep.subr.mxu0 0.0
    %2652 = vmatpush1.msra.mxu0 0.0
    %2653 = vmatprep.subr.mxu0 0.0
    %2654 = vmatpush1.msra.mxu0 0.0
    %2655 = vmatprep.subr.mxu0 0.0
    %2656 = vmatpush1.msra.mxu0 0.0
    %2657 = vmatprep.subr.mxu0 0.0
    %2658 = vmatpush1.msra.mxu0 0.0
    %2659 = vmatprep.subr.mxu0 0.0
    %2660 = vmatpush1.msra.mxu0 0.0
    %2661 = vmatprep.subr.mxu0 0.0
    %2662 = vmatpush1.msra.mxu0 0.0
    %2663 = vmatprep.subr.mxu0 0.0
    %2664 = vmatpush1.msra.mxu0 0.0
    %2665 = vmatprep.subr.mxu0 0.0
    %2666 = vmatpush1.msra.mxu0 0.0
    %2667 = vmatprep.mubr.f32.mxu0 0.0
    %2668 = vmatmul.mubr.f32.gmra.mrb[0].mxu0 %v2601
    %v2669 = vpop.f32.mrb[0].mxu0
    %v2670 = vadd.f32 %v2599, %v2669
    %v2671 = vpop.f32.mrb[0].mxu0
    %2672 = vdwg.mxu0
    %vm2673 = vcmp.eq.s32.totalorder %v74, 0
    %2675 = vset.pattern.permute.xlu0 0
    %2676 = vperm.xlu0 %2675, %v979
    %v2677 = vpop.permute.xlu0 %2676
    %vm2679 = vcmp.eq.s32.totalorder %v74, 1
    %2681 = vset.pattern.permute.xlu0 0
    %2682 = vperm.xlu0 %2681, %v981
    %v2683 = vpop.permute.xlu0 %2682
    %v2685 = vsel %vm2679, %v2683, 0.0
    %v2686 = vsel %vm2673, %v2677, %v2685
    %2687 = vst [vmem:[%s16] sm:$0x1] %v2670
    %2688 = vst [vmem:[%s16 + $0x1] sm:$0xff] %v2686
    // Predicated region
    $region70: #{venet_forward.1} parent=1 // pred_check
      _
    $region71: #{venet_forward.1} parent=1 // pred_check_branch
      %2690 = sbr.rel (0) target = $region73
    $region72: #{venet_forward.1} parent=1 // pred_region
      _
    $region73: #{venet_forward.1} parent=1 // pred_fallthru
      _
    // Predicated region
    $region74: #{venet_forward.1} parent=1 // pred_check
      _
    $region75: #{venet_forward.1} parent=1 // pred_check_branch
      %2692 = sbr.rel (0) target = $region77
    $region76: #{venet_forward.1} parent=1 // pred_region
      _
    $region77: #{venet_forward.1} parent=1 // pred_fallthru
      _
    %2693 = vsyncpa [#allocation4], 1

</llo_original>
